<compile_context>
chip_gen: v7x
topology: tpu7x:2x2x1
jax: 0.10.0
libtpu: 0.0.40
codegen_flags: <defaults>
</compile_context>

<pallas_src>
import functools

import jax
import jax.numpy as jnp
from jax.experimental import pallas as pl
from jax.experimental.pallas import tpu as pltpu

EPS = 1e-5  # nn.InstanceNorm2d default eps


def residual_block(x_nchw, w1, b1, w2, b2, *, compute_dtype=jnp.bfloat16):
    """x + res_block(x).  x_nchw: (N,C,H,W); w1,w2: OIHW (C,C,3,3)."""
    del b1, b2  # conv bias cancels exactly under InstanceNorm(affine=False)
    N, C, H, W = x_nchw.shape
    Hp, Wp = H + 2, W + 2
    P = Hp * Wp                 # padded spatial extent, flattened onto lanes
    G = Wp + 1                  # guard cells so every 3x3 tap shift is in-bounds
    inv_hw = 1.0 / (H * W)

    # --- wrapper glue (cheap): reflect-pad + free reshape to (N, C, P) -------
    x = x_nchw.astype(jnp.float32)
    xpad = jnp.pad(x, ((0, 0), (0, 0), (1, 1), (1, 1)), mode="reflect")
    xpad = xpad.reshape(N, C, P)

    # OIHW -> (tap, Cout, Cin), tap = ky*3 + kx (matches the shifted-slice order).
    w1t = jnp.transpose(w1, (2, 3, 0, 1)).reshape(9, C, C).astype(compute_dtype)
    w2t = jnp.transpose(w2, (2, 3, 0, 1)).reshape(9, C, C).astype(compute_dtype)

    # Row / column index of every flat padded position (tiny constant input).
    idx = jnp.arange(P, dtype=jnp.int32)
    rc = jnp.stack([idx // Wp, idx % Wp], axis=0)          # (2, P)

    def kernel(x_ref, w1_ref, w2_ref, rc_ref, o_ref, xp, hp):
        row = rc_ref[0:1, :]                               # (1, P)
        col = rc_ref[1:2, :]                               # (1, P)
        interior = (row >= 1) & (row <= H) & (col >= 1) & (col <= W)

        # Keep guard cells finite (they only ever feed masked border lanes).
        zg = jnp.zeros((C, G), jnp.float32)
        xp[:, 0:G] = zg
        xp[:, G + P:G + P + G] = zg
        hp[:, 0:G] = zg
        hp[:, G + P:G + P + G] = zg

        xp[:, G:G + P] = x_ref[0]                          # padded input tile

        def conv_in(src, w_ref):
            # 3x3 conv = 9 shifted (C,C)@(C,P) matmuls; masked InstanceNorm
            # with one-pass (sum, sum-of-squares) statistics over the interior.
            acc = jnp.zeros((C, P), jnp.float32)
            for ky in range(3):
                for kx in range(3):
                    d = (ky - 1) * Wp + (kx - 1)
                    xs = src[:, G + d:G + d + P]           # shifted view (C, P)
                    wt = w_ref[3 * ky + kx]                # (C, C)
                    acc = acc + jnp.dot(wt.astype(compute_dtype),
                                        xs.astype(compute_dtype),
                                        preferred_element_type=jnp.float32)
            ym = jnp.where(interior, acc, 0.0)
            s1 = jnp.sum(ym, axis=1, keepdims=True)        # (C, 1)
            s2 = jnp.sum(ym * ym, axis=1, keepdims=True)   # (C, 1)
            mean = s1 * inv_hw
            var = s2 * inv_hw - mean * mean
            return (acc - mean) * jax.lax.rsqrt(var + EPS)

        # --- stage 1: conv + InstanceNorm + ReLU ------------------------------
        h = jnp.maximum(conv_in(xp, w1_ref), 0.0)          # (C, P)
        # TODO(synk): nn.Dropout(0.5) branch (use_dropout=True) not implemented;
        # the module is instantiated with use_dropout=False here.

        # --- in-kernel ReflectionPad2d(1) of h (h never leaves VMEM) ----------
        hp[:, G:G + P] = h
        left = hp[:, G + 2:G + 2 + P]                      # column 2 of each row
        right = hp[:, G - 2:G - 2 + P]                     # column Wp-3 of each row
        center = hp[:, G:G + P]
        hp[:, G:G + P] = jnp.where(col == 0, left,
                                   jnp.where(col == Wp - 1, right, center))
        hp[:, G:G + Wp] = hp[:, G + 2 * Wp:G + 3 * Wp]                 # top row
        hp[:, G + (Hp - 1) * Wp:G + Hp * Wp] = (
            hp[:, G + (Hp - 3) * Wp:G + (Hp - 2) * Wp])                # bottom row

        # --- stage 2: conv + InstanceNorm + residual add ----------------------
        y2 = conv_in(hp, w2_ref)
        o_ref[0] = x_ref[0] + jnp.where(interior, y2, 0.0)

    out_pad = pl.pallas_call(
        kernel,
        out_shape=jax.ShapeDtypeStruct((N, C, P), jnp.float32),
        grid=(N,),
        in_specs=[
            pl.BlockSpec((1, C, P), lambda n: (n, 0, 0)),
            pl.BlockSpec((9, C, C), lambda n: (0, 0, 0)),
            pl.BlockSpec((9, C, C), lambda n: (0, 0, 0)),
            pl.BlockSpec((2, P), lambda n: (0, 0)),
        ],
        out_specs=pl.BlockSpec((1, C, P), lambda n: (n, 0, 0)),
        scratch_shapes=[
            pltpu.VMEM((C, P + 2 * G), jnp.float32),   # guarded padded input
            pltpu.VMEM((C, P + 2 * G), jnp.float32),   # guarded padded intermediate
        ],
        compiler_params=pltpu.CompilerParams(
            dimension_semantics=("parallel",),
            vmem_limit_bytes=32 * 1024 * 1024),
    )(xpad, w1t, w2t, rc)

    # Interior extraction (layout plumbing only; border lanes were masked).
    return out_pad.reshape(N, C, Hp, Wp)[:, :, 1:H + 1, 1:W + 1]


# --------------------------- pure-JAX reference ----------------------------- #
def _reference(x, w1, b1, w2, b2):
    def pad(t):
        return jnp.pad(t, ((0, 0), (0, 0), (1, 1), (1, 1)), mode="reflect")

    def conv(t, w, b):
        y = jax.lax.conv_general_dilated(
            t, w, (1, 1), "VALID", dimension_numbers=("NCHW", "OIHW", "NCHW"))
        return y + b[None, :, None, None]

    def inorm(t):
        m = t.mean(axis=(2, 3), keepdims=True)
        v = ((t - m) ** 2).mean(axis=(2, 3), keepdims=True)
        return (t - m) * jax.lax.rsqrt(v + EPS)

    y = jnp.maximum(inorm(conv(pad(x), w1, b1)), 0.0)
    y = inorm(conv(pad(y), w2, b2))
    return x + y


# --------------------------------- main ------------------------------------ #
if __name__ == "__main__":
    N, C, H, W = 2, 4, 16, 16
    key = jax.random.PRNGKey(0)
    kx_, kw1, kb1, kw2, kb2 = jax.random.split(key, 5)

    x = jax.random.normal(kx_, (N, C, H, W), jnp.float32)
    w1 = jax.random.normal(kw1, (C, C, 3, 3), jnp.float32) * 0.1   # OIHW
    b1 = jax.random.normal(kb1, (C,), jnp.float32) * 0.1
    w2 = jax.random.normal(kw2, (C, C, 3, 3), jnp.float32) * 0.1
    b2 = jax.random.normal(kb2, (C,), jnp.float32) * 0.1

    ref = _reference(x, w1, b1, w2, b2)

    # f32 matmul path: strict check against the reference (also proves the
    # bias-drop is exact).
    run_f32 = jax.jit(functools.partial(residual_block, compute_dtype=jnp.float32))
    out = jax.block_until_ready(run_f32(x, w1, b1, w2, b2))
    assert out.shape == (N, C, H, W)
    err = float(jnp.max(jnp.abs(out - ref)))
    assert jnp.allclose(out, ref, atol=5e-4, rtol=5e-4), f"f32 max abs err {err}"

    # bf16 MXU path (f32 accumulation & IN stats): loose smoke check.
    run_bf16 = jax.jit(functools.partial(residual_block, compute_dtype=jnp.bfloat16))
    out_bf = jax.block_until_ready(run_bf16(x, w1, b1, w2, b2))
    err_bf = float(jnp.max(jnp.abs(out_bf - ref)))
    assert bool(jnp.all(jnp.isfinite(out_bf))) and err_bf < 0.25, (
        f"bf16 max abs err {err_bf}")

    print("KERNEL_OK")
</pallas_src>

<mosaic_0001>
module attributes {stable_mosaic.version = 11 : i64} {
  func.func @kernel(%arg0: i32, %arg1: memref<1x4x324xf32, #tpu.memory_space<vmem>>, %arg2: memref<9x4x4xf32, #tpu.memory_space<vmem>>, %arg3: memref<9x4x4xf32, #tpu.memory_space<vmem>>, %arg4: memref<2x324xi32, #tpu.memory_space<vmem>>, %arg5: memref<1x4x324xf32, #tpu.memory_space<vmem>>, %arg6: memref<4x362xf32, #tpu.memory_space<vmem>>, %arg7: memref<4x362xf32, #tpu.memory_space<vmem>>) attributes {dimension_semantics = [#tpu.dimension_semantics<parallel>], iteration_bounds = array<i64: 2>, scalar_prefetch = 0 : i64, scratch_operands = 2 : i64, tpu.core_type = #tpu.core_type<tc>, window_params = [{transform_indices = @transform_0, window_bounds = array<i64: 1, 4, 324>}, {pipeline_mode = #tpu.pipeline_mode<synchronous>, transform_indices = @transform_1, window_bounds = array<i64: 9, 4, 4>}, {pipeline_mode = #tpu.pipeline_mode<synchronous>, transform_indices = @transform_2, window_bounds = array<i64: 9, 4, 4>}, {pipeline_mode = #tpu.pipeline_mode<synchronous>, transform_indices = @transform_3, window_bounds = array<i64: 2, 324>}, {transform_indices = @transform_4, window_bounds = array<i64: 1, 4, 324>}]} {
    %c0 = arith.constant 0 : index
    %c0_0 = arith.constant 0 : index
    %0 = vector.load %arg4[%c0, %c0_0] : memref<2x324xi32, #tpu.memory_space<vmem>>, vector<1x324xi32>
    %c1 = arith.constant 1 : index
    %c0_1 = arith.constant 0 : index
    %1 = vector.load %arg4[%c1, %c0_1] : memref<2x324xi32, #tpu.memory_space<vmem>>, vector<1x324xi32>
    %c1_i32 = arith.constant 1 : i32
    %2 = vector.broadcast %c1_i32 : i32 to vector<1x324xi32>
    %3 = arith.cmpi sge, %0, %2 : vector<1x324xi32>
    %c16_i32 = arith.constant 16 : i32
    %4 = vector.broadcast %c16_i32 : i32 to vector<1x324xi32>
    %5 = arith.cmpi sle, %0, %4 : vector<1x324xi32>
    %6 = arith.andi %3, %5 : vector<1x324xi1>
    %c1_i32_2 = arith.constant 1 : i32
    %7 = vector.broadcast %c1_i32_2 : i32 to vector<1x324xi32>
    %8 = arith.cmpi sge, %1, %7 : vector<1x324xi32>
    %9 = arith.andi %6, %8 : vector<1x324xi1>
    %c16_i32_3 = arith.constant 16 : i32
    %10 = vector.broadcast %c16_i32_3 : i32 to vector<1x324xi32>
    %11 = arith.cmpi sle, %1, %10 : vector<1x324xi32>
    %12 = arith.andi %9, %11 : vector<1x324xi1>
    %cst = arith.constant 0.000000e+00 : f32
    %13 = vector.broadcast %cst : f32 to vector<4x19xf32>
    %c0_4 = arith.constant 0 : index
    %c0_5 = arith.constant 0 : index
    %14 = vector.load %arg6[%c0_4, %c0_5] : memref<4x362xf32, #tpu.memory_space<vmem>>, vector<4x19xf32>
    tpu.vector_store %arg6[%c0_4, %c0_5], %13 {strides = array<i32>} : memref<4x362xf32, #tpu.memory_space<vmem>>, vector<4x19xf32>,
    %c0_6 = arith.constant 0 : index
    %c343 = arith.constant 343 : index
    %15 = vector.load %arg6[%c0_6, %c343] : memref<4x362xf32, #tpu.memory_space<vmem>>, vector<4x19xf32>
    tpu.vector_store %arg6[%c0_6, %c343], %13 {strides = array<i32>} : memref<4x362xf32, #tpu.memory_space<vmem>>, vector<4x19xf32>,
    %c0_7 = arith.constant 0 : index
    %c0_8 = arith.constant 0 : index
    %16 = vector.load %arg7[%c0_7, %c0_8] : memref<4x362xf32, #tpu.memory_space<vmem>>, vector<4x19xf32>
    tpu.vector_store %arg7[%c0_7, %c0_8], %13 {strides = array<i32>} : memref<4x362xf32, #tpu.memory_space<vmem>>, vector<4x19xf32>,
    %c0_9 = arith.constant 0 : index
    %c343_10 = arith.constant 343 : index
    %17 = vector.load %arg7[%c0_9, %c343_10] : memref<4x362xf32, #tpu.memory_space<vmem>>, vector<4x19xf32>
    tpu.vector_store %arg7[%c0_9, %c343_10], %13 {strides = array<i32>} : memref<4x362xf32, #tpu.memory_space<vmem>>, vector<4x19xf32>,
    %c0_11 = arith.constant 0 : index
    %c0_12 = arith.constant 0 : index
    %c0_13 = arith.constant 0 : index
    %18 = vector.load %arg1[%c0_11, %c0_12, %c0_13] : memref<1x4x324xf32, #tpu.memory_space<vmem>>, vector<1x4x324xf32>
    %19 = vector.shape_cast %18 : vector<1x4x324xf32> to vector<4x324xf32>
    %c0_14 = arith.constant 0 : index
    %c19 = arith.constant 19 : index
    %20 = vector.load %arg6[%c0_14, %c19] : memref<4x362xf32, #tpu.memory_space<vmem>>, vector<4x324xf32>
    tpu.vector_store %arg6[%c0_14, %c19], %19 {strides = array<i32>} : memref<4x362xf32, #tpu.memory_space<vmem>>, vector<4x324xf32>,
    %cst_15 = arith.constant 0.000000e+00 : f32
    %21 = vector.broadcast %cst_15 : f32 to vector<4x324xf32>
    %c0_16 = arith.constant 0 : index
    %c0_17 = arith.constant 0 : index
    %22 = vector.load %arg6[%c0_16, %c0_17] : memref<4x362xf32, #tpu.memory_space<vmem>>, vector<4x324xf32>
    %c0_18 = arith.constant 0 : index
    %c0_19 = arith.constant 0 : index
    %c0_20 = arith.constant 0 : index
    %23 = vector.load %arg2[%c0_18, %c0_19, %c0_20] : memref<9x4x4xf32, #tpu.memory_space<vmem>>, vector<1x4x4xf32>
    %24 = vector.shape_cast %23 : vector<1x4x4xf32> to vector<4x4xf32>
    %cst_21 = arith.constant dense<0.000000e+00> : vector<4x324xf32>
    %25 = tpu.matmul %24, %22, %cst_21 {dimension_numbers = #tpu.dot_dimension_numbers<[1], [0], [0], [1], [0, 0, 1, 1], [], []>} : vector<4x4xf32>, vector<4x324xf32>, vector<4x324xf32> -> vector<4x324xf32>
    %26 = arith.addf %21, %25 : vector<4x324xf32>
    %c0_22 = arith.constant 0 : index
    %c1_23 = arith.constant 1 : index
    %27 = vector.load %arg6[%c0_22, %c1_23] : memref<4x362xf32, #tpu.memory_space<vmem>>, vector<4x324xf32>
    %c1_24 = arith.constant 1 : index
    %c0_25 = arith.constant 0 : index
    %c0_26 = arith.constant 0 : index
    %28 = vector.load %arg2[%c1_24, %c0_25, %c0_26] : memref<9x4x4xf32, #tpu.memory_space<vmem>>, vector<1x4x4xf32>
    %29 = vector.shape_cast %28 : vector<1x4x4xf32> to vector<4x4xf32>
    %cst_27 = arith.constant dense<0.000000e+00> : vector<4x324xf32>
    %30 = tpu.matmul %29, %27, %cst_27 {dimension_numbers = #tpu.dot_dimension_numbers<[1], [0], [0], [1], [0, 0, 1, 1], [], []>} : vector<4x4xf32>, vector<4x324xf32>, vector<4x324xf32> -> vector<4x324xf32>
    %31 = arith.addf %26, %30 : vector<4x324xf32>
    %c0_28 = arith.constant 0 : index
    %c2 = arith.constant 2 : index
    %32 = vector.load %arg6[%c0_28, %c2] : memref<4x362xf32, #tpu.memory_space<vmem>>, vector<4x324xf32>
    %c2_29 = arith.constant 2 : index
    %c0_30 = arith.constant 0 : index
    %c0_31 = arith.constant 0 : index
    %33 = vector.load %arg2[%c2_29, %c0_30, %c0_31] : memref<9x4x4xf32, #tpu.memory_space<vmem>>, vector<1x4x4xf32>
    %34 = vector.shape_cast %33 : vector<1x4x4xf32> to vector<4x4xf32>
    %cst_32 = arith.constant dense<0.000000e+00> : vector<4x324xf32>
    %35 = tpu.matmul %34, %32, %cst_32 {dimension_numbers = #tpu.dot_dimension_numbers<[1], [0], [0], [1], [0, 0, 1, 1], [], []>} : vector<4x4xf32>, vector<4x324xf32>, vector<4x324xf32> -> vector<4x324xf32>
    %36 = arith.addf %31, %35 : vector<4x324xf32>
    %c0_33 = arith.constant 0 : index
    %c18 = arith.constant 18 : index
    %37 = vector.load %arg6[%c0_33, %c18] : memref<4x362xf32, #tpu.memory_space<vmem>>, vector<4x324xf32>
    %c3 = arith.constant 3 : index
    %c0_34 = arith.constant 0 : index
    %c0_35 = arith.constant 0 : index
    %38 = vector.load %arg2[%c3, %c0_34, %c0_35] : memref<9x4x4xf32, #tpu.memory_space<vmem>>, vector<1x4x4xf32>
    %39 = vector.shape_cast %38 : vector<1x4x4xf32> to vector<4x4xf32>
    %cst_36 = arith.constant dense<0.000000e+00> : vector<4x324xf32>
    %40 = tpu.matmul %39, %37, %cst_36 {dimension_numbers = #tpu.dot_dimension_numbers<[1], [0], [0], [1], [0, 0, 1, 1], [], []>} : vector<4x4xf32>, vector<4x324xf32>, vector<4x324xf32> -> vector<4x324xf32>
    %41 = arith.addf %36, %40 : vector<4x324xf32>
    %c0_37 = arith.constant 0 : index
    %c19_38 = arith.constant 19 : index
    %42 = vector.load %arg6[%c0_37, %c19_38] : memref<4x362xf32, #tpu.memory_space<vmem>>, vector<4x324xf32>
    %c4 = arith.constant 4 : index
    %c0_39 = arith.constant 0 : index
    %c0_40 = arith.constant 0 : index
    %43 = vector.load %arg2[%c4, %c0_39, %c0_40] : memref<9x4x4xf32, #tpu.memory_space<vmem>>, vector<1x4x4xf32>
    %44 = vector.shape_cast %43 : vector<1x4x4xf32> to vector<4x4xf32>
    %cst_41 = arith.constant dense<0.000000e+00> : vector<4x324xf32>
    %45 = tpu.matmul %44, %42, %cst_41 {dimension_numbers = #tpu.dot_dimension_numbers<[1], [0], [0], [1], [0, 0, 1, 1], [], []>} : vector<4x4xf32>, vector<4x324xf32>, vector<4x324xf32> -> vector<4x324xf32>
    %46 = arith.addf %41, %45 : vector<4x324xf32>
    %c0_42 = arith.constant 0 : index
    %c20 = arith.constant 20 : index
    %47 = vector.load %arg6[%c0_42, %c20] : memref<4x362xf32, #tpu.memory_space<vmem>>, vector<4x324xf32>
    %c5 = arith.constant 5 : index
    %c0_43 = arith.constant 0 : index
    %c0_44 = arith.constant 0 : index
    %48 = vector.load %arg2[%c5, %c0_43, %c0_44] : memref<9x4x4xf32, #tpu.memory_space<vmem>>, vector<1x4x4xf32>
    %49 = vector.shape_cast %48 : vector<1x4x4xf32> to vector<4x4xf32>
    %cst_45 = arith.constant dense<0.000000e+00> : vector<4x324xf32>
    %50 = tpu.matmul %49, %47, %cst_45 {dimension_numbers = #tpu.dot_dimension_numbers<[1], [0], [0], [1], [0, 0, 1, 1], [], []>} : vector<4x4xf32>, vector<4x324xf32>, vector<4x324xf32> -> vector<4x324xf32>
    %51 = arith.addf %46, %50 : vector<4x324xf32>
    %c0_46 = arith.constant 0 : index
    %c36 = arith.constant 36 : index
    %52 = vector.load %arg6[%c0_46, %c36] : memref<4x362xf32, #tpu.memory_space<vmem>>, vector<4x324xf32>
    %c6 = arith.constant 6 : index
    %c0_47 = arith.constant 0 : index
    %c0_48 = arith.constant 0 : index
    %53 = vector.load %arg2[%c6, %c0_47, %c0_48] : memref<9x4x4xf32, #tpu.memory_space<vmem>>, vector<1x4x4xf32>
    %54 = vector.shape_cast %53 : vector<1x4x4xf32> to vector<4x4xf32>
    %cst_49 = arith.constant dense<0.000000e+00> : vector<4x324xf32>
    %55 = tpu.matmul %54, %52, %cst_49 {dimension_numbers = #tpu.dot_dimension_numbers<[1], [0], [0], [1], [0, 0, 1, 1], [], []>} : vector<4x4xf32>, vector<4x324xf32>, vector<4x324xf32> -> vector<4x324xf32>
    %56 = arith.addf %51, %55 : vector<4x324xf32>
    %c0_50 = arith.constant 0 : index
    %c37 = arith.constant 37 : index
    %57 = vector.load %arg6[%c0_50, %c37] : memref<4x362xf32, #tpu.memory_space<vmem>>, vector<4x324xf32>
    %c7 = arith.constant 7 : index
    %c0_51 = arith.constant 0 : index
    %c0_52 = arith.constant 0 : index
    %58 = vector.load %arg2[%c7, %c0_51, %c0_52] : memref<9x4x4xf32, #tpu.memory_space<vmem>>, vector<1x4x4xf32>
    %59 = vector.shape_cast %58 : vector<1x4x4xf32> to vector<4x4xf32>
    %cst_53 = arith.constant dense<0.000000e+00> : vector<4x324xf32>
    %60 = tpu.matmul %59, %57, %cst_53 {dimension_numbers = #tpu.dot_dimension_numbers<[1], [0], [0], [1], [0, 0, 1, 1], [], []>} : vector<4x4xf32>, vector<4x324xf32>, vector<4x324xf32> -> vector<4x324xf32>
    %61 = arith.addf %56, %60 : vector<4x324xf32>
    %c0_54 = arith.constant 0 : index
    %c38 = arith.constant 38 : index
    %62 = vector.load %arg6[%c0_54, %c38] : memref<4x362xf32, #tpu.memory_space<vmem>>, vector<4x324xf32>
    %c8 = arith.constant 8 : index
    %c0_55 = arith.constant 0 : index
    %c0_56 = arith.constant 0 : index
    %63 = vector.load %arg2[%c8, %c0_55, %c0_56] : memref<9x4x4xf32, #tpu.memory_space<vmem>>, vector<1x4x4xf32>
    %64 = vector.shape_cast %63 : vector<1x4x4xf32> to vector<4x4xf32>
    %cst_57 = arith.constant dense<0.000000e+00> : vector<4x324xf32>
    %65 = tpu.matmul %64, %62, %cst_57 {dimension_numbers = #tpu.dot_dimension_numbers<[1], [0], [0], [1], [0, 0, 1, 1], [], []>} : vector<4x4xf32>, vector<4x324xf32>, vector<4x324xf32> -> vector<4x324xf32>
    %66 = arith.addf %61, %65 : vector<4x324xf32>
    %cst_58 = arith.constant 0.000000e+00 : f32
    %67 = vector.shape_cast %12 : vector<1x324xi1> to vector<1x324xi1>
    %68 = vector.broadcast %67 : vector<1x324xi1> to vector<4x324xi1>
    %69 = vector.broadcast %cst_58 : f32 to vector<4x324xf32>
    %70 = arith.select %68, %66, %69 : vector<4x324xi1>, vector<4x324xf32>
    %cst_59 = arith.constant dense<0.000000e+00> : vector<4xf32>
    %71 = vector.multi_reduction <add>, %70, %cst_59 [1] : vector<4x324xf32> to vector<4xf32>
    %72 = vector.shape_cast %71 : vector<4xf32> to vector<4x1xf32>
    %73 = arith.mulf %70, %70 : vector<4x324xf32>
    %cst_60 = arith.constant dense<0.000000e+00> : vector<4xf32>
    %74 = vector.multi_reduction <add>, %73, %cst_60 [1] : vector<4x324xf32> to vector<4xf32>
    %75 = vector.shape_cast %74 : vector<4xf32> to vector<4x1xf32>
    %cst_61 = arith.constant 3.906250e-03 : f32
    %76 = vector.broadcast %cst_61 : f32 to vector<4x1xf32>
    %77 = arith.mulf %72, %76 : vector<4x1xf32>
    %cst_62 = arith.constant 3.906250e-03 : f32
    %78 = vector.broadcast %cst_62 : f32 to vector<4x1xf32>
    %79 = arith.mulf %75, %78 : vector<4x1xf32>
    %80 = arith.mulf %77, %77 : vector<4x1xf32>
    %81 = arith.subf %79, %80 : vector<4x1xf32>
    %82 = vector.broadcast %77 : vector<4x1xf32> to vector<4x324xf32>
    %83 = arith.subf %66, %82 : vector<4x324xf32>
    %cst_63 = arith.constant 9.99999974E-6 : f32
    %84 = vector.broadcast %cst_63 : f32 to vector<4x1xf32>
    %85 = arith.addf %81, %84 : vector<4x1xf32>
    %86 = math.rsqrt %85 : vector<4x1xf32>
    %87 = vector.broadcast %86 : vector<4x1xf32> to vector<4x324xf32>
    %88 = arith.mulf %83, %87 : vector<4x324xf32>
    %cst_64 = arith.constant 0.000000e+00 : f32
    %89 = vector.broadcast %cst_64 : f32 to vector<4x324xf32>
    %90 = arith.maximumf %88, %89 : vector<4x324xf32>
    %c0_65 = arith.constant 0 : index
    %c19_66 = arith.constant 19 : index
    %91 = vector.load %arg7[%c0_65, %c19_66] : memref<4x362xf32, #tpu.memory_space<vmem>>, vector<4x324xf32>
    tpu.vector_store %arg7[%c0_65, %c19_66], %90 {strides = array<i32>} : memref<4x362xf32, #tpu.memory_space<vmem>>, vector<4x324xf32>,
    %c0_67 = arith.constant 0 : index
    %c21 = arith.constant 21 : index
    %92 = vector.load %arg7[%c0_67, %c21] : memref<4x362xf32, #tpu.memory_space<vmem>>, vector<4x324xf32>
    %c0_68 = arith.constant 0 : index
    %c17 = arith.constant 17 : index
    %93 = vector.load %arg7[%c0_68, %c17] : memref<4x362xf32, #tpu.memory_space<vmem>>, vector<4x324xf32>
    %c0_69 = arith.constant 0 : index
    %c19_70 = arith.constant 19 : index
    %94 = vector.load %arg7[%c0_69, %c19_70] : memref<4x362xf32, #tpu.memory_space<vmem>>, vector<4x324xf32>
    %c0_i32 = arith.constant 0 : i32
    %95 = vector.broadcast %c0_i32 : i32 to vector<1x324xi32>
    %96 = arith.cmpi eq, %1, %95 : vector<1x324xi32>
    %c17_i32 = arith.constant 17 : i32
    %97 = vector.broadcast %c17_i32 : i32 to vector<1x324xi32>
    %98 = arith.cmpi eq, %1, %97 : vector<1x324xi32>
    %99 = vector.shape_cast %98 : vector<1x324xi1> to vector<1x324xi1>
    %100 = vector.broadcast %99 : vector<1x324xi1> to vector<4x324xi1>
    %101 = arith.select %100, %93, %94 : vector<4x324xi1>, vector<4x324xf32>
    %102 = vector.shape_cast %96 : vector<1x324xi1> to vector<1x324xi1>
    %103 = vector.broadcast %102 : vector<1x324xi1> to vector<4x324xi1>
    %104 = arith.select %103, %92, %101 : vector<4x324xi1>, vector<4x324xf32>
    %c0_71 = arith.constant 0 : index
    %c19_72 = arith.constant 19 : index
    %105 = vector.load %arg7[%c0_71, %c19_72] : memref<4x362xf32, #tpu.memory_space<vmem>>, vector<4x324xf32>
    tpu.vector_store %arg7[%c0_71, %c19_72], %104 {strides = array<i32>} : memref<4x362xf32, #tpu.memory_space<vmem>>, vector<4x324xf32>,
    %c0_73 = arith.constant 0 : index
    %c55 = arith.constant 55 : index
    %106 = vector.load %arg7[%c0_73, %c55] : memref<4x362xf32, #tpu.memory_space<vmem>>, vector<4x18xf32>
    %c0_74 = arith.constant 0 : index
    %c19_75 = arith.constant 19 : index
    %107 = vector.load %arg7[%c0_74, %c19_75] : memref<4x362xf32, #tpu.memory_space<vmem>>, vector<4x18xf32>
    tpu.vector_store %arg7[%c0_74, %c19_75], %106 {strides = array<i32>} : memref<4x362xf32, #tpu.memory_space<vmem>>, vector<4x18xf32>,
    %c0_76 = arith.constant 0 : index
    %c289 = arith.constant 289 : index
    %108 = vector.load %arg7[%c0_76, %c289] : memref<4x362xf32, #tpu.memory_space<vmem>>, vector<4x18xf32>
    %c0_77 = arith.constant 0 : index
    %c325 = arith.constant 325 : index
    %109 = vector.load %arg7[%c0_77, %c325] : memref<4x362xf32, #tpu.memory_space<vmem>>, vector<4x18xf32>
    tpu.vector_store %arg7[%c0_77, %c325], %108 {strides = array<i32>} : memref<4x362xf32, #tpu.memory_space<vmem>>, vector<4x18xf32>,
    %cst_78 = arith.constant 0.000000e+00 : f32
    %110 = vector.broadcast %cst_78 : f32 to vector<4x324xf32>
    %c0_79 = arith.constant 0 : index
    %c0_80 = arith.constant 0 : index
    %111 = vector.load %arg7[%c0_79, %c0_80] : memref<4x362xf32, #tpu.memory_space<vmem>>, vector<4x324xf32>
    %c0_81 = arith.constant 0 : index
    %c0_82 = arith.constant 0 : index
    %c0_83 = arith.constant 0 : index
    %112 = vector.load %arg3[%c0_81, %c0_82, %c0_83] : memref<9x4x4xf32, #tpu.memory_space<vmem>>, vector<1x4x4xf32>
    %113 = vector.shape_cast %112 : vector<1x4x4xf32> to vector<4x4xf32>
    %cst_84 = arith.constant dense<0.000000e+00> : vector<4x324xf32>
    %114 = tpu.matmul %113, %111, %cst_84 {dimension_numbers = #tpu.dot_dimension_numbers<[1], [0], [0], [1], [0, 0, 1, 1], [], []>} : vector<4x4xf32>, vector<4x324xf32>, vector<4x324xf32> -> vector<4x324xf32>
    %115 = arith.addf %110, %114 : vector<4x324xf32>
    %c0_85 = arith.constant 0 : index
    %c1_86 = arith.constant 1 : index
    %116 = vector.load %arg7[%c0_85, %c1_86] : memref<4x362xf32, #tpu.memory_space<vmem>>, vector<4x324xf32>
    %c1_87 = arith.constant 1 : index
    %c0_88 = arith.constant 0 : index
    %c0_89 = arith.constant 0 : index
    %117 = vector.load %arg3[%c1_87, %c0_88, %c0_89] : memref<9x4x4xf32, #tpu.memory_space<vmem>>, vector<1x4x4xf32>
    %118 = vector.shape_cast %117 : vector<1x4x4xf32> to vector<4x4xf32>
    %cst_90 = arith.constant dense<0.000000e+00> : vector<4x324xf32>
    %119 = tpu.matmul %118, %116, %cst_90 {dimension_numbers = #tpu.dot_dimension_numbers<[1], [0], [0], [1], [0, 0, 1, 1], [], []>} : vector<4x4xf32>, vector<4x324xf32>, vector<4x324xf32> -> vector<4x324xf32>
    %120 = arith.addf %115, %119 : vector<4x324xf32>
    %c0_91 = arith.constant 0 : index
    %c2_92 = arith.constant 2 : index
    %121 = vector.load %arg7[%c0_91, %c2_92] : memref<4x362xf32, #tpu.memory_space<vmem>>, vector<4x324xf32>
    %c2_93 = arith.constant 2 : index
    %c0_94 = arith.constant 0 : index
    %c0_95 = arith.constant 0 : index
    %122 = vector.load %arg3[%c2_93, %c0_94, %c0_95] : memref<9x4x4xf32, #tpu.memory_space<vmem>>, vector<1x4x4xf32>
    %123 = vector.shape_cast %122 : vector<1x4x4xf32> to vector<4x4xf32>
    %cst_96 = arith.constant dense<0.000000e+00> : vector<4x324xf32>
    %124 = tpu.matmul %123, %121, %cst_96 {dimension_numbers = #tpu.dot_dimension_numbers<[1], [0], [0], [1], [0, 0, 1, 1], [], []>} : vector<4x4xf32>, vector<4x324xf32>, vector<4x324xf32> -> vector<4x324xf32>
    %125 = arith.addf %120, %124 : vector<4x324xf32>
    %c0_97 = arith.constant 0 : index
    %c18_98 = arith.constant 18 : index
    %126 = vector.load %arg7[%c0_97, %c18_98] : memref<4x362xf32, #tpu.memory_space<vmem>>, vector<4x324xf32>
    %c3_99 = arith.constant 3 : index
    %c0_100 = arith.constant 0 : index
    %c0_101 = arith.constant 0 : index
    %127 = vector.load %arg3[%c3_99, %c0_100, %c0_101] : memref<9x4x4xf32, #tpu.memory_space<vmem>>, vector<1x4x4xf32>
    %128 = vector.shape_cast %127 : vector<1x4x4xf32> to vector<4x4xf32>
    %cst_102 = arith.constant dense<0.000000e+00> : vector<4x324xf32>
    %129 = tpu.matmul %128, %126, %cst_102 {dimension_numbers = #tpu.dot_dimension_numbers<[1], [0], [0], [1], [0, 0, 1, 1], [], []>} : vector<4x4xf32>, vector<4x324xf32>, vector<4x324xf32> -> vector<4x324xf32>
    %130 = arith.addf %125, %129 : vector<4x324xf32>
    %c0_103 = arith.constant 0 : index
    %c19_104 = arith.constant 19 : index
    %131 = vector.load %arg7[%c0_103, %c19_104] : memref<4x362xf32, #tpu.memory_space<vmem>>, vector<4x324xf32>
    %c4_105 = arith.constant 4 : index
    %c0_106 = arith.constant 0 : index
    %c0_107 = arith.constant 0 : index
    %132 = vector.load %arg3[%c4_105, %c0_106, %c0_107] : memref<9x4x4xf32, #tpu.memory_space<vmem>>, vector<1x4x4xf32>
    %133 = vector.shape_cast %132 : vector<1x4x4xf32> to vector<4x4xf32>
    %cst_108 = arith.constant dense<0.000000e+00> : vector<4x324xf32>
    %134 = tpu.matmul %133, %131, %cst_108 {dimension_numbers = #tpu.dot_dimension_numbers<[1], [0], [0], [1], [0, 0, 1, 1], [], []>} : vector<4x4xf32>, vector<4x324xf32>, vector<4x324xf32> -> vector<4x324xf32>
    %135 = arith.addf %130, %134 : vector<4x324xf32>
    %c0_109 = arith.constant 0 : index
    %c20_110 = arith.constant 20 : index
    %136 = vector.load %arg7[%c0_109, %c20_110] : memref<4x362xf32, #tpu.memory_space<vmem>>, vector<4x324xf32>
    %c5_111 = arith.constant 5 : index
    %c0_112 = arith.constant 0 : index
    %c0_113 = arith.constant 0 : index
    %137 = vector.load %arg3[%c5_111, %c0_112, %c0_113] : memref<9x4x4xf32, #tpu.memory_space<vmem>>, vector<1x4x4xf32>
    %138 = vector.shape_cast %137 : vector<1x4x4xf32> to vector<4x4xf32>
    %cst_114 = arith.constant dense<0.000000e+00> : vector<4x324xf32>
    %139 = tpu.matmul %138, %136, %cst_114 {dimension_numbers = #tpu.dot_dimension_numbers<[1], [0], [0], [1], [0, 0, 1, 1], [], []>} : vector<4x4xf32>, vector<4x324xf32>, vector<4x324xf32> -> vector<4x324xf32>
    %140 = arith.addf %135, %139 : vector<4x324xf32>
    %c0_115 = arith.constant 0 : index
    %c36_116 = arith.constant 36 : index
    %141 = vector.load %arg7[%c0_115, %c36_116] : memref<4x362xf32, #tpu.memory_space<vmem>>, vector<4x324xf32>
    %c6_117 = arith.constant 6 : index
    %c0_118 = arith.constant 0 : index
    %c0_119 = arith.constant 0 : index
    %142 = vector.load %arg3[%c6_117, %c0_118, %c0_119] : memref<9x4x4xf32, #tpu.memory_space<vmem>>, vector<1x4x4xf32>
    %143 = vector.shape_cast %142 : vector<1x4x4xf32> to vector<4x4xf32>
    %cst_120 = arith.constant dense<0.000000e+00> : vector<4x324xf32>
    %144 = tpu.matmul %143, %141, %cst_120 {dimension_numbers = #tpu.dot_dimension_numbers<[1], [0], [0], [1], [0, 0, 1, 1], [], []>} : vector<4x4xf32>, vector<4x324xf32>, vector<4x324xf32> -> vector<4x324xf32>
    %145 = arith.addf %140, %144 : vector<4x324xf32>
    %c0_121 = arith.constant 0 : index
    %c37_122 = arith.constant 37 : index
    %146 = vector.load %arg7[%c0_121, %c37_122] : memref<4x362xf32, #tpu.memory_space<vmem>>, vector<4x324xf32>
    %c7_123 = arith.constant 7 : index
    %c0_124 = arith.constant 0 : index
    %c0_125 = arith.constant 0 : index
    %147 = vector.load %arg3[%c7_123, %c0_124, %c0_125] : memref<9x4x4xf32, #tpu.memory_space<vmem>>, vector<1x4x4xf32>
    %148 = vector.shape_cast %147 : vector<1x4x4xf32> to vector<4x4xf32>
    %cst_126 = arith.constant dense<0.000000e+00> : vector<4x324xf32>
    %149 = tpu.matmul %148, %146, %cst_126 {dimension_numbers = #tpu.dot_dimension_numbers<[1], [0], [0], [1], [0, 0, 1, 1], [], []>} : vector<4x4xf32>, vector<4x324xf32>, vector<4x324xf32> -> vector<4x324xf32>
    %150 = arith.addf %145, %149 : vector<4x324xf32>
    %c0_127 = arith.constant 0 : index
    %c38_128 = arith.constant 38 : index
    %151 = vector.load %arg7[%c0_127, %c38_128] : memref<4x362xf32, #tpu.memory_space<vmem>>, vector<4x324xf32>
    %c8_129 = arith.constant 8 : index
    %c0_130 = arith.constant 0 : index
    %c0_131 = arith.constant 0 : index
    %152 = vector.load %arg3[%c8_129, %c0_130, %c0_131] : memref<9x4x4xf32, #tpu.memory_space<vmem>>, vector<1x4x4xf32>
    %153 = vector.shape_cast %152 : vector<1x4x4xf32> to vector<4x4xf32>
    %cst_132 = arith.constant dense<0.000000e+00> : vector<4x324xf32>
    %154 = tpu.matmul %153, %151, %cst_132 {dimension_numbers = #tpu.dot_dimension_numbers<[1], [0], [0], [1], [0, 0, 1, 1], [], []>} : vector<4x4xf32>, vector<4x324xf32>, vector<4x324xf32> -> vector<4x324xf32>
    %155 = arith.addf %150, %154 : vector<4x324xf32>
    %cst_133 = arith.constant 0.000000e+00 : f32
    %156 = vector.shape_cast %12 : vector<1x324xi1> to vector<1x324xi1>
    %157 = vector.broadcast %156 : vector<1x324xi1> to vector<4x324xi1>
    %158 = vector.broadcast %cst_133 : f32 to vector<4x324xf32>
    %159 = arith.select %157, %155, %158 : vector<4x324xi1>, vector<4x324xf32>
    %cst_134 = arith.constant dense<0.000000e+00> : vector<4xf32>
    %160 = vector.multi_reduction <add>, %159, %cst_134 [1] : vector<4x324xf32> to vector<4xf32>
    %161 = vector.shape_cast %160 : vector<4xf32> to vector<4x1xf32>
    %162 = arith.mulf %159, %159 : vector<4x324xf32>
    %cst_135 = arith.constant dense<0.000000e+00> : vector<4xf32>
    %163 = vector.multi_reduction <add>, %162, %cst_135 [1] : vector<4x324xf32> to vector<4xf32>
    %164 = vector.shape_cast %163 : vector<4xf32> to vector<4x1xf32>
    %cst_136 = arith.constant 3.906250e-03 : f32
    %165 = vector.broadcast %cst_136 : f32 to vector<4x1xf32>
    %166 = arith.mulf %161, %165 : vector<4x1xf32>
    %cst_137 = arith.constant 3.906250e-03 : f32
    %167 = vector.broadcast %cst_137 : f32 to vector<4x1xf32>
    %168 = arith.mulf %164, %167 : vector<4x1xf32>
    %169 = arith.mulf %166, %166 : vector<4x1xf32>
    %170 = arith.subf %168, %169 : vector<4x1xf32>
    %171 = vector.broadcast %166 : vector<4x1xf32> to vector<4x324xf32>
    %172 = arith.subf %155, %171 : vector<4x324xf32>
    %cst_138 = arith.constant 9.99999974E-6 : f32
    %173 = vector.broadcast %cst_138 : f32 to vector<4x1xf32>
    %174 = arith.addf %170, %173 : vector<4x1xf32>
    %175 = math.rsqrt %174 : vector<4x1xf32>
    %176 = vector.broadcast %175 : vector<4x1xf32> to vector<4x324xf32>
    %177 = arith.mulf %172, %176 : vector<4x324xf32>
    %c0_139 = arith.constant 0 : index
    %c0_140 = arith.constant 0 : index
    %c0_141 = arith.constant 0 : index
    %178 = vector.load %arg1[%c0_139, %c0_140, %c0_141] : memref<1x4x324xf32, #tpu.memory_space<vmem>>, vector<1x4x324xf32>
    %179 = vector.shape_cast %178 : vector<1x4x324xf32> to vector<4x324xf32>
    %cst_142 = arith.constant 0.000000e+00 : f32
    %180 = vector.shape_cast %12 : vector<1x324xi1> to vector<1x324xi1>
    %181 = vector.broadcast %180 : vector<1x324xi1> to vector<4x324xi1>
    %182 = vector.broadcast %cst_142 : f32 to vector<4x324xf32>
    %183 = arith.select %181, %177, %182 : vector<4x324xi1>, vector<4x324xf32>
    %184 = arith.addf %179, %183 : vector<4x324xf32>
    %c0_143 = arith.constant 0 : index
    %c0_144 = arith.constant 0 : index
    %c0_145 = arith.constant 0 : index
    %185 = vector.load %arg5[%c0_143, %c0_144, %c0_145] : memref<1x4x324xf32, #tpu.memory_space<vmem>>, vector<1x4x324xf32>
    %186 = vector.shape_cast %185 : vector<1x4x324xf32> to vector<4x324xf32>
    %187 = vector.shape_cast %184 : vector<4x324xf32> to vector<1x4x324xf32>
    tpu.vector_store %arg5[%c0_143, %c0_144, %c0_145], %187 {strides = array<i32>} : memref<1x4x324xf32, #tpu.memory_space<vmem>>, vector<1x4x324xf32>,
    return
  }
  func.func @transform_0(%arg0: i32) -> (i32, i32, i32) {
    %c0_i32 = arith.constant 0 : i32
    %c0_i32_0 = arith.constant 0 : i32
    %c0_i32_1 = arith.constant 0 : i32
    return %arg0, %c0_i32, %c0_i32_0 : i32, i32, i32
  }
  func.func @transform_1(%arg0: i32) -> (i32, i32, i32) {
    %c0_i32 = arith.constant 0 : i32
    %c0_i32_0 = arith.constant 0 : i32
    %c0_i32_1 = arith.constant 0 : i32
    %c0_i32_2 = arith.constant 0 : i32
    return %c0_i32, %c0_i32_0, %c0_i32_1 : i32, i32, i32
  }
  func.func @transform_2(%arg0: i32) -> (i32, i32, i32) {
    %c0_i32 = arith.constant 0 : i32
    %c0_i32_0 = arith.constant 0 : i32
    %c0_i32_1 = arith.constant 0 : i32
    %c0_i32_2 = arith.constant 0 : i32
    return %c0_i32, %c0_i32_0, %c0_i32_1 : i32, i32, i32
  }
  func.func @transform_3(%arg0: i32) -> (i32, i32) {
    %c0_i32 = arith.constant 0 : i32
    %c0_i32_0 = arith.constant 0 : i32
    %c0_i32_1 = arith.constant 0 : i32
    return %c0_i32, %c0_i32_0 : i32, i32
  }
  func.func @transform_4(%arg0: i32) -> (i32, i32, i32) {
    %c0_i32 = arith.constant 0 : i32
    %c0_i32_0 = arith.constant 0 : i32
    %c0_i32_1 = arith.constant 0 : i32
    return %arg0, %c0_i32, %c0_i32_0 : i32, i32, i32
  }
}

</mosaic_0001>

<llo_original>
// kernel: residual_block.1
$region0: #{residual_block.1}
  #allocation0 [shape = 'u32[]', space=smem, size = 0x4, offset = 0x4, fixed_abs, tag = 'smem constant byte address 0x4 - core index']
  #allocation1 [shape = 'u32[144,128]{1,0:T(1,128)}', space=vmem, size = 0x12000, scoped, tag = 'internal scratch']
  #allocation2 [shape = 'f32[4,362]{1,0:T(4,128)}', space=vmem, size = 0x1800, scoped, tag = 'scratch operand']
  #allocation3 [shape = 'f32[4,362]{1,0:T(4,128)}', space=vmem, size = 0x1800, scoped, tag = 'scratch operand']
  %s0 = inlined_call_operand.vmem [shape: f32[2,4,324], index: 0, kind: input, shape index: {}]
  %s1 = inlined_call_operand.vmem [shape: f32[9,4,4], index: 1, kind: input, shape index: {}]
  %s2 = inlined_call_operand.vmem [shape: f32[9,4,4], index: 2, kind: input, shape index: {}]
  %s3 = inlined_call_operand.vmem [shape: s32[2,324], index: 3, kind: input, shape index: {}]
  %s4 = inlined_call_operand.vmem [shape: f32[2,4,324], index: 4, kind: output, shape index: {}]
  %s5 = sld [smem:[#allocation0]]
  $region49: #{residual_block.1} parent=0
    _
  %s7 = ssub.s32 1, %s5
  %s8 = scalar_select 0, %s7, %s5
  loop: start=0, step=1, limit=4
  $region2: #{residual_block.1} parent=0 // loop_pre_header
    _
  $region3: #{residual_block.1} parent=0 // loop_header
    %s10 = sphi 0, %s14
    %p11 = scmp.ge.s32.totalorder %s10, 4
    %s20 = sphi 0, %s22
    %s23 = sphi 0, %s20
    %s24 = sphi 0, %s23
    %s40 = sphi 0, %s24
    %s44 = sphi 0, %s44
    %s46 = sphi 0, %s44
    %s47 = sphi 0, %s46
    %s61 = sphi 0, %s47
    %s65 = sphi 0, %s65
    %s67 = sphi 0, %s65
    %s68 = sphi 0, %s67
    %s82 = sphi 0, %s68
    %s86 = sphi 0, %s86
    %s88 = sphi 0, %s86
    %s89 = sphi 0, %s88
    %s103 = sphi 0, %s89
    %s109 = sphi 0, %s111
    %s112 = sphi 0, %s109
    %s113 = sphi 0, %s112
    %s129 = sphi 0, %s113
  $region4: #{residual_block.1} parent=0 // loop_header_branch
    %13 = sbr.rel (%p11) target = $region8
  $region5: #{residual_block.1} parent=0 // loop_body
    %s15 = ssub.s32 %s10, 1
    %s16 = ssub.s32 %s10, 2
    %s17 = sadd.s32 %s10, 1
    %s18 = ssub.s32 %s10, %s17
    %p19 = scmp.eq.s32.totalorder %s18, 0
    %s21 = sadd.s32 %s20, 1
    %s22 = scalar_select %p19, %s20, %s21
    %p25 = pneg %p19
    %p26 = scmp.eq.s32.totalorder %s10, 1
    %p27 = por %p25, %p26
    %p28 = scmp.ne.s32.totalorder %s20, %s23
    %p29 = scmp.eq.s32.totalorder %s10, 0
    %p30 = por %p28, %p29
    %p31 = scmp.ne.s32.totalorder %s20, %s23
    %p32 = scmp.eq.s32.totalorder %s15, 1
    %p33 = por %p31, %p32
    %p34 = scmp.ne.s32.totalorder %s23, %s24
    %p35 = scmp.eq.s32.totalorder %s15, 0
    %p36 = por %p34, %p35
    %p37 = scmp.ne.s32.totalorder %s23, %s24
    %p38 = scmp.eq.s32.totalorder %s16, 1
    %p39 = por %p37, %p38
    %p41 = scmp.ne.s32.totalorder %s24, %s40
    %p42 = scmp.eq.s32.totalorder %s16, 0
    %p43 = por %p41, %p42
    %s45 = sadd.s32 %s44, 1
    %p48 = scmp.eq.s32.totalorder %s10, 1
    %p49 = scmp.ne.s32.totalorder %s44, %s46
    %p50 = scmp.eq.s32.totalorder %s10, 0
    %p51 = por %p49, %p50
    %p52 = scmp.ne.s32.totalorder %s44, %s46
    %p53 = scmp.eq.s32.totalorder %s15, 1
    %p54 = por %p52, %p53
    %p55 = scmp.ne.s32.totalorder %s46, %s47
    %p56 = scmp.eq.s32.totalorder %s15, 0
    %p57 = por %p55, %p56
    %p58 = scmp.ne.s32.totalorder %s46, %s47
    %p59 = scmp.eq.s32.totalorder %s16, 1
    %p60 = por %p58, %p59
    %p62 = scmp.ne.s32.totalorder %s47, %s61
    %p63 = scmp.eq.s32.totalorder %s16, 0
    %p64 = por %p62, %p63
    %s66 = sadd.s32 %s65, 1
    %p69 = scmp.eq.s32.totalorder %s10, 1
    %p70 = scmp.ne.s32.totalorder %s65, %s67
    %p71 = scmp.eq.s32.totalorder %s10, 0
    %p72 = por %p70, %p71
    %p73 = scmp.ne.s32.totalorder %s65, %s67
    %p74 = scmp.eq.s32.totalorder %s15, 1
    %p75 = por %p73, %p74
    %p76 = scmp.ne.s32.totalorder %s67, %s68
    %p77 = scmp.eq.s32.totalorder %s15, 0
    %p78 = por %p76, %p77
    %p79 = scmp.ne.s32.totalorder %s67, %s68
    %p80 = scmp.eq.s32.totalorder %s16, 1
    %p81 = por %p79, %p80
    %p83 = scmp.ne.s32.totalorder %s68, %s82
    %p84 = scmp.eq.s32.totalorder %s16, 0
    %p85 = por %p83, %p84
    %s87 = sadd.s32 %s86, 1
    %p90 = scmp.eq.s32.totalorder %s10, 1
    %p91 = scmp.ne.s32.totalorder %s86, %s88
    %p92 = scmp.eq.s32.totalorder %s10, 0
    %p93 = por %p91, %p92
    %p94 = scmp.ne.s32.totalorder %s86, %s88
    %p95 = scmp.eq.s32.totalorder %s15, 1
    %p96 = por %p94, %p95
    %p97 = scmp.ne.s32.totalorder %s88, %s89
    %p98 = scmp.eq.s32.totalorder %s15, 0
    %p99 = por %p97, %p98
    %p100 = scmp.ne.s32.totalorder %s88, %s89
    %p101 = scmp.eq.s32.totalorder %s16, 1
    %p102 = por %p100, %p101
    %p104 = scmp.ne.s32.totalorder %s89, %s103
    %p105 = scmp.eq.s32.totalorder %s16, 0
    %p106 = por %p104, %p105
    %s107 = ssub.s32 %s10, %s17
    %p108 = scmp.eq.s32.totalorder %s107, 0
    %s110 = sadd.s32 %s109, 1
    %s111 = scalar_select %p108, %s109, %s110
    %p114 = pneg %p108
    %p115 = scmp.eq.s32.totalorder %s10, 1
    %p116 = por %p114, %p115
    %p117 = scmp.ne.s32.totalorder %s109, %s112
    %p118 = scmp.eq.s32.totalorder %s10, 0
    %p119 = por %p117, %p118
    %p120 = scmp.ne.s32.totalorder %s109, %s112
    %p121 = scmp.eq.s32.totalorder %s15, 1
    %p122 = por %p120, %p121
    %p123 = scmp.ne.s32.totalorder %s112, %s113
    %p124 = scmp.eq.s32.totalorder %s15, 0
    %p125 = por %p123, %p124
    %p126 = scmp.ne.s32.totalorder %s112, %s113
    %p127 = scmp.eq.s32.totalorder %s16, 1
    %p128 = por %p126, %p127
    %p130 = scmp.ne.s32.totalorder %s113, %s129
    %p131 = scmp.eq.s32.totalorder %s16, 0
    %p132 = por %p130, %p131
    %p133 = scmp.le.s32.totalorder 1, %s10
    %p134 = scmp.lt.s32.totalorder %s10, 3
    %p135 = pnand %p133, %p134
    %p136 = pneg %p135
    // Predicated region
    $region9: #{residual_block.1} parent=5 // pred_check
      _
    $region10: #{residual_block.1} parent=5 // pred_check_branch
      %138 = sbr.rel (%p135) target = $region12
    $region11: #{residual_block.1} parent=5 // pred_region
      %s139 = ssub.s32 %s10, 1
      // Predicated region
      $region13: #{residual_block.1} parent=11 // pred_check
        %p140 = pneg %p57
      $region14: #{residual_block.1} parent=11 // pred_check_branch
        %142 = sbr.rel (%p140) target = $region16
      $region15: #{residual_block.1} parent=11 // pred_region
        _
      $region16: #{residual_block.1} parent=11 // pred_fallthru
        _
      // Predicated region
      $region17: #{residual_block.1} parent=11 // pred_check
        %p143 = pneg %p78
      $region18: #{residual_block.1} parent=11 // pred_check_branch
        %145 = sbr.rel (%p143) target = $region20
      $region19: #{residual_block.1} parent=11 // pred_region
        _
      $region20: #{residual_block.1} parent=11 // pred_fallthru
        _
      // Predicated region
      $region21: #{residual_block.1} parent=11 // pred_check
        %p146 = pneg %p99
      $region22: #{residual_block.1} parent=11 // pred_check_branch
        %148 = sbr.rel (%p146) target = $region24
      $region23: #{residual_block.1} parent=11 // pred_region
        _
      $region24: #{residual_block.1} parent=11 // pred_fallthru
        _
    $region12: #{residual_block.1} parent=5 // pred_fallthru
      _
    %p149 = scmp.lt.s32.totalorder %s10, 2
    // Predicated region
    $region25: #{residual_block.1} parent=5 // pred_check
      %p150 = pneg %p149
    $region26: #{residual_block.1} parent=5 // pred_check_branch
      %152 = sbr.rel (%p150) target = $region28
    $region27: #{residual_block.1} parent=5 // pred_region
      // Predicated region
      $region29: #{residual_block.1} parent=27 // pred_check
        %p153 = pneg %p30
      $region30: #{residual_block.1} parent=27 // pred_check_branch
        %155 = sbr.rel (%p153) target = $region32
      $region31: #{residual_block.1} parent=27 // pred_region
        %p156 = scmp.lt.s32.totalorder %s10, 1
        %s157 = scalar_select %p156, %s10, 1
        %s158 = smul.addr %s157, 3
        %s159 = smul.addr %s158, 4
        %s160 = scalar_lea.vmem %s0, %s159
      $region32: #{residual_block.1} parent=27 // pred_fallthru
        _
    $region28: #{residual_block.1} parent=5 // pred_fallthru
      _
    %p161 = scmp.le.s32.totalorder 1, %s10
    %p162 = scmp.lt.s32.totalorder %s10, 3
    %p163 = pnand %p161, %p162
    %p164 = pneg %p163
    // Predicated region
    $region33: #{residual_block.1} parent=5 // pred_check
      _
    $region34: #{residual_block.1} parent=5 // pred_check_branch
      %166 = sbr.rel (%p163) target = $region36
    $region35: #{residual_block.1} parent=5 // pred_region
      %s167 = ssub.s32 %s10, 1
      %p168 = scmp.lt.s32.totalorder %s15, 1
      %s169 = scalar_select %p168, %s15, 1
      %s170 = smul.addr %s169, 3
      %s171 = smul.addr %s170, 4
      %s172 = scalar_lea.vmem %s0, %s171
      %p173 = pneg %p36
      %p174 = pneg %p33
      %p175 = pneg %p57
      %p176 = pneg %p54
      %p177 = pneg %p78
      %p178 = pneg %p75
      %p179 = pneg %p99
      %p180 = pneg %p96
      %p181 = pneg %p125
      %p182 = pneg %p122
      %p183 = scmp.lt.s32.totalorder %s15, 1
      %s184 = scalar_select %p183, %s15, 1
      %s185 = smul.addr %s184, 3
      %s186 = smul.addr %s185, 4
      %s187 = scalar_lea.vmem %s4, %s186
      %p188 = scmp.lt.s32.totalorder %s15, 1
      %s189 = scalar_select %p188, %s15, 1
      %s190 = smul.addr %s189, 3
      %s191 = smul.addr %s190, 4
      %s192 = scalar_lea.vmem %s0, %s191
      %p193 = scmp.lt.s32.totalorder %s15, 1
      %s194 = scalar_select %p193, %s15, 1
      %s195 = smul.addr %s194, 3
      %s196 = smul.addr %s195, 4
      %s197 = scalar_lea.vmem %s4, %s196
      %v198 = vld [vmem:[%s3] ss:$2 sm:$0x7]
      %s199 = scalar_lea.vmem %s3, 1
      %v200 = vld [vmem:[%s199] ss:$2 sm:$0x7]
      %vm201 = vcmp.ge.s32.totalorder %v198, 1
      %vm202 = vcmp.le.s32.totalorder %v198, 16
      %vm203 = vmand %vm201, %vm202
      %vm204 = vcmp.ge.s32.totalorder %v200, 1
      %vm205 = vmand %vm203, %vm204
      %vm206 = vcmp.le.s32.totalorder %v200, 16
      %vm207 = vmand %vm205, %vm206
      %vm208 = vcmask 150528
      %209 = vst.msk [vmem:[#allocation2] sm:$0xf] %vm208, 0.0
      %vm210 = vcmask 863928
      %211 = vst.msk [vmem:[#allocation2 + $0x8] sm:$0xf] %vm210, 0.0
      %212 = vst.msk [vmem:[#allocation3] sm:$0xf] %vm208, 0.0
      %213 = vst.msk [vmem:[#allocation3 + $0x8] sm:$0xf] %vm210, 0.0
      %v214 = vld [vmem:[%s192] sm:$0xff]
      %v215 = vld [vmem:[%s192 + $0x8] sm:$0xf]
      %218 = vrot.lane.b32.xlu0 %v214, 19
      %v219 = vpop.permute.xlu0 %218
      %220 = vrot.lane.b32.xlu0 %v215, 19
      %v221 = vpop.permute.xlu0 %220
      %v222 = vrot.slane %v219, 4
      %vm223 = vcmask 154624
      %v224 = vsel %vm223, %v222, %v219
      %v225 = vsel %vm223, %v222, %v221
      %vm228 = vcmask 1043608
      %vm229 = vcmask 1047556
      %vm230 = vmor %vm229, %vm228
      %231 = vst.msk [vmem:[#allocation2] sm:$0xff] %vm230, %v224
      %vm232 = vcmask 707584
      %233 = vst.msk [vmem:[#allocation2 + $0x8] sm:$0xf] %vm232, %v225
      %v234 = vld [vmem:[#allocation2] sm:$0xff]
      %v235 = vld [vmem:[#allocation2 + $0x8] sm:$0xf]
      %v236 = vld [vmem:[%s1] sm:$0xf]
      %s237 = scalar_lea.vmem %s1, 4
      %v238 = vld [vmem:[%s237] sm:$0xf]
      %v241 = vcombine.high %v234, %v234
      %242 = vrot.lane.b32.xlu0 %v234, 127
      %v243 = vpop.permute.xlu0 %242
      %244 = vrot.lane.b32.xlu0 %v241, 127
      %v245 = vpop.permute.xlu0 %244
      %246 = vrot.lane.b32.xlu0 %v235, 127
      %v247 = vpop.permute.xlu0 %246
      %vm248 = vcmask 1039360
      %v249 = vsel %vm248, %v243, %v245
      %v250 = vsel %vm248, %v245, %v247
      %vm251 = vcmask 31744
      %v253 = vsel %vm251, %v238, 0
      %vm255 = vcmask 1043456
      %v256 = vsel %vm255, %v249, 0
      %v258 = vsel %vm255, %v250, 0
      %v260 = vsel %vm255, %v247, 0
      %262 = vmatprep.subr.mxu0 %v258
      %263 = vmatpush1.msra.mxu0 %v256
      %264 = vmatprep.subr.mxu0 0.0
      %265 = vmatpush1.msra.mxu0 0.0
      %266 = vmatprep.subr.mxu0 0.0
      %267 = vmatpush1.msra.mxu0 0.0
      %268 = vmatprep.subr.mxu0 0.0
      %269 = vmatpush1.msra.mxu0 0.0
      %270 = vmatprep.subr.mxu0 0.0
      %271 = vmatpush1.msra.mxu0 0.0
      %272 = vmatprep.subr.mxu0 0.0
      %273 = vmatpush1.msra.mxu0 0.0
      %274 = vmatprep.subr.mxu0 0.0
      %275 = vmatpush1.msra.mxu0 0.0
      %276 = vmatprep.subr.mxu0 0.0
      %277 = vmatpush1.msra.mxu0 0.0
      %278 = vmatprep.subr.mxu0 0.0
      %279 = vmatpush1.msra.mxu0 0.0
      %280 = vmatprep.subr.mxu0 0.0
      %281 = vmatpush1.msra.mxu0 0.0
      %282 = vmatprep.subr.mxu0 0.0
      %283 = vmatpush1.msra.mxu0 0.0
      %284 = vmatprep.subr.mxu0 0.0
      %285 = vmatpush1.msra.mxu0 0.0
      %286 = vmatprep.subr.mxu0 0.0
      %287 = vmatpush1.msra.mxu0 0.0
      %288 = vmatprep.subr.mxu0 0.0
      %289 = vmatpush1.msra.mxu0 0.0
      %290 = vmatprep.subr.mxu0 0.0
      %291 = vmatpush1.msra.mxu0 0.0
      %292 = vmatprep.subr.mxu0 0.0
      %293 = vmatpush1.msra.mxu0 0.0
      %294 = vmatprep.subr.mxu0 0.0
      %295 = vmatpush1.msra.mxu0 0.0
      %296 = vmatprep.subr.mxu0 0.0
      %297 = vmatpush1.msra.mxu0 0.0
      %298 = vmatprep.subr.mxu0 0.0
      %299 = vmatpush1.msra.mxu0 0.0
      %300 = vmatprep.subr.mxu0 0.0
      %301 = vmatpush1.msra.mxu0 0.0
      %302 = vmatprep.subr.mxu0 0.0
      %303 = vmatpush1.msra.mxu0 0.0
      %304 = vmatprep.subr.mxu0 0.0
      %305 = vmatpush1.msra.mxu0 0.0
      %306 = vmatprep.subr.mxu0 0.0
      %307 = vmatpush1.msra.mxu0 0.0
      %308 = vmatprep.subr.mxu0 0.0
      %309 = vmatpush1.msra.mxu0 0.0
      %310 = vmatprep.subr.mxu0 0.0
      %311 = vmatpush1.msra.mxu0 0.0
      %312 = vmatprep.subr.mxu0 0.0
      %313 = vmatpush1.msra.mxu0 0.0
      %314 = vmatprep.subr.mxu0 0.0
      %315 = vmatpush1.msra.mxu0 0.0
      %316 = vmatprep.subr.mxu0 0.0
      %317 = vmatpush1.msra.mxu0 0.0
      %318 = vmatprep.subr.mxu0 0.0
      %319 = vmatpush1.msra.mxu0 0.0
      %320 = vmatprep.subr.mxu0 0.0
      %321 = vmatpush1.msra.mxu0 0.0
      %322 = vmatprep.subr.mxu0 0.0
      %323 = vmatpush1.msra.mxu0 0.0
      %324 = vmatprep.subr.mxu0 0.0
      %325 = vmatpush1.msra.mxu0 0.0
      %326 = vmatprep.mubr.f32.mxu0 0.0
      %327 = vmatmul.mubr.f32.gmra.mrb[0].mxu0 %v253
      %v328 = vpop.f32.mrb[0].mxu0
      %v329 = vadd.f32 0.0, %v328
      %v330 = vpop.f32.mrb[0].mxu0
      %v331 = vadd.f32 0.0, %v330
      %332 = vdwg.mxu0
      %333 = vmatprep.subr.mxu0 0.0
      %334 = vmatpush1.msra.mxu0 %v260
      %335 = vmatprep.subr.mxu0 0.0
      %336 = vmatpush1.msra.mxu0 0.0
      %337 = vmatprep.subr.mxu0 0.0
      %338 = vmatpush1.msra.mxu0 0.0
      %339 = vmatprep.subr.mxu0 0.0
      %340 = vmatpush1.msra.mxu0 0.0
      %341 = vmatprep.subr.mxu0 0.0
      %342 = vmatpush1.msra.mxu0 0.0
      %343 = vmatprep.subr.mxu0 0.0
      %344 = vmatpush1.msra.mxu0 0.0
      %345 = vmatprep.subr.mxu0 0.0
      %346 = vmatpush1.msra.mxu0 0.0
      %347 = vmatprep.subr.mxu0 0.0
      %348 = vmatpush1.msra.mxu0 0.0
      %349 = vmatprep.subr.mxu0 0.0
      %350 = vmatpush1.msra.mxu0 0.0
      %351 = vmatprep.subr.mxu0 0.0
      %352 = vmatpush1.msra.mxu0 0.0
      %353 = vmatprep.subr.mxu0 0.0
      %354 = vmatpush1.msra.mxu0 0.0
      %355 = vmatprep.subr.mxu0 0.0
      %356 = vmatpush1.msra.mxu0 0.0
      %357 = vmatprep.subr.mxu0 0.0
      %358 = vmatpush1.msra.mxu0 0.0
      %359 = vmatprep.subr.mxu0 0.0
      %360 = vmatpush1.msra.mxu0 0.0
      %361 = vmatprep.subr.mxu0 0.0
      %362 = vmatpush1.msra.mxu0 0.0
      %363 = vmatprep.subr.mxu0 0.0
      %364 = vmatpush1.msra.mxu0 0.0
      %365 = vmatprep.subr.mxu0 0.0
      %366 = vmatpush1.msra.mxu0 0.0
      %367 = vmatprep.subr.mxu0 0.0
      %368 = vmatpush1.msra.mxu0 0.0
      %369 = vmatprep.subr.mxu0 0.0
      %370 = vmatpush1.msra.mxu0 0.0
      %371 = vmatprep.subr.mxu0 0.0
      %372 = vmatpush1.msra.mxu0 0.0
      %373 = vmatprep.subr.mxu0 0.0
      %374 = vmatpush1.msra.mxu0 0.0
      %375 = vmatprep.subr.mxu0 0.0
      %376 = vmatpush1.msra.mxu0 0.0
      %377 = vmatprep.subr.mxu0 0.0
      %378 = vmatpush1.msra.mxu0 0.0
      %379 = vmatprep.subr.mxu0 0.0
      %380 = vmatpush1.msra.mxu0 0.0
      %381 = vmatprep.subr.mxu0 0.0
      %382 = vmatpush1.msra.mxu0 0.0
      %383 = vmatprep.subr.mxu0 0.0
      %384 = vmatpush1.msra.mxu0 0.0
      %385 = vmatprep.subr.mxu0 0.0
      %386 = vmatpush1.msra.mxu0 0.0
      %387 = vmatprep.subr.mxu0 0.0
      %388 = vmatpush1.msra.mxu0 0.0
      %389 = vmatprep.subr.mxu0 0.0
      %390 = vmatpush1.msra.mxu0 0.0
      %391 = vmatprep.subr.mxu0 0.0
      %392 = vmatpush1.msra.mxu0 0.0
      %393 = vmatprep.subr.mxu0 0.0
      %394 = vmatpush1.msra.mxu0 0.0
      %395 = vmatprep.subr.mxu0 0.0
      %396 = vmatpush1.msra.mxu0 0.0
      %397 = vmatprep.mubr.f32.mxu0 0.0
      %398 = vmatmul.mubr.f32.gmra.mrb[0].mxu0 %v253
      %v399 = vpop.f32.mrb[0].mxu0
      %v400 = vadd.f32 0.0, %v399
      %v401 = vpop.f32.mrb[0].mxu0
      %402 = vdwg.mxu0
      %v404 = vsel %vm251, %v236, 0
      %v406 = vsel %vm255, %v234, 0
      %v408 = vsel %vm255, %v241, 0
      %v410 = vsel %vm255, %v235, 0
      %412 = vmatprep.subr.mxu0 %v408
      %413 = vmatpush1.msra.mxu0 %v406
      %414 = vmatprep.subr.mxu0 0.0
      %415 = vmatpush1.msra.mxu0 0.0
      %416 = vmatprep.subr.mxu0 0.0
      %417 = vmatpush1.msra.mxu0 0.0
      %418 = vmatprep.subr.mxu0 0.0
      %419 = vmatpush1.msra.mxu0 0.0
      %420 = vmatprep.subr.mxu0 0.0
      %421 = vmatpush1.msra.mxu0 0.0
      %422 = vmatprep.subr.mxu0 0.0
      %423 = vmatpush1.msra.mxu0 0.0
      %424 = vmatprep.subr.mxu0 0.0
      %425 = vmatpush1.msra.mxu0 0.0
      %426 = vmatprep.subr.mxu0 0.0
      %427 = vmatpush1.msra.mxu0 0.0
      %428 = vmatprep.subr.mxu0 0.0
      %429 = vmatpush1.msra.mxu0 0.0
      %430 = vmatprep.subr.mxu0 0.0
      %431 = vmatpush1.msra.mxu0 0.0
      %432 = vmatprep.subr.mxu0 0.0
      %433 = vmatpush1.msra.mxu0 0.0
      %434 = vmatprep.subr.mxu0 0.0
      %435 = vmatpush1.msra.mxu0 0.0
      %436 = vmatprep.subr.mxu0 0.0
      %437 = vmatpush1.msra.mxu0 0.0
      %438 = vmatprep.subr.mxu0 0.0
      %439 = vmatpush1.msra.mxu0 0.0
      %440 = vmatprep.subr.mxu0 0.0
      %441 = vmatpush1.msra.mxu0 0.0
      %442 = vmatprep.subr.mxu0 0.0
      %443 = vmatpush1.msra.mxu0 0.0
      %444 = vmatprep.subr.mxu0 0.0
      %445 = vmatpush1.msra.mxu0 0.0
      %446 = vmatprep.subr.mxu0 0.0
      %447 = vmatpush1.msra.mxu0 0.0
      %448 = vmatprep.subr.mxu0 0.0
      %449 = vmatpush1.msra.mxu0 0.0
      %450 = vmatprep.subr.mxu0 0.0
      %451 = vmatpush1.msra.mxu0 0.0
      %452 = vmatprep.subr.mxu0 0.0
      %453 = vmatpush1.msra.mxu0 0.0
      %454 = vmatprep.subr.mxu0 0.0
      %455 = vmatpush1.msra.mxu0 0.0
      %456 = vmatprep.subr.mxu0 0.0
      %457 = vmatpush1.msra.mxu0 0.0
      %458 = vmatprep.subr.mxu0 0.0
      %459 = vmatpush1.msra.mxu0 0.0
      %460 = vmatprep.subr.mxu0 0.0
      %461 = vmatpush1.msra.mxu0 0.0
      %462 = vmatprep.subr.mxu0 0.0
      %463 = vmatpush1.msra.mxu0 0.0
      %464 = vmatprep.subr.mxu0 0.0
      %465 = vmatpush1.msra.mxu0 0.0
      %466 = vmatprep.subr.mxu0 0.0
      %467 = vmatpush1.msra.mxu0 0.0
      %468 = vmatprep.subr.mxu0 0.0
      %469 = vmatpush1.msra.mxu0 0.0
      %470 = vmatprep.subr.mxu0 0.0
      %471 = vmatpush1.msra.mxu0 0.0
      %472 = vmatprep.subr.mxu0 0.0
      %473 = vmatpush1.msra.mxu0 0.0
      %474 = vmatprep.subr.mxu0 0.0
      %475 = vmatpush1.msra.mxu0 0.0
      %476 = vmatprep.mubr.f32.mxu0 0.0
      %477 = vmatmul.mubr.f32.gmra.mrb[0].mxu0 %v404
      %v478 = vpop.f32.mrb[0].mxu0
      %v479 = vadd.f32 %v329, %v478
      %v480 = vpop.f32.mrb[0].mxu0
      %v481 = vadd.f32 %v331, %v480
      %482 = vdwg.mxu0
      %483 = vmatprep.subr.mxu0 0.0
      %484 = vmatpush1.msra.mxu0 %v410
      %485 = vmatprep.subr.mxu0 0.0
      %486 = vmatpush1.msra.mxu0 0.0
      %487 = vmatprep.subr.mxu0 0.0
      %488 = vmatpush1.msra.mxu0 0.0
      %489 = vmatprep.subr.mxu0 0.0
      %490 = vmatpush1.msra.mxu0 0.0
      %491 = vmatprep.subr.mxu0 0.0
      %492 = vmatpush1.msra.mxu0 0.0
      %493 = vmatprep.subr.mxu0 0.0
      %494 = vmatpush1.msra.mxu0 0.0
      %495 = vmatprep.subr.mxu0 0.0
      %496 = vmatpush1.msra.mxu0 0.0
      %497 = vmatprep.subr.mxu0 0.0
      %498 = vmatpush1.msra.mxu0 0.0
      %499 = vmatprep.subr.mxu0 0.0
      %500 = vmatpush1.msra.mxu0 0.0
      %501 = vmatprep.subr.mxu0 0.0
      %502 = vmatpush1.msra.mxu0 0.0
      %503 = vmatprep.subr.mxu0 0.0
      %504 = vmatpush1.msra.mxu0 0.0
      %505 = vmatprep.subr.mxu0 0.0
      %506 = vmatpush1.msra.mxu0 0.0
      %507 = vmatprep.subr.mxu0 0.0
      %508 = vmatpush1.msra.mxu0 0.0
      %509 = vmatprep.subr.mxu0 0.0
      %510 = vmatpush1.msra.mxu0 0.0
      %511 = vmatprep.subr.mxu0 0.0
      %512 = vmatpush1.msra.mxu0 0.0
      %513 = vmatprep.subr.mxu0 0.0
      %514 = vmatpush1.msra.mxu0 0.0
      %515 = vmatprep.subr.mxu0 0.0
      %516 = vmatpush1.msra.mxu0 0.0
      %517 = vmatprep.subr.mxu0 0.0
      %518 = vmatpush1.msra.mxu0 0.0
      %519 = vmatprep.subr.mxu0 0.0
      %520 = vmatpush1.msra.mxu0 0.0
      %521 = vmatprep.subr.mxu0 0.0
      %522 = vmatpush1.msra.mxu0 0.0
      %523 = vmatprep.subr.mxu0 0.0
      %524 = vmatpush1.msra.mxu0 0.0
      %525 = vmatprep.subr.mxu0 0.0
      %526 = vmatpush1.msra.mxu0 0.0
      %527 = vmatprep.subr.mxu0 0.0
      %528 = vmatpush1.msra.mxu0 0.0
      %529 = vmatprep.subr.mxu0 0.0
      %530 = vmatpush1.msra.mxu0 0.0
      %531 = vmatprep.subr.mxu0 0.0
      %532 = vmatpush1.msra.mxu0 0.0
      %533 = vmatprep.subr.mxu0 0.0
      %534 = vmatpush1.msra.mxu0 0.0
      %535 = vmatprep.subr.mxu0 0.0
      %536 = vmatpush1.msra.mxu0 0.0
      %537 = vmatprep.subr.mxu0 0.0
      %538 = vmatpush1.msra.mxu0 0.0
      %539 = vmatprep.subr.mxu0 0.0
      %540 = vmatpush1.msra.mxu0 0.0
      %541 = vmatprep.subr.mxu0 0.0
      %542 = vmatpush1.msra.mxu0 0.0
      %543 = vmatprep.subr.mxu0 0.0
      %544 = vmatpush1.msra.mxu0 0.0
      %545 = vmatprep.subr.mxu0 0.0
      %546 = vmatpush1.msra.mxu0 0.0
      %547 = vmatprep.mubr.f32.mxu0 0.0
      %548 = vmatmul.mubr.f32.gmra.mrb[0].mxu0 %v404
      %v549 = vpop.f32.mrb[0].mxu0
      %v550 = vadd.f32 %v400, %v549
      %v551 = vpop.f32.mrb[0].mxu0
      %552 = vdwg.mxu0
      %v553 = vld [vmem:[#allocation2] sm:$0xff]
      %v554 = vld [vmem:[#allocation2 + $0x8] sm:$0xf]
      %s555 = scalar_lea.vmem %s1, 8
      %v556 = vld [vmem:[%s555] sm:$0xf]
      %v559 = vcombine.high %v553, %v553
      %560 = vrot.lane.b32.xlu0 %v553, 126
      %v561 = vpop.permute.xlu0 %560
      %562 = vrot.lane.b32.xlu0 %v559, 126
      %v563 = vpop.permute.xlu0 %562
      %564 = vrot.lane.b32.xlu0 %v554, 126
      %v565 = vpop.permute.xlu0 %564
      %vm566 = vcmask 1031168
      %v567 = vsel %vm566, %v561, %v563
      %v568 = vsel %vm566, %v563, %v565
      %v570 = vsel %vm251, %v556, 0
      %v572 = vsel %vm255, %v567, 0
      %v574 = vsel %vm255, %v568, 0
      %v576 = vsel %vm255, %v565, 0
      %578 = vmatprep.subr.mxu0 %v574
      %579 = vmatpush1.msra.mxu0 %v572
      %580 = vmatprep.subr.mxu0 0.0
      %581 = vmatpush1.msra.mxu0 0.0
      %582 = vmatprep.subr.mxu0 0.0
      %583 = vmatpush1.msra.mxu0 0.0
      %584 = vmatprep.subr.mxu0 0.0
      %585 = vmatpush1.msra.mxu0 0.0
      %586 = vmatprep.subr.mxu0 0.0
      %587 = vmatpush1.msra.mxu0 0.0
      %588 = vmatprep.subr.mxu0 0.0
      %589 = vmatpush1.msra.mxu0 0.0
      %590 = vmatprep.subr.mxu0 0.0
      %591 = vmatpush1.msra.mxu0 0.0
      %592 = vmatprep.subr.mxu0 0.0
      %593 = vmatpush1.msra.mxu0 0.0
      %594 = vmatprep.subr.mxu0 0.0
      %595 = vmatpush1.msra.mxu0 0.0
      %596 = vmatprep.subr.mxu0 0.0
      %597 = vmatpush1.msra.mxu0 0.0
      %598 = vmatprep.subr.mxu0 0.0
      %599 = vmatpush1.msra.mxu0 0.0
      %600 = vmatprep.subr.mxu0 0.0
      %601 = vmatpush1.msra.mxu0 0.0
      %602 = vmatprep.subr.mxu0 0.0
      %603 = vmatpush1.msra.mxu0 0.0
      %604 = vmatprep.subr.mxu0 0.0
      %605 = vmatpush1.msra.mxu0 0.0
      %606 = vmatprep.subr.mxu0 0.0
      %607 = vmatpush1.msra.mxu0 0.0
      %608 = vmatprep.subr.mxu0 0.0
      %609 = vmatpush1.msra.mxu0 0.0
      %610 = vmatprep.subr.mxu0 0.0
      %611 = vmatpush1.msra.mxu0 0.0
      %612 = vmatprep.subr.mxu0 0.0
      %613 = vmatpush1.msra.mxu0 0.0
      %614 = vmatprep.subr.mxu0 0.0
      %615 = vmatpush1.msra.mxu0 0.0
      %616 = vmatprep.subr.mxu0 0.0
      %617 = vmatpush1.msra.mxu0 0.0
      %618 = vmatprep.subr.mxu0 0.0
      %619 = vmatpush1.msra.mxu0 0.0
      %620 = vmatprep.subr.mxu0 0.0
      %621 = vmatpush1.msra.mxu0 0.0
      %622 = vmatprep.subr.mxu0 0.0
      %623 = vmatpush1.msra.mxu0 0.0
      %624 = vmatprep.subr.mxu0 0.0
      %625 = vmatpush1.msra.mxu0 0.0
      %626 = vmatprep.subr.mxu0 0.0
      %627 = vmatpush1.msra.mxu0 0.0
      %628 = vmatprep.subr.mxu0 0.0
      %629 = vmatpush1.msra.mxu0 0.0
      %630 = vmatprep.subr.mxu0 0.0
      %631 = vmatpush1.msra.mxu0 0.0
      %632 = vmatprep.subr.mxu0 0.0
      %633 = vmatpush1.msra.mxu0 0.0
      %634 = vmatprep.subr.mxu0 0.0
      %635 = vmatpush1.msra.mxu0 0.0
      %636 = vmatprep.subr.mxu0 0.0
      %637 = vmatpush1.msra.mxu0 0.0
      %638 = vmatprep.subr.mxu0 0.0
      %639 = vmatpush1.msra.mxu0 0.0
      %640 = vmatprep.subr.mxu0 0.0
      %641 = vmatpush1.msra.mxu0 0.0
      %642 = vmatprep.mubr.f32.mxu0 0.0
      %643 = vmatmul.mubr.f32.gmra.mrb[0].mxu0 %v570
      %v644 = vpop.f32.mrb[0].mxu0
      %v645 = vadd.f32 0.0, %v644
      %v646 = vpop.f32.mrb[0].mxu0
      %v647 = vadd.f32 0.0, %v646
      %648 = vdwg.mxu0
      %649 = vmatprep.subr.mxu0 0.0
      %650 = vmatpush1.msra.mxu0 %v576
      %651 = vmatprep.subr.mxu0 0.0
      %652 = vmatpush1.msra.mxu0 0.0
      %653 = vmatprep.subr.mxu0 0.0
      %654 = vmatpush1.msra.mxu0 0.0
      %655 = vmatprep.subr.mxu0 0.0
      %656 = vmatpush1.msra.mxu0 0.0
      %657 = vmatprep.subr.mxu0 0.0
      %658 = vmatpush1.msra.mxu0 0.0
      %659 = vmatprep.subr.mxu0 0.0
      %660 = vmatpush1.msra.mxu0 0.0
      %661 = vmatprep.subr.mxu0 0.0
      %662 = vmatpush1.msra.mxu0 0.0
      %663 = vmatprep.subr.mxu0 0.0
      %664 = vmatpush1.msra.mxu0 0.0
      %665 = vmatprep.subr.mxu0 0.0
      %666 = vmatpush1.msra.mxu0 0.0
      %667 = vmatprep.subr.mxu0 0.0
      %668 = vmatpush1.msra.mxu0 0.0
      %669 = vmatprep.subr.mxu0 0.0
      %670 = vmatpush1.msra.mxu0 0.0
      %671 = vmatprep.subr.mxu0 0.0
      %672 = vmatpush1.msra.mxu0 0.0
      %673 = vmatprep.subr.mxu0 0.0
      %674 = vmatpush1.msra.mxu0 0.0
      %675 = vmatprep.subr.mxu0 0.0
      %676 = vmatpush1.msra.mxu0 0.0
      %677 = vmatprep.subr.mxu0 0.0
      %678 = vmatpush1.msra.mxu0 0.0
      %679 = vmatprep.subr.mxu0 0.0
      %680 = vmatpush1.msra.mxu0 0.0
      %681 = vmatprep.subr.mxu0 0.0
      %682 = vmatpush1.msra.mxu0 0.0
      %683 = vmatprep.subr.mxu0 0.0
      %684 = vmatpush1.msra.mxu0 0.0
      %685 = vmatprep.subr.mxu0 0.0
      %686 = vmatpush1.msra.mxu0 0.0
      %687 = vmatprep.subr.mxu0 0.0
      %688 = vmatpush1.msra.mxu0 0.0
      %689 = vmatprep.subr.mxu0 0.0
      %690 = vmatpush1.msra.mxu0 0.0
      %691 = vmatprep.subr.mxu0 0.0
      %692 = vmatpush1.msra.mxu0 0.0
      %693 = vmatprep.subr.mxu0 0.0
      %694 = vmatpush1.msra.mxu0 0.0
      %695 = vmatprep.subr.mxu0 0.0
      %696 = vmatpush1.msra.mxu0 0.0
      %697 = vmatprep.subr.mxu0 0.0
      %698 = vmatpush1.msra.mxu0 0.0
      %699 = vmatprep.subr.mxu0 0.0
      %700 = vmatpush1.msra.mxu0 0.0
      %701 = vmatprep.subr.mxu0 0.0
      %702 = vmatpush1.msra.mxu0 0.0
      %703 = vmatprep.subr.mxu0 0.0
      %704 = vmatpush1.msra.mxu0 0.0
      %705 = vmatprep.subr.mxu0 0.0
      %706 = vmatpush1.msra.mxu0 0.0
      %707 = vmatprep.subr.mxu0 0.0
      %708 = vmatpush1.msra.mxu0 0.0
      %709 = vmatprep.subr.mxu0 0.0
      %710 = vmatpush1.msra.mxu0 0.0
      %711 = vmatprep.subr.mxu0 0.0
      %712 = vmatpush1.msra.mxu0 0.0
      %713 = vmatprep.mubr.f32.mxu0 0.0
      %714 = vmatmul.mubr.f32.gmra.mrb[0].mxu0 %v570
      %v715 = vpop.f32.mrb[0].mxu0
      %v716 = vadd.f32 0.0, %v715
      %v717 = vpop.f32.mrb[0].mxu0
      %718 = vdwg.mxu0
      %v719 = vadd.f32 %v479, %v645
      %v720 = vadd.f32 %v481, %v647
      %v721 = vadd.f32 %v550, %v716
      %v722 = vld [vmem:[#allocation2] sm:$0xff]
      %v723 = vld [vmem:[#allocation2 + $0x8] sm:$0xf]
      %s724 = scalar_lea.vmem %s1, 12
      %v725 = vld [vmem:[%s724] sm:$0xf]
      %v728 = vcombine.high %v722, %v722
      %729 = vrot.lane.b32.xlu0 %v722, 110
      %v730 = vpop.permute.xlu0 %729
      %731 = vrot.lane.b32.xlu0 %v728, 110
      %v732 = vpop.permute.xlu0 %731
      %733 = vrot.lane.b32.xlu0 %v723, 110
      %v734 = vpop.permute.xlu0 %733
      %vm735 = vcmask 900096
      %v736 = vsel %vm735, %v730, %v732
      %v737 = vsel %vm735, %v732, %v734
      %v739 = vsel %vm251, %v725, 0
      %v741 = vsel %vm255, %v736, 0
      %v743 = vsel %vm255, %v737, 0
      %v745 = vsel %vm255, %v734, 0
      %747 = vmatprep.subr.mxu0 %v743
      %748 = vmatpush1.msra.mxu0 %v741
      %749 = vmatprep.subr.mxu0 0.0
      %750 = vmatpush1.msra.mxu0 0.0
      %751 = vmatprep.subr.mxu0 0.0
      %752 = vmatpush1.msra.mxu0 0.0
      %753 = vmatprep.subr.mxu0 0.0
      %754 = vmatpush1.msra.mxu0 0.0
      %755 = vmatprep.subr.mxu0 0.0
      %756 = vmatpush1.msra.mxu0 0.0
      %757 = vmatprep.subr.mxu0 0.0
      %758 = vmatpush1.msra.mxu0 0.0
      %759 = vmatprep.subr.mxu0 0.0
      %760 = vmatpush1.msra.mxu0 0.0
      %761 = vmatprep.subr.mxu0 0.0
      %762 = vmatpush1.msra.mxu0 0.0
      %763 = vmatprep.subr.mxu0 0.0
      %764 = vmatpush1.msra.mxu0 0.0
      %765 = vmatprep.subr.mxu0 0.0
      %766 = vmatpush1.msra.mxu0 0.0
      %767 = vmatprep.subr.mxu0 0.0
      %768 = vmatpush1.msra.mxu0 0.0
      %769 = vmatprep.subr.mxu0 0.0
      %770 = vmatpush1.msra.mxu0 0.0
      %771 = vmatprep.subr.mxu0 0.0
      %772 = vmatpush1.msra.mxu0 0.0
      %773 = vmatprep.subr.mxu0 0.0
      %774 = vmatpush1.msra.mxu0 0.0
      %775 = vmatprep.subr.mxu0 0.0
      %776 = vmatpush1.msra.mxu0 0.0
      %777 = vmatprep.subr.mxu0 0.0
      %778 = vmatpush1.msra.mxu0 0.0
      %779 = vmatprep.subr.mxu0 0.0
      %780 = vmatpush1.msra.mxu0 0.0
      %781 = vmatprep.subr.mxu0 0.0
      %782 = vmatpush1.msra.mxu0 0.0
      %783 = vmatprep.subr.mxu0 0.0
      %784 = vmatpush1.msra.mxu0 0.0
      %785 = vmatprep.subr.mxu0 0.0
      %786 = vmatpush1.msra.mxu0 0.0
      %787 = vmatprep.subr.mxu0 0.0
      %788 = vmatpush1.msra.mxu0 0.0
      %789 = vmatprep.subr.mxu0 0.0
      %790 = vmatpush1.msra.mxu0 0.0
      %791 = vmatprep.subr.mxu0 0.0
      %792 = vmatpush1.msra.mxu0 0.0
      %793 = vmatprep.subr.mxu0 0.0
      %794 = vmatpush1.msra.mxu0 0.0
      %795 = vmatprep.subr.mxu0 0.0
      %796 = vmatpush1.msra.mxu0 0.0
      %797 = vmatprep.subr.mxu0 0.0
      %798 = vmatpush1.msra.mxu0 0.0
      %799 = vmatprep.subr.mxu0 0.0
      %800 = vmatpush1.msra.mxu0 0.0
      %801 = vmatprep.subr.mxu0 0.0
      %802 = vmatpush1.msra.mxu0 0.0
      %803 = vmatprep.subr.mxu0 0.0
      %804 = vmatpush1.msra.mxu0 0.0
      %805 = vmatprep.subr.mxu0 0.0
      %806 = vmatpush1.msra.mxu0 0.0
      %807 = vmatprep.subr.mxu0 0.0
      %808 = vmatpush1.msra.mxu0 0.0
      %809 = vmatprep.subr.mxu0 0.0
      %810 = vmatpush1.msra.mxu0 0.0
      %811 = vmatprep.mubr.f32.mxu0 0.0
      %812 = vmatmul.mubr.f32.gmra.mrb[0].mxu0 %v739
      %v813 = vpop.f32.mrb[0].mxu0
      %v814 = vadd.f32 0.0, %v813
      %v815 = vpop.f32.mrb[0].mxu0
      %v816 = vadd.f32 0.0, %v815
      %817 = vdwg.mxu0
      %818 = vmatprep.subr.mxu0 0.0
      %819 = vmatpush1.msra.mxu0 %v745
      %820 = vmatprep.subr.mxu0 0.0
      %821 = vmatpush1.msra.mxu0 0.0
      %822 = vmatprep.subr.mxu0 0.0
      %823 = vmatpush1.msra.mxu0 0.0
      %824 = vmatprep.subr.mxu0 0.0
      %825 = vmatpush1.msra.mxu0 0.0
      %826 = vmatprep.subr.mxu0 0.0
      %827 = vmatpush1.msra.mxu0 0.0
      %828 = vmatprep.subr.mxu0 0.0
      %829 = vmatpush1.msra.mxu0 0.0
      %830 = vmatprep.subr.mxu0 0.0
      %831 = vmatpush1.msra.mxu0 0.0
      %832 = vmatprep.subr.mxu0 0.0
      %833 = vmatpush1.msra.mxu0 0.0
      %834 = vmatprep.subr.mxu0 0.0
      %835 = vmatpush1.msra.mxu0 0.0
      %836 = vmatprep.subr.mxu0 0.0
      %837 = vmatpush1.msra.mxu0 0.0
      %838 = vmatprep.subr.mxu0 0.0
      %839 = vmatpush1.msra.mxu0 0.0
      %840 = vmatprep.subr.mxu0 0.0
      %841 = vmatpush1.msra.mxu0 0.0
      %842 = vmatprep.subr.mxu0 0.0
      %843 = vmatpush1.msra.mxu0 0.0
      %844 = vmatprep.subr.mxu0 0.0
      %845 = vmatpush1.msra.mxu0 0.0
      %846 = vmatprep.subr.mxu0 0.0
      %847 = vmatpush1.msra.mxu0 0.0
      %848 = vmatprep.subr.mxu0 0.0
      %849 = vmatpush1.msra.mxu0 0.0
      %850 = vmatprep.subr.mxu0 0.0
      %851 = vmatpush1.msra.mxu0 0.0
      %852 = vmatprep.subr.mxu0 0.0
      %853 = vmatpush1.msra.mxu0 0.0
      %854 = vmatprep.subr.mxu0 0.0
      %855 = vmatpush1.msra.mxu0 0.0
      %856 = vmatprep.subr.mxu0 0.0
      %857 = vmatpush1.msra.mxu0 0.0
      %858 = vmatprep.subr.mxu0 0.0
      %859 = vmatpush1.msra.mxu0 0.0
      %860 = vmatprep.subr.mxu0 0.0
      %861 = vmatpush1.msra.mxu0 0.0
      %862 = vmatprep.subr.mxu0 0.0
      %863 = vmatpush1.msra.mxu0 0.0
      %864 = vmatprep.subr.mxu0 0.0
      %865 = vmatpush1.msra.mxu0 0.0
      %866 = vmatprep.subr.mxu0 0.0
      %867 = vmatpush1.msra.mxu0 0.0
      %868 = vmatprep.subr.mxu0 0.0
      %869 = vmatpush1.msra.mxu0 0.0
      %870 = vmatprep.subr.mxu0 0.0
      %871 = vmatpush1.msra.mxu0 0.0
      %872 = vmatprep.subr.mxu0 0.0
      %873 = vmatpush1.msra.mxu0 0.0
      %874 = vmatprep.subr.mxu0 0.0
      %875 = vmatpush1.msra.mxu0 0.0
      %876 = vmatprep.subr.mxu0 0.0
      %877 = vmatpush1.msra.mxu0 0.0
      %878 = vmatprep.subr.mxu0 0.0
      %879 = vmatpush1.msra.mxu0 0.0
      %880 = vmatprep.subr.mxu0 0.0
      %881 = vmatpush1.msra.mxu0 0.0
      %882 = vmatprep.mubr.f32.mxu0 0.0
      %883 = vmatmul.mubr.f32.gmra.mrb[0].mxu0 %v739
      %v884 = vpop.f32.mrb[0].mxu0
      %v885 = vadd.f32 0.0, %v884
      %v886 = vpop.f32.mrb[0].mxu0
      %887 = vdwg.mxu0
      %v888 = vadd.f32 %v719, %v814
      %v889 = vadd.f32 %v720, %v816
      %v890 = vadd.f32 %v721, %v885
      %v891 = vld [vmem:[#allocation2] sm:$0xff]
      %v892 = vld [vmem:[#allocation2 + $0x8] sm:$0xf]
      %s893 = scalar_lea.vmem %s1, 16
      %v894 = vld [vmem:[%s893] sm:$0xf]
      %v897 = vcombine.high %v891, %v891
      %898 = vrot.lane.b32.xlu0 %v891, 109
      %v899 = vpop.permute.xlu0 %898
      %900 = vrot.lane.b32.xlu0 %v897, 109
      %v901 = vpop.permute.xlu0 %900
      %902 = vrot.lane.b32.xlu0 %v892, 109
      %v903 = vpop.permute.xlu0 %902
      %vm904 = vcmask 891904
      %v905 = vsel %vm904, %v899, %v901
      %v906 = vsel %vm904, %v901, %v903
      %v908 = vsel %vm251, %v894, 0
      %v910 = vsel %vm255, %v905, 0
      %v912 = vsel %vm255, %v906, 0
      %v914 = vsel %vm255, %v903, 0
      %916 = vmatprep.subr.mxu0 %v912
      %917 = vmatpush1.msra.mxu0 %v910
      %918 = vmatprep.subr.mxu0 0.0
      %919 = vmatpush1.msra.mxu0 0.0
      %920 = vmatprep.subr.mxu0 0.0
      %921 = vmatpush1.msra.mxu0 0.0
      %922 = vmatprep.subr.mxu0 0.0
      %923 = vmatpush1.msra.mxu0 0.0
      %924 = vmatprep.subr.mxu0 0.0
      %925 = vmatpush1.msra.mxu0 0.0
      %926 = vmatprep.subr.mxu0 0.0
      %927 = vmatpush1.msra.mxu0 0.0
      %928 = vmatprep.subr.mxu0 0.0
      %929 = vmatpush1.msra.mxu0 0.0
      %930 = vmatprep.subr.mxu0 0.0
      %931 = vmatpush1.msra.mxu0 0.0
      %932 = vmatprep.subr.mxu0 0.0
      %933 = vmatpush1.msra.mxu0 0.0
      %934 = vmatprep.subr.mxu0 0.0
      %935 = vmatpush1.msra.mxu0 0.0
      %936 = vmatprep.subr.mxu0 0.0
      %937 = vmatpush1.msra.mxu0 0.0
      %938 = vmatprep.subr.mxu0 0.0
      %939 = vmatpush1.msra.mxu0 0.0
      %940 = vmatprep.subr.mxu0 0.0
      %941 = vmatpush1.msra.mxu0 0.0
      %942 = vmatprep.subr.mxu0 0.0
      %943 = vmatpush1.msra.mxu0 0.0
      %944 = vmatprep.subr.mxu0 0.0
      %945 = vmatpush1.msra.mxu0 0.0
      %946 = vmatprep.subr.mxu0 0.0
      %947 = vmatpush1.msra.mxu0 0.0
      %948 = vmatprep.subr.mxu0 0.0
      %949 = vmatpush1.msra.mxu0 0.0
      %950 = vmatprep.subr.mxu0 0.0
      %951 = vmatpush1.msra.mxu0 0.0
      %952 = vmatprep.subr.mxu0 0.0
      %953 = vmatpush1.msra.mxu0 0.0
      %954 = vmatprep.subr.mxu0 0.0
      %955 = vmatpush1.msra.mxu0 0.0
      %956 = vmatprep.subr.mxu0 0.0
      %957 = vmatpush1.msra.mxu0 0.0
      %958 = vmatprep.subr.mxu0 0.0
      %959 = vmatpush1.msra.mxu0 0.0
      %960 = vmatprep.subr.mxu0 0.0
      %961 = vmatpush1.msra.mxu0 0.0
      %962 = vmatprep.subr.mxu0 0.0
      %963 = vmatpush1.msra.mxu0 0.0
      %964 = vmatprep.subr.mxu0 0.0
      %965 = vmatpush1.msra.mxu0 0.0
      %966 = vmatprep.subr.mxu0 0.0
      %967 = vmatpush1.msra.mxu0 0.0
      %968 = vmatprep.subr.mxu0 0.0
      %969 = vmatpush1.msra.mxu0 0.0
      %970 = vmatprep.subr.mxu0 0.0
      %971 = vmatpush1.msra.mxu0 0.0
      %972 = vmatprep.subr.mxu0 0.0
      %973 = vmatpush1.msra.mxu0 0.0
      %974 = vmatprep.subr.mxu0 0.0
      %975 = vmatpush1.msra.mxu0 0.0
      %976 = vmatprep.subr.mxu0 0.0
      %977 = vmatpush1.msra.mxu0 0.0
      %978 = vmatprep.subr.mxu0 0.0
      %979 = vmatpush1.msra.mxu0 0.0
      %980 = vmatprep.mubr.f32.mxu0 0.0
      %981 = vmatmul.mubr.f32.gmra.mrb[0].mxu0 %v908
      %v982 = vpop.f32.mrb[0].mxu0
      %v983 = vadd.f32 0.0, %v982
      %v984 = vpop.f32.mrb[0].mxu0
      %v985 = vadd.f32 0.0, %v984
      %986 = vdwg.mxu0
      %987 = vmatprep.subr.mxu0 0.0
      %988 = vmatpush1.msra.mxu0 %v914
      %989 = vmatprep.subr.mxu0 0.0
      %990 = vmatpush1.msra.mxu0 0.0
      %991 = vmatprep.subr.mxu0 0.0
      %992 = vmatpush1.msra.mxu0 0.0
      %993 = vmatprep.subr.mxu0 0.0
      %994 = vmatpush1.msra.mxu0 0.0
      %995 = vmatprep.subr.mxu0 0.0
      %996 = vmatpush1.msra.mxu0 0.0
      %997 = vmatprep.subr.mxu0 0.0
      %998 = vmatpush1.msra.mxu0 0.0
      %999 = vmatprep.subr.mxu0 0.0
      %1000 = vmatpush1.msra.mxu0 0.0
      %1001 = vmatprep.subr.mxu0 0.0
      %1002 = vmatpush1.msra.mxu0 0.0
      %1003 = vmatprep.subr.mxu0 0.0
      %1004 = vmatpush1.msra.mxu0 0.0
      %1005 = vmatprep.subr.mxu0 0.0
      %1006 = vmatpush1.msra.mxu0 0.0
      %1007 = vmatprep.subr.mxu0 0.0
      %1008 = vmatpush1.msra.mxu0 0.0
      %1009 = vmatprep.subr.mxu0 0.0
      %1010 = vmatpush1.msra.mxu0 0.0
      %1011 = vmatprep.subr.mxu0 0.0
      %1012 = vmatpush1.msra.mxu0 0.0
      %1013 = vmatprep.subr.mxu0 0.0
      %1014 = vmatpush1.msra.mxu0 0.0
      %1015 = vmatprep.subr.mxu0 0.0
      %1016 = vmatpush1.msra.mxu0 0.0
      %1017 = vmatprep.subr.mxu0 0.0
      %1018 = vmatpush1.msra.mxu0 0.0
      %1019 = vmatprep.subr.mxu0 0.0
      %1020 = vmatpush1.msra.mxu0 0.0
      %1021 = vmatprep.subr.mxu0 0.0
      %1022 = vmatpush1.msra.mxu0 0.0
      %1023 = vmatprep.subr.mxu0 0.0
      %1024 = vmatpush1.msra.mxu0 0.0
      %1025 = vmatprep.subr.mxu0 0.0
      %1026 = vmatpush1.msra.mxu0 0.0
      %1027 = vmatprep.subr.mxu0 0.0
      %1028 = vmatpush1.msra.mxu0 0.0
      %1029 = vmatprep.subr.mxu0 0.0
      %1030 = vmatpush1.msra.mxu0 0.0
      %1031 = vmatprep.subr.mxu0 0.0
      %1032 = vmatpush1.msra.mxu0 0.0
      %1033 = vmatprep.subr.mxu0 0.0
      %1034 = vmatpush1.msra.mxu0 0.0
      %1035 = vmatprep.subr.mxu0 0.0
      %1036 = vmatpush1.msra.mxu0 0.0
      %1037 = vmatprep.subr.mxu0 0.0
      %1038 = vmatpush1.msra.mxu0 0.0
      %1039 = vmatprep.subr.mxu0 0.0
      %1040 = vmatpush1.msra.mxu0 0.0
      %1041 = vmatprep.subr.mxu0 0.0
      %1042 = vmatpush1.msra.mxu0 0.0
      %1043 = vmatprep.subr.mxu0 0.0
      %1044 = vmatpush1.msra.mxu0 0.0
      %1045 = vmatprep.subr.mxu0 0.0
      %1046 = vmatpush1.msra.mxu0 0.0
      %1047 = vmatprep.subr.mxu0 0.0
      %1048 = vmatpush1.msra.mxu0 0.0
      %1049 = vmatprep.subr.mxu0 0.0
      %1050 = vmatpush1.msra.mxu0 0.0
      %1051 = vmatprep.mubr.f32.mxu0 0.0
      %1052 = vmatmul.mubr.f32.gmra.mrb[0].mxu0 %v908
      %v1053 = vpop.f32.mrb[0].mxu0
      %v1054 = vadd.f32 0.0, %v1053
      %v1055 = vpop.f32.mrb[0].mxu0
      %1056 = vdwg.mxu0
      %v1057 = vadd.f32 %v888, %v983
      %v1058 = vadd.f32 %v889, %v985
      %v1059 = vadd.f32 %v890, %v1054
      %v1060 = vld [vmem:[#allocation2] sm:$0xff]
      %v1061 = vld [vmem:[#allocation2 + $0x8] sm:$0xf]
      %s1062 = scalar_lea.vmem %s1, 20
      %v1063 = vld [vmem:[%s1062] sm:$0xf]
      %v1066 = vcombine.high %v1060, %v1060
      %1067 = vrot.lane.b32.xlu0 %v1060, 108
      %v1068 = vpop.permute.xlu0 %1067
      %1069 = vrot.lane.b32.xlu0 %v1066, 108
      %v1070 = vpop.permute.xlu0 %1069
      %1071 = vrot.lane.b32.xlu0 %v1061, 108
      %v1072 = vpop.permute.xlu0 %1071
      %vm1073 = vcmask 883712
      %v1074 = vsel %vm1073, %v1068, %v1070
      %v1075 = vsel %vm1073, %v1070, %v1072
      %v1077 = vsel %vm251, %v1063, 0
      %v1079 = vsel %vm255, %v1074, 0
      %v1081 = vsel %vm255, %v1075, 0
      %v1083 = vsel %vm255, %v1072, 0
      %1085 = vmatprep.subr.mxu0 %v1081
      %1086 = vmatpush1.msra.mxu0 %v1079
      %1087 = vmatprep.subr.mxu0 0.0
      %1088 = vmatpush1.msra.mxu0 0.0
      %1089 = vmatprep.subr.mxu0 0.0
      %1090 = vmatpush1.msra.mxu0 0.0
      %1091 = vmatprep.subr.mxu0 0.0
      %1092 = vmatpush1.msra.mxu0 0.0
      %1093 = vmatprep.subr.mxu0 0.0
      %1094 = vmatpush1.msra.mxu0 0.0
      %1095 = vmatprep.subr.mxu0 0.0
      %1096 = vmatpush1.msra.mxu0 0.0
      %1097 = vmatprep.subr.mxu0 0.0
      %1098 = vmatpush1.msra.mxu0 0.0
      %1099 = vmatprep.subr.mxu0 0.0
      %1100 = vmatpush1.msra.mxu0 0.0
      %1101 = vmatprep.subr.mxu0 0.0
      %1102 = vmatpush1.msra.mxu0 0.0
      %1103 = vmatprep.subr.mxu0 0.0
      %1104 = vmatpush1.msra.mxu0 0.0
      %1105 = vmatprep.subr.mxu0 0.0
      %1106 = vmatpush1.msra.mxu0 0.0
      %1107 = vmatprep.subr.mxu0 0.0
      %1108 = vmatpush1.msra.mxu0 0.0
      %1109 = vmatprep.subr.mxu0 0.0
      %1110 = vmatpush1.msra.mxu0 0.0
      %1111 = vmatprep.subr.mxu0 0.0
      %1112 = vmatpush1.msra.mxu0 0.0
      %1113 = vmatprep.subr.mxu0 0.0
      %1114 = vmatpush1.msra.mxu0 0.0
      %1115 = vmatprep.subr.mxu0 0.0
      %1116 = vmatpush1.msra.mxu0 0.0
      %1117 = vmatprep.subr.mxu0 0.0
      %1118 = vmatpush1.msra.mxu0 0.0
      %1119 = vmatprep.subr.mxu0 0.0
      %1120 = vmatpush1.msra.mxu0 0.0
      %1121 = vmatprep.subr.mxu0 0.0
      %1122 = vmatpush1.msra.mxu0 0.0
      %1123 = vmatprep.subr.mxu0 0.0
      %1124 = vmatpush1.msra.mxu0 0.0
      %1125 = vmatprep.subr.mxu0 0.0
      %1126 = vmatpush1.msra.mxu0 0.0
      %1127 = vmatprep.subr.mxu0 0.0
      %1128 = vmatpush1.msra.mxu0 0.0
      %1129 = vmatprep.subr.mxu0 0.0
      %1130 = vmatpush1.msra.mxu0 0.0
      %1131 = vmatprep.subr.mxu0 0.0
      %1132 = vmatpush1.msra.mxu0 0.0
      %1133 = vmatprep.subr.mxu0 0.0
      %1134 = vmatpush1.msra.mxu0 0.0
      %1135 = vmatprep.subr.mxu0 0.0
      %1136 = vmatpush1.msra.mxu0 0.0
      %1137 = vmatprep.subr.mxu0 0.0
      %1138 = vmatpush1.msra.mxu0 0.0
      %1139 = vmatprep.subr.mxu0 0.0
      %1140 = vmatpush1.msra.mxu0 0.0
      %1141 = vmatprep.subr.mxu0 0.0
      %1142 = vmatpush1.msra.mxu0 0.0
      %1143 = vmatprep.subr.mxu0 0.0
      %1144 = vmatpush1.msra.mxu0 0.0
      %1145 = vmatprep.subr.mxu0 0.0
      %1146 = vmatpush1.msra.mxu0 0.0
      %1147 = vmatprep.subr.mxu0 0.0
      %1148 = vmatpush1.msra.mxu0 0.0
      %1149 = vmatprep.mubr.f32.mxu0 0.0
      %1150 = vmatmul.mubr.f32.gmra.mrb[0].mxu0 %v1077
      %v1151 = vpop.f32.mrb[0].mxu0
      %v1152 = vadd.f32 0.0, %v1151
      %v1153 = vpop.f32.mrb[0].mxu0
      %v1154 = vadd.f32 0.0, %v1153
      %1155 = vdwg.mxu0
      %1156 = vmatprep.subr.mxu0 0.0
      %1157 = vmatpush1.msra.mxu0 %v1083
      %1158 = vmatprep.subr.mxu0 0.0
      %1159 = vmatpush1.msra.mxu0 0.0
      %1160 = vmatprep.subr.mxu0 0.0
      %1161 = vmatpush1.msra.mxu0 0.0
      %1162 = vmatprep.subr.mxu0 0.0
      %1163 = vmatpush1.msra.mxu0 0.0
      %1164 = vmatprep.subr.mxu0 0.0
      %1165 = vmatpush1.msra.mxu0 0.0
      %1166 = vmatprep.subr.mxu0 0.0
      %1167 = vmatpush1.msra.mxu0 0.0
      %1168 = vmatprep.subr.mxu0 0.0
      %1169 = vmatpush1.msra.mxu0 0.0
      %1170 = vmatprep.subr.mxu0 0.0
      %1171 = vmatpush1.msra.mxu0 0.0
      %1172 = vmatprep.subr.mxu0 0.0
      %1173 = vmatpush1.msra.mxu0 0.0
      %1174 = vmatprep.subr.mxu0 0.0
      %1175 = vmatpush1.msra.mxu0 0.0
      %1176 = vmatprep.subr.mxu0 0.0
      %1177 = vmatpush1.msra.mxu0 0.0
      %1178 = vmatprep.subr.mxu0 0.0
      %1179 = vmatpush1.msra.mxu0 0.0
      %1180 = vmatprep.subr.mxu0 0.0
      %1181 = vmatpush1.msra.mxu0 0.0
      %1182 = vmatprep.subr.mxu0 0.0
      %1183 = vmatpush1.msra.mxu0 0.0
      %1184 = vmatprep.subr.mxu0 0.0
      %1185 = vmatpush1.msra.mxu0 0.0
      %1186 = vmatprep.subr.mxu0 0.0
      %1187 = vmatpush1.msra.mxu0 0.0
      %1188 = vmatprep.subr.mxu0 0.0
      %1189 = vmatpush1.msra.mxu0 0.0
      %1190 = vmatprep.subr.mxu0 0.0
      %1191 = vmatpush1.msra.mxu0 0.0
      %1192 = vmatprep.subr.mxu0 0.0
      %1193 = vmatpush1.msra.mxu0 0.0
      %1194 = vmatprep.subr.mxu0 0.0
      %1195 = vmatpush1.msra.mxu0 0.0
      %1196 = vmatprep.subr.mxu0 0.0
      %1197 = vmatpush1.msra.mxu0 0.0
      %1198 = vmatprep.subr.mxu0 0.0
      %1199 = vmatpush1.msra.mxu0 0.0
      %1200 = vmatprep.subr.mxu0 0.0
      %1201 = vmatpush1.msra.mxu0 0.0
      %1202 = vmatprep.subr.mxu0 0.0
      %1203 = vmatpush1.msra.mxu0 0.0
      %1204 = vmatprep.subr.mxu0 0.0
      %1205 = vmatpush1.msra.mxu0 0.0
      %1206 = vmatprep.subr.mxu0 0.0
      %1207 = vmatpush1.msra.mxu0 0.0
      %1208 = vmatprep.subr.mxu0 0.0
      %1209 = vmatpush1.msra.mxu0 0.0
      %1210 = vmatprep.subr.mxu0 0.0
      %1211 = vmatpush1.msra.mxu0 0.0
      %1212 = vmatprep.subr.mxu0 0.0
      %1213 = vmatpush1.msra.mxu0 0.0
      %1214 = vmatprep.subr.mxu0 0.0
      %1215 = vmatpush1.msra.mxu0 0.0
      %1216 = vmatprep.subr.mxu0 0.0
      %1217 = vmatpush1.msra.mxu0 0.0
      %1218 = vmatprep.subr.mxu0 0.0
      %1219 = vmatpush1.msra.mxu0 0.0
      %1220 = vmatprep.mubr.f32.mxu0 0.0
      %1221 = vmatmul.mubr.f32.gmra.mrb[0].mxu0 %v1077
      %v1222 = vpop.f32.mrb[0].mxu0
      %v1223 = vadd.f32 0.0, %v1222
      %v1224 = vpop.f32.mrb[0].mxu0
      %1225 = vdwg.mxu0
      %v1226 = vadd.f32 %v1057, %v1152
      %v1227 = vadd.f32 %v1058, %v1154
      %v1228 = vadd.f32 %v1059, %v1223
      %v1229 = vld [vmem:[#allocation2] sm:$0xff]
      %v1230 = vld [vmem:[#allocation2 + $0x8] sm:$0xf]
      %s1231 = scalar_lea.vmem %s1, 24
      %v1232 = vld [vmem:[%s1231] sm:$0xf]
      %v1235 = vcombine.high %v1229, %v1229
      %1236 = vrot.lane.b32.xlu0 %v1229, 92
      %v1237 = vpop.permute.xlu0 %1236
      %1238 = vrot.lane.b32.xlu0 %v1235, 92
      %v1239 = vpop.permute.xlu0 %1238
      %1240 = vrot.lane.b32.xlu0 %v1230, 92
      %v1241 = vpop.permute.xlu0 %1240
      %vm1242 = vcmask 752640
      %v1243 = vsel %vm1242, %v1237, %v1239
      %v1244 = vsel %vm1242, %v1239, %v1241
      %v1246 = vsel %vm251, %v1232, 0
      %v1248 = vsel %vm255, %v1243, 0
      %v1250 = vsel %vm255, %v1244, 0
      %v1252 = vsel %vm255, %v1241, 0
      %1254 = vmatprep.subr.mxu0 %v1250
      %1255 = vmatpush1.msra.mxu0 %v1248
      %1256 = vmatprep.subr.mxu0 0.0
      %1257 = vmatpush1.msra.mxu0 0.0
      %1258 = vmatprep.subr.mxu0 0.0
      %1259 = vmatpush1.msra.mxu0 0.0
      %1260 = vmatprep.subr.mxu0 0.0
      %1261 = vmatpush1.msra.mxu0 0.0
      %1262 = vmatprep.subr.mxu0 0.0
      %1263 = vmatpush1.msra.mxu0 0.0
      %1264 = vmatprep.subr.mxu0 0.0
      %1265 = vmatpush1.msra.mxu0 0.0
      %1266 = vmatprep.subr.mxu0 0.0
      %1267 = vmatpush1.msra.mxu0 0.0
      %1268 = vmatprep.subr.mxu0 0.0
      %1269 = vmatpush1.msra.mxu0 0.0
      %1270 = vmatprep.subr.mxu0 0.0
      %1271 = vmatpush1.msra.mxu0 0.0
      %1272 = vmatprep.subr.mxu0 0.0
      %1273 = vmatpush1.msra.mxu0 0.0
      %1274 = vmatprep.subr.mxu0 0.0
      %1275 = vmatpush1.msra.mxu0 0.0
      %1276 = vmatprep.subr.mxu0 0.0
      %1277 = vmatpush1.msra.mxu0 0.0
      %1278 = vmatprep.subr.mxu0 0.0
      %1279 = vmatpush1.msra.mxu0 0.0
      %1280 = vmatprep.subr.mxu0 0.0
      %1281 = vmatpush1.msra.mxu0 0.0
      %1282 = vmatprep.subr.mxu0 0.0
      %1283 = vmatpush1.msra.mxu0 0.0
      %1284 = vmatprep.subr.mxu0 0.0
      %1285 = vmatpush1.msra.mxu0 0.0
      %1286 = vmatprep.subr.mxu0 0.0
      %1287 = vmatpush1.msra.mxu0 0.0
      %1288 = vmatprep.subr.mxu0 0.0
      %1289 = vmatpush1.msra.mxu0 0.0
      %1290 = vmatprep.subr.mxu0 0.0
      %1291 = vmatpush1.msra.mxu0 0.0
      %1292 = vmatprep.subr.mxu0 0.0
      %1293 = vmatpush1.msra.mxu0 0.0
      %1294 = vmatprep.subr.mxu0 0.0
      %1295 = vmatpush1.msra.mxu0 0.0
      %1296 = vmatprep.subr.mxu0 0.0
      %1297 = vmatpush1.msra.mxu0 0.0
      %1298 = vmatprep.subr.mxu0 0.0
      %1299 = vmatpush1.msra.mxu0 0.0
      %1300 = vmatprep.subr.mxu0 0.0
      %1301 = vmatpush1.msra.mxu0 0.0
      %1302 = vmatprep.subr.mxu0 0.0
      %1303 = vmatpush1.msra.mxu0 0.0
      %1304 = vmatprep.subr.mxu0 0.0
      %1305 = vmatpush1.msra.mxu0 0.0
      %1306 = vmatprep.subr.mxu0 0.0
      %1307 = vmatpush1.msra.mxu0 0.0
      %1308 = vmatprep.subr.mxu0 0.0
      %1309 = vmatpush1.msra.mxu0 0.0
      %1310 = vmatprep.subr.mxu0 0.0
      %1311 = vmatpush1.msra.mxu0 0.0
      %1312 = vmatprep.subr.mxu0 0.0
      %1313 = vmatpush1.msra.mxu0 0.0
      %1314 = vmatprep.subr.mxu0 0.0
      %1315 = vmatpush1.msra.mxu0 0.0
      %1316 = vmatprep.subr.mxu0 0.0
      %1317 = vmatpush1.msra.mxu0 0.0
      %1318 = vmatprep.mubr.f32.mxu0 0.0
      %1319 = vmatmul.mubr.f32.gmra.mrb[0].mxu0 %v1246
      %v1320 = vpop.f32.mrb[0].mxu0
      %v1321 = vadd.f32 0.0, %v1320
      %v1322 = vpop.f32.mrb[0].mxu0
      %v1323 = vadd.f32 0.0, %v1322
      %1324 = vdwg.mxu0
      %1325 = vmatprep.subr.mxu0 0.0
      %1326 = vmatpush1.msra.mxu0 %v1252
      %1327 = vmatprep.subr.mxu0 0.0
      %1328 = vmatpush1.msra.mxu0 0.0
      %1329 = vmatprep.subr.mxu0 0.0
      %1330 = vmatpush1.msra.mxu0 0.0
      %1331 = vmatprep.subr.mxu0 0.0
      %1332 = vmatpush1.msra.mxu0 0.0
      %1333 = vmatprep.subr.mxu0 0.0
      %1334 = vmatpush1.msra.mxu0 0.0
      %1335 = vmatprep.subr.mxu0 0.0
      %1336 = vmatpush1.msra.mxu0 0.0
      %1337 = vmatprep.subr.mxu0 0.0
      %1338 = vmatpush1.msra.mxu0 0.0
      %1339 = vmatprep.subr.mxu0 0.0
      %1340 = vmatpush1.msra.mxu0 0.0
      %1341 = vmatprep.subr.mxu0 0.0
      %1342 = vmatpush1.msra.mxu0 0.0
      %1343 = vmatprep.subr.mxu0 0.0
      %1344 = vmatpush1.msra.mxu0 0.0
      %1345 = vmatprep.subr.mxu0 0.0
      %1346 = vmatpush1.msra.mxu0 0.0
      %1347 = vmatprep.subr.mxu0 0.0
      %1348 = vmatpush1.msra.mxu0 0.0
      %1349 = vmatprep.subr.mxu0 0.0
      %1350 = vmatpush1.msra.mxu0 0.0
      %1351 = vmatprep.subr.mxu0 0.0
      %1352 = vmatpush1.msra.mxu0 0.0
      %1353 = vmatprep.subr.mxu0 0.0
      %1354 = vmatpush1.msra.mxu0 0.0
      %1355 = vmatprep.subr.mxu0 0.0
      %1356 = vmatpush1.msra.mxu0 0.0
      %1357 = vmatprep.subr.mxu0 0.0
      %1358 = vmatpush1.msra.mxu0 0.0
      %1359 = vmatprep.subr.mxu0 0.0
      %1360 = vmatpush1.msra.mxu0 0.0
      %1361 = vmatprep.subr.mxu0 0.0
      %1362 = vmatpush1.msra.mxu0 0.0
      %1363 = vmatprep.subr.mxu0 0.0
      %1364 = vmatpush1.msra.mxu0 0.0
      %1365 = vmatprep.subr.mxu0 0.0
      %1366 = vmatpush1.msra.mxu0 0.0
      %1367 = vmatprep.subr.mxu0 0.0
      %1368 = vmatpush1.msra.mxu0 0.0
      %1369 = vmatprep.subr.mxu0 0.0
      %1370 = vmatpush1.msra.mxu0 0.0
      %1371 = vmatprep.subr.mxu0 0.0
      %1372 = vmatpush1.msra.mxu0 0.0
      %1373 = vmatprep.subr.mxu0 0.0
      %1374 = vmatpush1.msra.mxu0 0.0
      %1375 = vmatprep.subr.mxu0 0.0
      %1376 = vmatpush1.msra.mxu0 0.0
      %1377 = vmatprep.subr.mxu0 0.0
      %1378 = vmatpush1.msra.mxu0 0.0
      %1379 = vmatprep.subr.mxu0 0.0
      %1380 = vmatpush1.msra.mxu0 0.0
      %1381 = vmatprep.subr.mxu0 0.0
      %1382 = vmatpush1.msra.mxu0 0.0
      %1383 = vmatprep.subr.mxu0 0.0
      %1384 = vmatpush1.msra.mxu0 0.0
      %1385 = vmatprep.subr.mxu0 0.0
      %1386 = vmatpush1.msra.mxu0 0.0
      %1387 = vmatprep.subr.mxu0 0.0
      %1388 = vmatpush1.msra.mxu0 0.0
      %1389 = vmatprep.mubr.f32.mxu0 0.0
      %1390 = vmatmul.mubr.f32.gmra.mrb[0].mxu0 %v1246
      %v1391 = vpop.f32.mrb[0].mxu0
      %v1392 = vadd.f32 0.0, %v1391
      %v1393 = vpop.f32.mrb[0].mxu0
      %1394 = vdwg.mxu0
      %v1395 = vadd.f32 %v1226, %v1321
      %v1396 = vadd.f32 %v1227, %v1323
      %v1397 = vadd.f32 %v1228, %v1392
      %v1398 = vld [vmem:[#allocation2] sm:$0xff]
      %v1399 = vld [vmem:[#allocation2 + $0x8] sm:$0xf]
      %s1400 = scalar_lea.vmem %s1, 28
      %v1401 = vld [vmem:[%s1400] sm:$0xf]
      %v1404 = vcombine.high %v1398, %v1398
      %1405 = vrot.lane.b32.xlu0 %v1398, 91
      %v1406 = vpop.permute.xlu0 %1405
      %1407 = vrot.lane.b32.xlu0 %v1404, 91
      %v1408 = vpop.permute.xlu0 %1407
      %1409 = vrot.lane.b32.xlu0 %v1399, 91
      %v1410 = vpop.permute.xlu0 %1409
      %vm1411 = vcmask 744448
      %v1412 = vsel %vm1411, %v1406, %v1408
      %v1413 = vsel %vm1411, %v1408, %v1410
      %v1415 = vsel %vm251, %v1401, 0
      %v1417 = vsel %vm255, %v1412, 0
      %v1419 = vsel %vm255, %v1413, 0
      %v1421 = vsel %vm255, %v1410, 0
      %1423 = vmatprep.subr.mxu0 %v1419
      %1424 = vmatpush1.msra.mxu0 %v1417
      %1425 = vmatprep.subr.mxu0 0.0
      %1426 = vmatpush1.msra.mxu0 0.0
      %1427 = vmatprep.subr.mxu0 0.0
      %1428 = vmatpush1.msra.mxu0 0.0
      %1429 = vmatprep.subr.mxu0 0.0
      %1430 = vmatpush1.msra.mxu0 0.0
      %1431 = vmatprep.subr.mxu0 0.0
      %1432 = vmatpush1.msra.mxu0 0.0
      %1433 = vmatprep.subr.mxu0 0.0
      %1434 = vmatpush1.msra.mxu0 0.0
      %1435 = vmatprep.subr.mxu0 0.0
      %1436 = vmatpush1.msra.mxu0 0.0
      %1437 = vmatprep.subr.mxu0 0.0
      %1438 = vmatpush1.msra.mxu0 0.0
      %1439 = vmatprep.subr.mxu0 0.0
      %1440 = vmatpush1.msra.mxu0 0.0
      %1441 = vmatprep.subr.mxu0 0.0
      %1442 = vmatpush1.msra.mxu0 0.0
      %1443 = vmatprep.subr.mxu0 0.0
      %1444 = vmatpush1.msra.mxu0 0.0
      %1445 = vmatprep.subr.mxu0 0.0
      %1446 = vmatpush1.msra.mxu0 0.0
      %1447 = vmatprep.subr.mxu0 0.0
      %1448 = vmatpush1.msra.mxu0 0.0
      %1449 = vmatprep.subr.mxu0 0.0
      %1450 = vmatpush1.msra.mxu0 0.0
      %1451 = vmatprep.subr.mxu0 0.0
      %1452 = vmatpush1.msra.mxu0 0.0
      %1453 = vmatprep.subr.mxu0 0.0
      %1454 = vmatpush1.msra.mxu0 0.0
      %1455 = vmatprep.subr.mxu0 0.0
      %1456 = vmatpush1.msra.mxu0 0.0
      %1457 = vmatprep.subr.mxu0 0.0
      %1458 = vmatpush1.msra.mxu0 0.0
      %1459 = vmatprep.subr.mxu0 0.0
      %1460 = vmatpush1.msra.mxu0 0.0
      %1461 = vmatprep.subr.mxu0 0.0
      %1462 = vmatpush1.msra.mxu0 0.0
      %1463 = vmatprep.subr.mxu0 0.0
      %1464 = vmatpush1.msra.mxu0 0.0
      %1465 = vmatprep.subr.mxu0 0.0
      %1466 = vmatpush1.msra.mxu0 0.0
      %1467 = vmatprep.subr.mxu0 0.0
      %1468 = vmatpush1.msra.mxu0 0.0
      %1469 = vmatprep.subr.mxu0 0.0
      %1470 = vmatpush1.msra.mxu0 0.0
      %1471 = vmatprep.subr.mxu0 0.0
      %1472 = vmatpush1.msra.mxu0 0.0
      %1473 = vmatprep.subr.mxu0 0.0
      %1474 = vmatpush1.msra.mxu0 0.0
      %1475 = vmatprep.subr.mxu0 0.0
      %1476 = vmatpush1.msra.mxu0 0.0
      %1477 = vmatprep.subr.mxu0 0.0
      %1478 = vmatpush1.msra.mxu0 0.0
      %1479 = vmatprep.subr.mxu0 0.0
      %1480 = vmatpush1.msra.mxu0 0.0
      %1481 = vmatprep.subr.mxu0 0.0
      %1482 = vmatpush1.msra.mxu0 0.0
      %1483 = vmatprep.subr.mxu0 0.0
      %1484 = vmatpush1.msra.mxu0 0.0
      %1485 = vmatprep.subr.mxu0 0.0
      %1486 = vmatpush1.msra.mxu0 0.0
      %1487 = vmatprep.mubr.f32.mxu0 0.0
      %1488 = vmatmul.mubr.f32.gmra.mrb[0].mxu0 %v1415
      %v1489 = vpop.f32.mrb[0].mxu0
      %v1490 = vadd.f32 0.0, %v1489
      %v1491 = vpop.f32.mrb[0].mxu0
      %v1492 = vadd.f32 0.0, %v1491
      %1493 = vdwg.mxu0
      %1494 = vmatprep.subr.mxu0 0.0
      %1495 = vmatpush1.msra.mxu0 %v1421
      %1496 = vmatprep.subr.mxu0 0.0
      %1497 = vmatpush1.msra.mxu0 0.0
      %1498 = vmatprep.subr.mxu0 0.0
      %1499 = vmatpush1.msra.mxu0 0.0
      %1500 = vmatprep.subr.mxu0 0.0
      %1501 = vmatpush1.msra.mxu0 0.0
      %1502 = vmatprep.subr.mxu0 0.0
      %1503 = vmatpush1.msra.mxu0 0.0
      %1504 = vmatprep.subr.mxu0 0.0
      %1505 = vmatpush1.msra.mxu0 0.0
      %1506 = vmatprep.subr.mxu0 0.0
      %1507 = vmatpush1.msra.mxu0 0.0
      %1508 = vmatprep.subr.mxu0 0.0
      %1509 = vmatpush1.msra.mxu0 0.0
      %1510 = vmatprep.subr.mxu0 0.0
      %1511 = vmatpush1.msra.mxu0 0.0
      %1512 = vmatprep.subr.mxu0 0.0
      %1513 = vmatpush1.msra.mxu0 0.0
      %1514 = vmatprep.subr.mxu0 0.0
      %1515 = vmatpush1.msra.mxu0 0.0
      %1516 = vmatprep.subr.mxu0 0.0
      %1517 = vmatpush1.msra.mxu0 0.0
      %1518 = vmatprep.subr.mxu0 0.0
      %1519 = vmatpush1.msra.mxu0 0.0
      %1520 = vmatprep.subr.mxu0 0.0
      %1521 = vmatpush1.msra.mxu0 0.0
      %1522 = vmatprep.subr.mxu0 0.0
      %1523 = vmatpush1.msra.mxu0 0.0
      %1524 = vmatprep.subr.mxu0 0.0
      %1525 = vmatpush1.msra.mxu0 0.0
      %1526 = vmatprep.subr.mxu0 0.0
      %1527 = vmatpush1.msra.mxu0 0.0
      %1528 = vmatprep.subr.mxu0 0.0
      %1529 = vmatpush1.msra.mxu0 0.0
      %1530 = vmatprep.subr.mxu0 0.0
      %1531 = vmatpush1.msra.mxu0 0.0
      %1532 = vmatprep.subr.mxu0 0.0
      %1533 = vmatpush1.msra.mxu0 0.0
      %1534 = vmatprep.subr.mxu0 0.0
      %1535 = vmatpush1.msra.mxu0 0.0
      %1536 = vmatprep.subr.mxu0 0.0
      %1537 = vmatpush1.msra.mxu0 0.0
      %1538 = vmatprep.subr.mxu0 0.0
      %1539 = vmatpush1.msra.mxu0 0.0
      %1540 = vmatprep.subr.mxu0 0.0
      %1541 = vmatpush1.msra.mxu0 0.0
      %1542 = vmatprep.subr.mxu0 0.0
      %1543 = vmatpush1.msra.mxu0 0.0
      %1544 = vmatprep.subr.mxu0 0.0
      %1545 = vmatpush1.msra.mxu0 0.0
      %1546 = vmatprep.subr.mxu0 0.0
      %1547 = vmatpush1.msra.mxu0 0.0
      %1548 = vmatprep.subr.mxu0 0.0
      %1549 = vmatpush1.msra.mxu0 0.0
      %1550 = vmatprep.subr.mxu0 0.0
      %1551 = vmatpush1.msra.mxu0 0.0
      %1552 = vmatprep.subr.mxu0 0.0
      %1553 = vmatpush1.msra.mxu0 0.0
      %1554 = vmatprep.subr.mxu0 0.0
      %1555 = vmatpush1.msra.mxu0 0.0
      %1556 = vmatprep.subr.mxu0 0.0
      %1557 = vmatpush1.msra.mxu0 0.0
      %1558 = vmatprep.mubr.f32.mxu0 0.0
      %1559 = vmatmul.mubr.f32.gmra.mrb[0].mxu0 %v1415
      %v1560 = vpop.f32.mrb[0].mxu0
      %v1561 = vadd.f32 0.0, %v1560
      %v1562 = vpop.f32.mrb[0].mxu0
      %1563 = vdwg.mxu0
      %v1564 = vadd.f32 %v1395, %v1490
      %v1565 = vadd.f32 %v1396, %v1492
      %v1566 = vadd.f32 %v1397, %v1561
      %v1567 = vld [vmem:[#allocation2] sm:$0xff]
      %v1568 = vld [vmem:[#allocation2 + $0x8] sm:$0xf]
      %s1569 = scalar_lea.vmem %s1, 32
      %v1570 = vld [vmem:[%s1569] sm:$0xf]
      %v1573 = vcombine.high %v1567, %v1567
      %1574 = vrot.lane.b32.xlu0 %v1567, 90
      %v1575 = vpop.permute.xlu0 %1574
      %1576 = vrot.lane.b32.xlu0 %v1573, 90
      %v1577 = vpop.permute.xlu0 %1576
      %1578 = vrot.lane.b32.xlu0 %v1568, 90
      %v1579 = vpop.permute.xlu0 %1578
      %vm1580 = vcmask 736256
      %v1581 = vsel %vm1580, %v1575, %v1577
      %v1582 = vsel %vm1580, %v1577, %v1579
      %v1584 = vsel %vm251, %v1570, 0
      %v1586 = vsel %vm255, %v1581, 0
      %v1588 = vsel %vm255, %v1582, 0
      %v1590 = vsel %vm255, %v1579, 0
      %1592 = vmatprep.subr.mxu0 %v1588
      %1593 = vmatpush1.msra.mxu0 %v1586
      %1594 = vmatprep.subr.mxu0 0.0
      %1595 = vmatpush1.msra.mxu0 0.0
      %1596 = vmatprep.subr.mxu0 0.0
      %1597 = vmatpush1.msra.mxu0 0.0
      %1598 = vmatprep.subr.mxu0 0.0
      %1599 = vmatpush1.msra.mxu0 0.0
      %1600 = vmatprep.subr.mxu0 0.0
      %1601 = vmatpush1.msra.mxu0 0.0
      %1602 = vmatprep.subr.mxu0 0.0
      %1603 = vmatpush1.msra.mxu0 0.0
      %1604 = vmatprep.subr.mxu0 0.0
      %1605 = vmatpush1.msra.mxu0 0.0
      %1606 = vmatprep.subr.mxu0 0.0
      %1607 = vmatpush1.msra.mxu0 0.0
      %1608 = vmatprep.subr.mxu0 0.0
      %1609 = vmatpush1.msra.mxu0 0.0
      %1610 = vmatprep.subr.mxu0 0.0
      %1611 = vmatpush1.msra.mxu0 0.0
      %1612 = vmatprep.subr.mxu0 0.0
      %1613 = vmatpush1.msra.mxu0 0.0
      %1614 = vmatprep.subr.mxu0 0.0
      %1615 = vmatpush1.msra.mxu0 0.0
      %1616 = vmatprep.subr.mxu0 0.0
      %1617 = vmatpush1.msra.mxu0 0.0
      %1618 = vmatprep.subr.mxu0 0.0
      %1619 = vmatpush1.msra.mxu0 0.0
      %1620 = vmatprep.subr.mxu0 0.0
      %1621 = vmatpush1.msra.mxu0 0.0
      %1622 = vmatprep.subr.mxu0 0.0
      %1623 = vmatpush1.msra.mxu0 0.0
      %1624 = vmatprep.subr.mxu0 0.0
      %1625 = vmatpush1.msra.mxu0 0.0
      %1626 = vmatprep.subr.mxu0 0.0
      %1627 = vmatpush1.msra.mxu0 0.0
      %1628 = vmatprep.subr.mxu0 0.0
      %1629 = vmatpush1.msra.mxu0 0.0
      %1630 = vmatprep.subr.mxu0 0.0
      %1631 = vmatpush1.msra.mxu0 0.0
      %1632 = vmatprep.subr.mxu0 0.0
      %1633 = vmatpush1.msra.mxu0 0.0
      %1634 = vmatprep.subr.mxu0 0.0
      %1635 = vmatpush1.msra.mxu0 0.0
      %1636 = vmatprep.subr.mxu0 0.0
      %1637 = vmatpush1.msra.mxu0 0.0
      %1638 = vmatprep.subr.mxu0 0.0
      %1639 = vmatpush1.msra.mxu0 0.0
      %1640 = vmatprep.subr.mxu0 0.0
      %1641 = vmatpush1.msra.mxu0 0.0
      %1642 = vmatprep.subr.mxu0 0.0
      %1643 = vmatpush1.msra.mxu0 0.0
      %1644 = vmatprep.subr.mxu0 0.0
      %1645 = vmatpush1.msra.mxu0 0.0
      %1646 = vmatprep.subr.mxu0 0.0
      %1647 = vmatpush1.msra.mxu0 0.0
      %1648 = vmatprep.subr.mxu0 0.0
      %1649 = vmatpush1.msra.mxu0 0.0
      %1650 = vmatprep.subr.mxu0 0.0
      %1651 = vmatpush1.msra.mxu0 0.0
      %1652 = vmatprep.subr.mxu0 0.0
      %1653 = vmatpush1.msra.mxu0 0.0
      %1654 = vmatprep.subr.mxu0 0.0
      %1655 = vmatpush1.msra.mxu0 0.0
      %1656 = vmatprep.mubr.f32.mxu0 0.0
      %1657 = vmatmul.mubr.f32.gmra.mrb[0].mxu0 %v1584
      %v1658 = vpop.f32.mrb[0].mxu0
      %v1659 = vadd.f32 0.0, %v1658
      %v1660 = vpop.f32.mrb[0].mxu0
      %v1661 = vadd.f32 0.0, %v1660
      %1662 = vdwg.mxu0
      %1663 = vmatprep.subr.mxu0 0.0
      %1664 = vmatpush1.msra.mxu0 %v1590
      %1665 = vmatprep.subr.mxu0 0.0
      %1666 = vmatpush1.msra.mxu0 0.0
      %1667 = vmatprep.subr.mxu0 0.0
      %1668 = vmatpush1.msra.mxu0 0.0
      %1669 = vmatprep.subr.mxu0 0.0
      %1670 = vmatpush1.msra.mxu0 0.0
      %1671 = vmatprep.subr.mxu0 0.0
      %1672 = vmatpush1.msra.mxu0 0.0
      %1673 = vmatprep.subr.mxu0 0.0
      %1674 = vmatpush1.msra.mxu0 0.0
      %1675 = vmatprep.subr.mxu0 0.0
      %1676 = vmatpush1.msra.mxu0 0.0
      %1677 = vmatprep.subr.mxu0 0.0
      %1678 = vmatpush1.msra.mxu0 0.0
      %1679 = vmatprep.subr.mxu0 0.0
      %1680 = vmatpush1.msra.mxu0 0.0
      %1681 = vmatprep.subr.mxu0 0.0
      %1682 = vmatpush1.msra.mxu0 0.0
      %1683 = vmatprep.subr.mxu0 0.0
      %1684 = vmatpush1.msra.mxu0 0.0
      %1685 = vmatprep.subr.mxu0 0.0
      %1686 = vmatpush1.msra.mxu0 0.0
      %1687 = vmatprep.subr.mxu0 0.0
      %1688 = vmatpush1.msra.mxu0 0.0
      %1689 = vmatprep.subr.mxu0 0.0
      %1690 = vmatpush1.msra.mxu0 0.0
      %1691 = vmatprep.subr.mxu0 0.0
      %1692 = vmatpush1.msra.mxu0 0.0
      %1693 = vmatprep.subr.mxu0 0.0
      %1694 = vmatpush1.msra.mxu0 0.0
      %1695 = vmatprep.subr.mxu0 0.0
      %1696 = vmatpush1.msra.mxu0 0.0
      %1697 = vmatprep.subr.mxu0 0.0
      %1698 = vmatpush1.msra.mxu0 0.0
      %1699 = vmatprep.subr.mxu0 0.0
      %1700 = vmatpush1.msra.mxu0 0.0
      %1701 = vmatprep.subr.mxu0 0.0
      %1702 = vmatpush1.msra.mxu0 0.0
      %1703 = vmatprep.subr.mxu0 0.0
      %1704 = vmatpush1.msra.mxu0 0.0
      %1705 = vmatprep.subr.mxu0 0.0
      %1706 = vmatpush1.msra.mxu0 0.0
      %1707 = vmatprep.subr.mxu0 0.0
      %1708 = vmatpush1.msra.mxu0 0.0
      %1709 = vmatprep.subr.mxu0 0.0
      %1710 = vmatpush1.msra.mxu0 0.0
      %1711 = vmatprep.subr.mxu0 0.0
      %1712 = vmatpush1.msra.mxu0 0.0
      %1713 = vmatprep.subr.mxu0 0.0
      %1714 = vmatpush1.msra.mxu0 0.0
      %1715 = vmatprep.subr.mxu0 0.0
      %1716 = vmatpush1.msra.mxu0 0.0
      %1717 = vmatprep.subr.mxu0 0.0
      %1718 = vmatpush1.msra.mxu0 0.0
      %1719 = vmatprep.subr.mxu0 0.0
      %1720 = vmatpush1.msra.mxu0 0.0
      %1721 = vmatprep.subr.mxu0 0.0
      %1722 = vmatpush1.msra.mxu0 0.0
      %1723 = vmatprep.subr.mxu0 0.0
      %1724 = vmatpush1.msra.mxu0 0.0
      %1725 = vmatprep.subr.mxu0 0.0
      %1726 = vmatpush1.msra.mxu0 0.0
      %1727 = vmatprep.mubr.f32.mxu0 0.0
      %1728 = vmatmul.mubr.f32.gmra.mrb[0].mxu0 %v1584
      %v1729 = vpop.f32.mrb[0].mxu0
      %v1730 = vadd.f32 0.0, %v1729
      %v1731 = vpop.f32.mrb[0].mxu0
      %1732 = vdwg.mxu0
      %v1733 = vadd.f32 %v1564, %v1659
      %v1734 = vadd.f32 %v1565, %v1661
      %v1735 = vadd.f32 %v1566, %v1730
      %v1736 = vsel %vm207, 1, 0
      %v1737 = vlaneseq
      %v1738 = vshrl.u32 %v1737, 7
      %v1739 = vsub.s32 0, %v1738
      %v1740 = vrot.slane %v1736, %v1739
      %v1741 = vlaneseq
      %v1742 = vshrl.u32 %v1741, 7
      %v1743 = vsub.s32 1, %v1742
      %v1744 = vrot.slane %v1736, %v1743
      %v1745 = vlaneseq
      %v1746 = vshrl.u32 %v1745, 7
      %v1747 = vsub.s32 2, %v1746
      %v1748 = vrot.slane %v1736, %v1747
      %vm1749 = vcmp.eq.s32.totalorder %v1740, 1
      %vm1750 = vcmp.eq.s32.totalorder %v1744, 1
      %vm1751 = vcmp.eq.s32.totalorder %v1748, 1
      %v1752 = vsel %vm1749, %v1733, 0.0
      %v1753 = vsel %vm1750, %v1734, 0.0
      %v1754 = vsel %vm1751, %v1735, 0.0
      %v1755 = vsel %vm255, %v1752, 0.0
      %v1756 = vsel %vm255, %v1753, 0.0
      %v1757 = vadd.f32 %v1755, %v1756
      %vm1758 = vcmask 551936
      %v1759 = vsel %vm1758, %v1754, 0.0
      %v1760 = vadd.f32 %v1757, %v1759
      %1761 = vadd.xlane.f32.xlu0 %v1760
      %v1762 = vpop.xlane.xlu0 %1761
      %v1763 = vmul.f32 %v1752, %v1752
      %v1764 = vmul.f32 %v1753, %v1753
      %v1765 = vmul.f32 %v1754, %v1754
      %v1766 = vsel %vm255, %v1763, 0.0
      %v1767 = vsel %vm255, %v1764, 0.0
      %v1768 = vadd.f32 %v1766, %v1767
      %v1769 = vsel %vm1758, %v1765, 0.0
      %v1770 = vadd.f32 %v1768, %v1769
      %1771 = vadd.xlane.f32.xlu0 %v1770
      %v1772 = vpop.xlane.xlu0 %1771
      %v1773 = vmul.f32 %v1762, 0.00390625
      %v1774 = vmul.f32 %v1772, 0.00390625
      %v1775 = vmul.f32 %v1773, %v1773
      %v1776 = vsub.f32 %v1774, %v1775
      %v1777 = vsub.f32 %v1733, %v1773
      %v1778 = vsub.f32 %v1734, %v1773
      %v1779 = vsub.f32 %v1735, %v1773
      %v1780 = vadd.f32 %v1776, 1e-05
      %v1781 = vrsqrt.pop %v1780
      %v1782 = vmul.f32 %v1777, %v1781
      %v1783 = vmul.f32 %v1778, %v1781
      %v1784 = vmul.f32 %v1779, %v1781
      %v1785 = vmax.f32 %v1782, 0.0
      %v1786 = vmax.f32 %v1783, 0.0
      %v1787 = vmax.f32 %v1784, 0.0
      %v1791 = vcombine.low %v1785, %v1786
      %1792 = vrot.lane.b32.xlu0 %v1791, 19
      %v1793 = vpop.permute.xlu0 %1792
      %1794 = vrot.lane.b32.xlu0 %v1787, 19
      %v1795 = vpop.permute.xlu0 %1794
      %v1796 = vrot.slane %v1793, 4
      %v1797 = vsel %vm223, %v1796, %v1793
      %v1798 = vsel %vm223, %v1796, %v1795
      %1801 = vst.msk [vmem:[#allocation3] sm:$0xff] %vm230, %v1797
      %1802 = vst.msk [vmem:[#allocation3 + $0x8] sm:$0xf] %vm232, %v1798
      %v1803 = vld [vmem:[#allocation3] sm:$0xff]
      %v1804 = vld [vmem:[#allocation3 + $0x8] sm:$0xf]
      %vm1805 = vcmp.eq.s32.totalorder %v200, 0
      %vm1806 = vcmp.eq.s32.totalorder %v200, 17
      %v1807 = vsel %vm1806, 1, 0
      %v1808 = vlaneseq
      %v1809 = vshrl.u32 %v1808, 7
      %v1810 = vsub.s32 0, %v1809
      %v1811 = vrot.slane %v1807, %v1810
      %v1812 = vlaneseq
      %v1813 = vshrl.u32 %v1812, 7
      %v1814 = vsub.s32 1, %v1813
      %v1815 = vrot.slane %v1807, %v1814
      %v1816 = vlaneseq
      %v1817 = vshrl.u32 %v1816, 7
      %v1818 = vsub.s32 2, %v1817
      %v1819 = vrot.slane %v1807, %v1818
      %vm1820 = vcmp.eq.s32.totalorder %v1811, 1
      %vm1821 = vcmp.eq.s32.totalorder %v1815, 1
      %vm1822 = vcmp.eq.s32.totalorder %v1819, 1
      %v1825 = vcombine.high %v1803, %v1803
      %1826 = vrot.lane.b32.xlu0 %v1803, 111
      %v1827 = vpop.permute.xlu0 %1826
      %1828 = vrot.lane.b32.xlu0 %v1825, 111
      %v1829 = vpop.permute.xlu0 %1828
      %1830 = vrot.lane.b32.xlu0 %v1804, 111
      %v1831 = vpop.permute.xlu0 %1830
      %vm1832 = vcmask 908288
      %v1833 = vsel %vm1832, %v1827, %v1829
      %v1834 = vsel %vm1832, %v1829, %v1831
      %1838 = vrot.lane.b32.xlu0 %v1803, 109
      %v1839 = vpop.permute.xlu0 %1838
      %1840 = vrot.lane.b32.xlu0 %v1825, 109
      %v1841 = vpop.permute.xlu0 %1840
      %1842 = vrot.lane.b32.xlu0 %v1804, 109
      %v1843 = vpop.permute.xlu0 %1842
      %v1844 = vsel %vm904, %v1839, %v1841
      %v1845 = vsel %vm904, %v1841, %v1843
      %v1849 = vsel %vm1820, %v1833, %v1844
      %v1850 = vsel %vm1821, %v1834, %v1845
      %v1851 = vsel %vm1822, %v1831, %v1843
      %v1852 = vsel %vm1805, 1, 0
      %v1853 = vlaneseq
      %v1854 = vshrl.u32 %v1853, 7
      %v1855 = vsub.s32 0, %v1854
      %v1856 = vrot.slane %v1852, %v1855
      %v1857 = vlaneseq
      %v1858 = vshrl.u32 %v1857, 7
      %v1859 = vsub.s32 1, %v1858
      %v1860 = vrot.slane %v1852, %v1859
      %v1861 = vlaneseq
      %v1862 = vshrl.u32 %v1861, 7
      %v1863 = vsub.s32 2, %v1862
      %v1864 = vrot.slane %v1852, %v1863
      %vm1865 = vcmp.eq.s32.totalorder %v1856, 1
      %vm1866 = vcmp.eq.s32.totalorder %v1860, 1
      %vm1867 = vcmp.eq.s32.totalorder %v1864, 1
      %1868 = vrot.lane.b32.xlu0 %v1803, 107
      %v1869 = vpop.permute.xlu0 %1868
      %1870 = vrot.lane.b32.xlu0 %v1825, 107
      %v1871 = vpop.permute.xlu0 %1870
      %1872 = vrot.lane.b32.xlu0 %v1804, 107
      %v1873 = vpop.permute.xlu0 %1872
      %vm1874 = vcmask 875520
      %v1875 = vsel %vm1874, %v1869, %v1871
      %v1876 = vsel %vm1874, %v1871, %v1873
      %v1880 = vsel %vm1865, %v1875, %v1849
      %v1881 = vsel %vm1866, %v1876, %v1850
      %v1882 = vsel %vm1867, %v1873, %v1851
      %v1886 = vcombine.low %v1880, %v1881
      %1887 = vrot.lane.b32.xlu0 %v1886, 19
      %v1888 = vpop.permute.xlu0 %1887
      %1889 = vrot.lane.b32.xlu0 %v1882, 19
      %v1890 = vpop.permute.xlu0 %1889
      %v1891 = vrot.slane %v1888, 4
      %v1892 = vsel %vm223, %v1891, %v1888
      %v1893 = vsel %vm223, %v1891, %v1890
      %1896 = vst.msk [vmem:[#allocation3] sm:$0xff] %vm230, %v1892
      %1897 = vst.msk [vmem:[#allocation3 + $0x8] sm:$0xf] %vm232, %v1893
      %v1898 = vld [vmem:[#allocation3] sm:$0xf]
      %1900 = vrot.lane.b32.xlu0 %v1898, 92
      %v1901 = vpop.permute.xlu0 %1900
      %vm1903 = vcmask 298136
      %1904 = vst.msk [vmem:[#allocation3] sm:$0xf] %vm1903, %v1901
      %v1905 = vld [vmem:[#allocation3 + $0x8] sm:$0xf]
      %1907 = vrot.lane.b32.xlu0 %v1905, 36
      %v1908 = vpop.permute.xlu0 %1907
      %vm1910 = vcmask 708136
      %1911 = vst.msk [vmem:[#allocation3 + $0x8] sm:$0xf] %vm1910, %v1908
      %v1912 = vld [vmem:[#allocation3] sm:$0xff]
      %v1913 = vld [vmem:[#allocation3 + $0x8] sm:$0xf]
      %v1914 = vld [vmem:[%s2] sm:$0xf]
      %s1915 = scalar_lea.vmem %s2, 4
      %v1916 = vld [vmem:[%s1915] sm:$0xf]
      %v1919 = vcombine.high %v1912, %v1912
      %1920 = vrot.lane.b32.xlu0 %v1912, 127
      %v1921 = vpop.permute.xlu0 %1920
      %1922 = vrot.lane.b32.xlu0 %v1919, 127
      %v1923 = vpop.permute.xlu0 %1922
      %1924 = vrot.lane.b32.xlu0 %v1913, 127
      %v1925 = vpop.permute.xlu0 %1924
      %v1926 = vsel %vm248, %v1921, %v1923
      %v1927 = vsel %vm248, %v1923, %v1925
      %v1929 = vsel %vm251, %v1916, 0
      %v1931 = vsel %vm255, %v1926, 0
      %v1933 = vsel %vm255, %v1927, 0
      %v1935 = vsel %vm255, %v1925, 0
      %1937 = vmatprep.subr.mxu0 %v1933
      %1938 = vmatpush1.msra.mxu0 %v1931
      %1939 = vmatprep.subr.mxu0 0.0
      %1940 = vmatpush1.msra.mxu0 0.0
      %1941 = vmatprep.subr.mxu0 0.0
      %1942 = vmatpush1.msra.mxu0 0.0
      %1943 = vmatprep.subr.mxu0 0.0
      %1944 = vmatpush1.msra.mxu0 0.0
      %1945 = vmatprep.subr.mxu0 0.0
      %1946 = vmatpush1.msra.mxu0 0.0
      %1947 = vmatprep.subr.mxu0 0.0
      %1948 = vmatpush1.msra.mxu0 0.0
      %1949 = vmatprep.subr.mxu0 0.0
      %1950 = vmatpush1.msra.mxu0 0.0
      %1951 = vmatprep.subr.mxu0 0.0
      %1952 = vmatpush1.msra.mxu0 0.0
      %1953 = vmatprep.subr.mxu0 0.0
      %1954 = vmatpush1.msra.mxu0 0.0
      %1955 = vmatprep.subr.mxu0 0.0
      %1956 = vmatpush1.msra.mxu0 0.0
      %1957 = vmatprep.subr.mxu0 0.0
      %1958 = vmatpush1.msra.mxu0 0.0
      %1959 = vmatprep.subr.mxu0 0.0
      %1960 = vmatpush1.msra.mxu0 0.0
      %1961 = vmatprep.subr.mxu0 0.0
      %1962 = vmatpush1.msra.mxu0 0.0
      %1963 = vmatprep.subr.mxu0 0.0
      %1964 = vmatpush1.msra.mxu0 0.0
      %1965 = vmatprep.subr.mxu0 0.0
      %1966 = vmatpush1.msra.mxu0 0.0
      %1967 = vmatprep.subr.mxu0 0.0
      %1968 = vmatpush1.msra.mxu0 0.0
      %1969 = vmatprep.subr.mxu0 0.0
      %1970 = vmatpush1.msra.mxu0 0.0
      %1971 = vmatprep.subr.mxu0 0.0
      %1972 = vmatpush1.msra.mxu0 0.0
      %1973 = vmatprep.subr.mxu0 0.0
      %1974 = vmatpush1.msra.mxu0 0.0
      %1975 = vmatprep.subr.mxu0 0.0
      %1976 = vmatpush1.msra.mxu0 0.0
      %1977 = vmatprep.subr.mxu0 0.0
      %1978 = vmatpush1.msra.mxu0 0.0
      %1979 = vmatprep.subr.mxu0 0.0
      %1980 = vmatpush1.msra.mxu0 0.0
      %1981 = vmatprep.subr.mxu0 0.0
      %1982 = vmatpush1.msra.mxu0 0.0
      %1983 = vmatprep.subr.mxu0 0.0
      %1984 = vmatpush1.msra.mxu0 0.0
      %1985 = vmatprep.subr.mxu0 0.0
      %1986 = vmatpush1.msra.mxu0 0.0
      %1987 = vmatprep.subr.mxu0 0.0
      %1988 = vmatpush1.msra.mxu0 0.0
      %1989 = vmatprep.subr.mxu0 0.0
      %1990 = vmatpush1.msra.mxu0 0.0
      %1991 = vmatprep.subr.mxu0 0.0
      %1992 = vmatpush1.msra.mxu0 0.0
      %1993 = vmatprep.subr.mxu0 0.0
      %1994 = vmatpush1.msra.mxu0 0.0
      %1995 = vmatprep.subr.mxu0 0.0
      %1996 = vmatpush1.msra.mxu0 0.0
      %1997 = vmatprep.subr.mxu0 0.0
      %1998 = vmatpush1.msra.mxu0 0.0
      %1999 = vmatprep.subr.mxu0 0.0
      %2000 = vmatpush1.msra.mxu0 0.0
      %2001 = vmatprep.mubr.f32.mxu0 0.0
      %2002 = vmatmul.mubr.f32.gmra.mrb[0].mxu0 %v1929
      %v2003 = vpop.f32.mrb[0].mxu0
      %v2004 = vadd.f32 0.0, %v2003
      %v2005 = vpop.f32.mrb[0].mxu0
      %v2006 = vadd.f32 0.0, %v2005
      %2007 = vdwg.mxu0
      %2008 = vmatprep.subr.mxu0 0.0
      %2009 = vmatpush1.msra.mxu0 %v1935
      %2010 = vmatprep.subr.mxu0 0.0
      %2011 = vmatpush1.msra.mxu0 0.0
      %2012 = vmatprep.subr.mxu0 0.0
      %2013 = vmatpush1.msra.mxu0 0.0
      %2014 = vmatprep.subr.mxu0 0.0
      %2015 = vmatpush1.msra.mxu0 0.0
      %2016 = vmatprep.subr.mxu0 0.0
      %2017 = vmatpush1.msra.mxu0 0.0
      %2018 = vmatprep.subr.mxu0 0.0
      %2019 = vmatpush1.msra.mxu0 0.0
      %2020 = vmatprep.subr.mxu0 0.0
      %2021 = vmatpush1.msra.mxu0 0.0
      %2022 = vmatprep.subr.mxu0 0.0
      %2023 = vmatpush1.msra.mxu0 0.0
      %2024 = vmatprep.subr.mxu0 0.0
      %2025 = vmatpush1.msra.mxu0 0.0
      %2026 = vmatprep.subr.mxu0 0.0
      %2027 = vmatpush1.msra.mxu0 0.0
      %2028 = vmatprep.subr.mxu0 0.0
      %2029 = vmatpush1.msra.mxu0 0.0
      %2030 = vmatprep.subr.mxu0 0.0
      %2031 = vmatpush1.msra.mxu0 0.0
      %2032 = vmatprep.subr.mxu0 0.0
      %2033 = vmatpush1.msra.mxu0 0.0
      %2034 = vmatprep.subr.mxu0 0.0
      %2035 = vmatpush1.msra.mxu0 0.0
      %2036 = vmatprep.subr.mxu0 0.0
      %2037 = vmatpush1.msra.mxu0 0.0
      %2038 = vmatprep.subr.mxu0 0.0
      %2039 = vmatpush1.msra.mxu0 0.0
      %2040 = vmatprep.subr.mxu0 0.0
      %2041 = vmatpush1.msra.mxu0 0.0
      %2042 = vmatprep.subr.mxu0 0.0
      %2043 = vmatpush1.msra.mxu0 0.0
      %2044 = vmatprep.subr.mxu0 0.0
      %2045 = vmatpush1.msra.mxu0 0.0
      %2046 = vmatprep.subr.mxu0 0.0
      %2047 = vmatpush1.msra.mxu0 0.0
      %2048 = vmatprep.subr.mxu0 0.0
      %2049 = vmatpush1.msra.mxu0 0.0
      %2050 = vmatprep.subr.mxu0 0.0
      %2051 = vmatpush1.msra.mxu0 0.0
      %2052 = vmatprep.subr.mxu0 0.0
      %2053 = vmatpush1.msra.mxu0 0.0
      %2054 = vmatprep.subr.mxu0 0.0
      %2055 = vmatpush1.msra.mxu0 0.0
      %2056 = vmatprep.subr.mxu0 0.0
      %2057 = vmatpush1.msra.mxu0 0.0
      %2058 = vmatprep.subr.mxu0 0.0
      %2059 = vmatpush1.msra.mxu0 0.0
      %2060 = vmatprep.subr.mxu0 0.0
      %2061 = vmatpush1.msra.mxu0 0.0
      %2062 = vmatprep.subr.mxu0 0.0
      %2063 = vmatpush1.msra.mxu0 0.0
      %2064 = vmatprep.subr.mxu0 0.0
      %2065 = vmatpush1.msra.mxu0 0.0
      %2066 = vmatprep.subr.mxu0 0.0
      %2067 = vmatpush1.msra.mxu0 0.0
      %2068 = vmatprep.subr.mxu0 0.0
      %2069 = vmatpush1.msra.mxu0 0.0
      %2070 = vmatprep.subr.mxu0 0.0
      %2071 = vmatpush1.msra.mxu0 0.0
      %2072 = vmatprep.mubr.f32.mxu0 0.0
      %2073 = vmatmul.mubr.f32.gmra.mrb[0].mxu0 %v1929
      %v2074 = vpop.f32.mrb[0].mxu0
      %v2075 = vadd.f32 0.0, %v2074
      %v2076 = vpop.f32.mrb[0].mxu0
      %2077 = vdwg.mxu0
      %v2079 = vsel %vm251, %v1914, 0
      %v2081 = vsel %vm255, %v1912, 0
      %v2083 = vsel %vm255, %v1919, 0
      %v2085 = vsel %vm255, %v1913, 0
      %2087 = vmatprep.subr.mxu0 %v2083
      %2088 = vmatpush1.msra.mxu0 %v2081
      %2089 = vmatprep.subr.mxu0 0.0
      %2090 = vmatpush1.msra.mxu0 0.0
      %2091 = vmatprep.subr.mxu0 0.0
      %2092 = vmatpush1.msra.mxu0 0.0
      %2093 = vmatprep.subr.mxu0 0.0
      %2094 = vmatpush1.msra.mxu0 0.0
      %2095 = vmatprep.subr.mxu0 0.0
      %2096 = vmatpush1.msra.mxu0 0.0
      %2097 = vmatprep.subr.mxu0 0.0
      %2098 = vmatpush1.msra.mxu0 0.0
      %2099 = vmatprep.subr.mxu0 0.0
      %2100 = vmatpush1.msra.mxu0 0.0
      %2101 = vmatprep.subr.mxu0 0.0
      %2102 = vmatpush1.msra.mxu0 0.0
      %2103 = vmatprep.subr.mxu0 0.0
      %2104 = vmatpush1.msra.mxu0 0.0
      %2105 = vmatprep.subr.mxu0 0.0
      %2106 = vmatpush1.msra.mxu0 0.0
      %2107 = vmatprep.subr.mxu0 0.0
      %2108 = vmatpush1.msra.mxu0 0.0
      %2109 = vmatprep.subr.mxu0 0.0
      %2110 = vmatpush1.msra.mxu0 0.0
      %2111 = vmatprep.subr.mxu0 0.0
      %2112 = vmatpush1.msra.mxu0 0.0
      %2113 = vmatprep.subr.mxu0 0.0
      %2114 = vmatpush1.msra.mxu0 0.0
      %2115 = vmatprep.subr.mxu0 0.0
      %2116 = vmatpush1.msra.mxu0 0.0
      %2117 = vmatprep.subr.mxu0 0.0
      %2118 = vmatpush1.msra.mxu0 0.0
      %2119 = vmatprep.subr.mxu0 0.0
      %2120 = vmatpush1.msra.mxu0 0.0
      %2121 = vmatprep.subr.mxu0 0.0
      %2122 = vmatpush1.msra.mxu0 0.0
      %2123 = vmatprep.subr.mxu0 0.0
      %2124 = vmatpush1.msra.mxu0 0.0
      %2125 = vmatprep.subr.mxu0 0.0
      %2126 = vmatpush1.msra.mxu0 0.0
      %2127 = vmatprep.subr.mxu0 0.0
      %2128 = vmatpush1.msra.mxu0 0.0
      %2129 = vmatprep.subr.mxu0 0.0
      %2130 = vmatpush1.msra.mxu0 0.0
      %2131 = vmatprep.subr.mxu0 0.0
      %2132 = vmatpush1.msra.mxu0 0.0
      %2133 = vmatprep.subr.mxu0 0.0
      %2134 = vmatpush1.msra.mxu0 0.0
      %2135 = vmatprep.subr.mxu0 0.0
      %2136 = vmatpush1.msra.mxu0 0.0
      %2137 = vmatprep.subr.mxu0 0.0
      %2138 = vmatpush1.msra.mxu0 0.0
      %2139 = vmatprep.subr.mxu0 0.0
      %2140 = vmatpush1.msra.mxu0 0.0
      %2141 = vmatprep.subr.mxu0 0.0
      %2142 = vmatpush1.msra.mxu0 0.0
      %2143 = vmatprep.subr.mxu0 0.0
      %2144 = vmatpush1.msra.mxu0 0.0
      %2145 = vmatprep.subr.mxu0 0.0
      %2146 = vmatpush1.msra.mxu0 0.0
      %2147 = vmatprep.subr.mxu0 0.0
      %2148 = vmatpush1.msra.mxu0 0.0
      %2149 = vmatprep.subr.mxu0 0.0
      %2150 = vmatpush1.msra.mxu0 0.0
      %2151 = vmatprep.mubr.f32.mxu0 0.0
      %2152 = vmatmul.mubr.f32.gmra.mrb[0].mxu0 %v2079
      %v2153 = vpop.f32.mrb[0].mxu0
      %v2154 = vadd.f32 %v2004, %v2153
      %v2155 = vpop.f32.mrb[0].mxu0
      %v2156 = vadd.f32 %v2006, %v2155
      %2157 = vdwg.mxu0
      %2158 = vmatprep.subr.mxu0 0.0
      %2159 = vmatpush1.msra.mxu0 %v2085
      %2160 = vmatprep.subr.mxu0 0.0
      %2161 = vmatpush1.msra.mxu0 0.0
      %2162 = vmatprep.subr.mxu0 0.0
      %2163 = vmatpush1.msra.mxu0 0.0
      %2164 = vmatprep.subr.mxu0 0.0
      %2165 = vmatpush1.msra.mxu0 0.0
      %2166 = vmatprep.subr.mxu0 0.0
      %2167 = vmatpush1.msra.mxu0 0.0
      %2168 = vmatprep.subr.mxu0 0.0
      %2169 = vmatpush1.msra.mxu0 0.0
      %2170 = vmatprep.subr.mxu0 0.0
      %2171 = vmatpush1.msra.mxu0 0.0
      %2172 = vmatprep.subr.mxu0 0.0
      %2173 = vmatpush1.msra.mxu0 0.0
      %2174 = vmatprep.subr.mxu0 0.0
      %2175 = vmatpush1.msra.mxu0 0.0
      %2176 = vmatprep.subr.mxu0 0.0
      %2177 = vmatpush1.msra.mxu0 0.0
      %2178 = vmatprep.subr.mxu0 0.0
      %2179 = vmatpush1.msra.mxu0 0.0
      %2180 = vmatprep.subr.mxu0 0.0
      %2181 = vmatpush1.msra.mxu0 0.0
      %2182 = vmatprep.subr.mxu0 0.0
      %2183 = vmatpush1.msra.mxu0 0.0
      %2184 = vmatprep.subr.mxu0 0.0
      %2185 = vmatpush1.msra.mxu0 0.0
      %2186 = vmatprep.subr.mxu0 0.0
      %2187 = vmatpush1.msra.mxu0 0.0
      %2188 = vmatprep.subr.mxu0 0.0
      %2189 = vmatpush1.msra.mxu0 0.0
      %2190 = vmatprep.subr.mxu0 0.0
      %2191 = vmatpush1.msra.mxu0 0.0
      %2192 = vmatprep.subr.mxu0 0.0
      %2193 = vmatpush1.msra.mxu0 0.0
      %2194 = vmatprep.subr.mxu0 0.0
      %2195 = vmatpush1.msra.mxu0 0.0
      %2196 = vmatprep.subr.mxu0 0.0
      %2197 = vmatpush1.msra.mxu0 0.0
      %2198 = vmatprep.subr.mxu0 0.0
      %2199 = vmatpush1.msra.mxu0 0.0
      %2200 = vmatprep.subr.mxu0 0.0
      %2201 = vmatpush1.msra.mxu0 0.0
      %2202 = vmatprep.subr.mxu0 0.0
      %2203 = vmatpush1.msra.mxu0 0.0
      %2204 = vmatprep.subr.mxu0 0.0
      %2205 = vmatpush1.msra.mxu0 0.0
      %2206 = vmatprep.subr.mxu0 0.0
      %2207 = vmatpush1.msra.mxu0 0.0
      %2208 = vmatprep.subr.mxu0 0.0
      %2209 = vmatpush1.msra.mxu0 0.0
      %2210 = vmatprep.subr.mxu0 0.0
      %2211 = vmatpush1.msra.mxu0 0.0
      %2212 = vmatprep.subr.mxu0 0.0
      %2213 = vmatpush1.msra.mxu0 0.0
      %2214 = vmatprep.subr.mxu0 0.0
      %2215 = vmatpush1.msra.mxu0 0.0
      %2216 = vmatprep.subr.mxu0 0.0
      %2217 = vmatpush1.msra.mxu0 0.0
      %2218 = vmatprep.subr.mxu0 0.0
      %2219 = vmatpush1.msra.mxu0 0.0
      %2220 = vmatprep.subr.mxu0 0.0
      %2221 = vmatpush1.msra.mxu0 0.0
      %2222 = vmatprep.mubr.f32.mxu0 0.0
      %2223 = vmatmul.mubr.f32.gmra.mrb[0].mxu0 %v2079
      %v2224 = vpop.f32.mrb[0].mxu0
      %v2225 = vadd.f32 %v2075, %v2224
      %v2226 = vpop.f32.mrb[0].mxu0
      %2227 = vdwg.mxu0
      %v2228 = vld [vmem:[#allocation3] sm:$0xff]
      %v2229 = vld [vmem:[#allocation3 + $0x8] sm:$0xf]
      %s2230 = scalar_lea.vmem %s2, 8
      %v2231 = vld [vmem:[%s2230] sm:$0xf]
      %v2234 = vcombine.high %v2228, %v2228
      %2235 = vrot.lane.b32.xlu0 %v2228, 126
      %v2236 = vpop.permute.xlu0 %2235
      %2237 = vrot.lane.b32.xlu0 %v2234, 126
      %v2238 = vpop.permute.xlu0 %2237
      %2239 = vrot.lane.b32.xlu0 %v2229, 126
      %v2240 = vpop.permute.xlu0 %2239
      %v2241 = vsel %vm566, %v2236, %v2238
      %v2242 = vsel %vm566, %v2238, %v2240
      %v2244 = vsel %vm251, %v2231, 0
      %v2246 = vsel %vm255, %v2241, 0
      %v2248 = vsel %vm255, %v2242, 0
      %v2250 = vsel %vm255, %v2240, 0
      %2252 = vmatprep.subr.mxu0 %v2248
      %2253 = vmatpush1.msra.mxu0 %v2246
      %2254 = vmatprep.subr.mxu0 0.0
      %2255 = vmatpush1.msra.mxu0 0.0
      %2256 = vmatprep.subr.mxu0 0.0
      %2257 = vmatpush1.msra.mxu0 0.0
      %2258 = vmatprep.subr.mxu0 0.0
      %2259 = vmatpush1.msra.mxu0 0.0
      %2260 = vmatprep.subr.mxu0 0.0
      %2261 = vmatpush1.msra.mxu0 0.0
      %2262 = vmatprep.subr.mxu0 0.0
      %2263 = vmatpush1.msra.mxu0 0.0
      %2264 = vmatprep.subr.mxu0 0.0
      %2265 = vmatpush1.msra.mxu0 0.0
      %2266 = vmatprep.subr.mxu0 0.0
      %2267 = vmatpush1.msra.mxu0 0.0
      %2268 = vmatprep.subr.mxu0 0.0
      %2269 = vmatpush1.msra.mxu0 0.0
      %2270 = vmatprep.subr.mxu0 0.0
      %2271 = vmatpush1.msra.mxu0 0.0
      %2272 = vmatprep.subr.mxu0 0.0
      %2273 = vmatpush1.msra.mxu0 0.0
      %2274 = vmatprep.subr.mxu0 0.0
      %2275 = vmatpush1.msra.mxu0 0.0
      %2276 = vmatprep.subr.mxu0 0.0
      %2277 = vmatpush1.msra.mxu0 0.0
      %2278 = vmatprep.subr.mxu0 0.0
      %2279 = vmatpush1.msra.mxu0 0.0
      %2280 = vmatprep.subr.mxu0 0.0
      %2281 = vmatpush1.msra.mxu0 0.0
      %2282 = vmatprep.subr.mxu0 0.0
      %2283 = vmatpush1.msra.mxu0 0.0
      %2284 = vmatprep.subr.mxu0 0.0
      %2285 = vmatpush1.msra.mxu0 0.0
      %2286 = vmatprep.subr.mxu0 0.0
      %2287 = vmatpush1.msra.mxu0 0.0
      %2288 = vmatprep.subr.mxu0 0.0
      %2289 = vmatpush1.msra.mxu0 0.0
      %2290 = vmatprep.subr.mxu0 0.0
      %2291 = vmatpush1.msra.mxu0 0.0
      %2292 = vmatprep.subr.mxu0 0.0
      %2293 = vmatpush1.msra.mxu0 0.0
      %2294 = vmatprep.subr.mxu0 0.0
      %2295 = vmatpush1.msra.mxu0 0.0
      %2296 = vmatprep.subr.mxu0 0.0
      %2297 = vmatpush1.msra.mxu0 0.0
      %2298 = vmatprep.subr.mxu0 0.0
      %2299 = vmatpush1.msra.mxu0 0.0
      %2300 = vmatprep.subr.mxu0 0.0
      %2301 = vmatpush1.msra.mxu0 0.0
      %2302 = vmatprep.subr.mxu0 0.0
      %2303 = vmatpush1.msra.mxu0 0.0
      %2304 = vmatprep.subr.mxu0 0.0
      %2305 = vmatpush1.msra.mxu0 0.0
      %2306 = vmatprep.subr.mxu0 0.0
      %2307 = vmatpush1.msra.mxu0 0.0
      %2308 = vmatprep.subr.mxu0 0.0
      %2309 = vmatpush1.msra.mxu0 0.0
      %2310 = vmatprep.subr.mxu0 0.0
      %2311 = vmatpush1.msra.mxu0 0.0
      %2312 = vmatprep.subr.mxu0 0.0
      %2313 = vmatpush1.msra.mxu0 0.0
      %2314 = vmatprep.subr.mxu0 0.0
      %2315 = vmatpush1.msra.mxu0 0.0
      %2316 = vmatprep.mubr.f32.mxu0 0.0
      %2317 = vmatmul.mubr.f32.gmra.mrb[0].mxu0 %v2244
      %v2318 = vpop.f32.mrb[0].mxu0
      %v2319 = vadd.f32 0.0, %v2318
      %v2320 = vpop.f32.mrb[0].mxu0
      %v2321 = vadd.f32 0.0, %v2320
      %2322 = vdwg.mxu0
      %2323 = vmatprep.subr.mxu0 0.0
      %2324 = vmatpush1.msra.mxu0 %v2250
      %2325 = vmatprep.subr.mxu0 0.0
      %2326 = vmatpush1.msra.mxu0 0.0
      %2327 = vmatprep.subr.mxu0 0.0
      %2328 = vmatpush1.msra.mxu0 0.0
      %2329 = vmatprep.subr.mxu0 0.0
      %2330 = vmatpush1.msra.mxu0 0.0
      %2331 = vmatprep.subr.mxu0 0.0
      %2332 = vmatpush1.msra.mxu0 0.0
      %2333 = vmatprep.subr.mxu0 0.0
      %2334 = vmatpush1.msra.mxu0 0.0
      %2335 = vmatprep.subr.mxu0 0.0
      %2336 = vmatpush1.msra.mxu0 0.0
      %2337 = vmatprep.subr.mxu0 0.0
      %2338 = vmatpush1.msra.mxu0 0.0
      %2339 = vmatprep.subr.mxu0 0.0
      %2340 = vmatpush1.msra.mxu0 0.0
      %2341 = vmatprep.subr.mxu0 0.0
      %2342 = vmatpush1.msra.mxu0 0.0
      %2343 = vmatprep.subr.mxu0 0.0
      %2344 = vmatpush1.msra.mxu0 0.0
      %2345 = vmatprep.subr.mxu0 0.0
      %2346 = vmatpush1.msra.mxu0 0.0
      %2347 = vmatprep.subr.mxu0 0.0
      %2348 = vmatpush1.msra.mxu0 0.0
      %2349 = vmatprep.subr.mxu0 0.0
      %2350 = vmatpush1.msra.mxu0 0.0
      %2351 = vmatprep.subr.mxu0 0.0
      %2352 = vmatpush1.msra.mxu0 0.0
      %2353 = vmatprep.subr.mxu0 0.0
      %2354 = vmatpush1.msra.mxu0 0.0
      %2355 = vmatprep.subr.mxu0 0.0
      %2356 = vmatpush1.msra.mxu0 0.0
      %2357 = vmatprep.subr.mxu0 0.0
      %2358 = vmatpush1.msra.mxu0 0.0
      %2359 = vmatprep.subr.mxu0 0.0
      %2360 = vmatpush1.msra.mxu0 0.0
      %2361 = vmatprep.subr.mxu0 0.0
      %2362 = vmatpush1.msra.mxu0 0.0
      %2363 = vmatprep.subr.mxu0 0.0
      %2364 = vmatpush1.msra.mxu0 0.0
      %2365 = vmatprep.subr.mxu0 0.0
      %2366 = vmatpush1.msra.mxu0 0.0
      %2367 = vmatprep.subr.mxu0 0.0
      %2368 = vmatpush1.msra.mxu0 0.0
      %2369 = vmatprep.subr.mxu0 0.0
      %2370 = vmatpush1.msra.mxu0 0.0
      %2371 = vmatprep.subr.mxu0 0.0
      %2372 = vmatpush1.msra.mxu0 0.0
      %2373 = vmatprep.subr.mxu0 0.0
      %2374 = vmatpush1.msra.mxu0 0.0
      %2375 = vmatprep.subr.mxu0 0.0
      %2376 = vmatpush1.msra.mxu0 0.0
      %2377 = vmatprep.subr.mxu0 0.0
      %2378 = vmatpush1.msra.mxu0 0.0
      %2379 = vmatprep.subr.mxu0 0.0
      %2380 = vmatpush1.msra.mxu0 0.0
      %2381 = vmatprep.subr.mxu0 0.0
      %2382 = vmatpush1.msra.mxu0 0.0
      %2383 = vmatprep.subr.mxu0 0.0
      %2384 = vmatpush1.msra.mxu0 0.0
      %2385 = vmatprep.subr.mxu0 0.0
      %2386 = vmatpush1.msra.mxu0 0.0
      %2387 = vmatprep.mubr.f32.mxu0 0.0
      %2388 = vmatmul.mubr.f32.gmra.mrb[0].mxu0 %v2244
      %v2389 = vpop.f32.mrb[0].mxu0
      %v2390 = vadd.f32 0.0, %v2389
      %v2391 = vpop.f32.mrb[0].mxu0
      %2392 = vdwg.mxu0
      %v2393 = vadd.f32 %v2154, %v2319
      %v2394 = vadd.f32 %v2156, %v2321
      %v2395 = vadd.f32 %v2225, %v2390
      %v2396 = vld [vmem:[#allocation3] sm:$0xff]
      %v2397 = vld [vmem:[#allocation3 + $0x8] sm:$0xf]
      %s2398 = scalar_lea.vmem %s2, 12
      %v2399 = vld [vmem:[%s2398] sm:$0xf]
      %v2402 = vcombine.high %v2396, %v2396
      %2403 = vrot.lane.b32.xlu0 %v2396, 110
      %v2404 = vpop.permute.xlu0 %2403
      %2405 = vrot.lane.b32.xlu0 %v2402, 110
      %v2406 = vpop.permute.xlu0 %2405
      %2407 = vrot.lane.b32.xlu0 %v2397, 110
      %v2408 = vpop.permute.xlu0 %2407
      %v2409 = vsel %vm735, %v2404, %v2406
      %v2410 = vsel %vm735, %v2406, %v2408
      %v2412 = vsel %vm251, %v2399, 0
      %v2414 = vsel %vm255, %v2409, 0
      %v2416 = vsel %vm255, %v2410, 0
      %v2418 = vsel %vm255, %v2408, 0
      %2420 = vmatprep.subr.mxu0 %v2416
      %2421 = vmatpush1.msra.mxu0 %v2414
      %2422 = vmatprep.subr.mxu0 0.0
      %2423 = vmatpush1.msra.mxu0 0.0
      %2424 = vmatprep.subr.mxu0 0.0
      %2425 = vmatpush1.msra.mxu0 0.0
      %2426 = vmatprep.subr.mxu0 0.0
      %2427 = vmatpush1.msra.mxu0 0.0
      %2428 = vmatprep.subr.mxu0 0.0
      %2429 = vmatpush1.msra.mxu0 0.0
      %2430 = vmatprep.subr.mxu0 0.0
      %2431 = vmatpush1.msra.mxu0 0.0
      %2432 = vmatprep.subr.mxu0 0.0
      %2433 = vmatpush1.msra.mxu0 0.0
      %2434 = vmatprep.subr.mxu0 0.0
      %2435 = vmatpush1.msra.mxu0 0.0
      %2436 = vmatprep.subr.mxu0 0.0
      %2437 = vmatpush1.msra.mxu0 0.0
      %2438 = vmatprep.subr.mxu0 0.0
      %2439 = vmatpush1.msra.mxu0 0.0
      %2440 = vmatprep.subr.mxu0 0.0
      %2441 = vmatpush1.msra.mxu0 0.0
      %2442 = vmatprep.subr.mxu0 0.0
      %2443 = vmatpush1.msra.mxu0 0.0
      %2444 = vmatprep.subr.mxu0 0.0
      %2445 = vmatpush1.msra.mxu0 0.0
      %2446 = vmatprep.subr.mxu0 0.0
      %2447 = vmatpush1.msra.mxu0 0.0
      %2448 = vmatprep.subr.mxu0 0.0
      %2449 = vmatpush1.msra.mxu0 0.0
      %2450 = vmatprep.subr.mxu0 0.0
      %2451 = vmatpush1.msra.mxu0 0.0
      %2452 = vmatprep.subr.mxu0 0.0
      %2453 = vmatpush1.msra.mxu0 0.0
      %2454 = vmatprep.subr.mxu0 0.0
      %2455 = vmatpush1.msra.mxu0 0.0
      %2456 = vmatprep.subr.mxu0 0.0
      %2457 = vmatpush1.msra.mxu0 0.0
      %2458 = vmatprep.subr.mxu0 0.0
      %2459 = vmatpush1.msra.mxu0 0.0
      %2460 = vmatprep.subr.mxu0 0.0
      %2461 = vmatpush1.msra.mxu0 0.0
      %2462 = vmatprep.subr.mxu0 0.0
      %2463 = vmatpush1.msra.mxu0 0.0
      %2464 = vmatprep.subr.mxu0 0.0
      %2465 = vmatpush1.msra.mxu0 0.0
      %2466 = vmatprep.subr.mxu0 0.0
      %2467 = vmatpush1.msra.mxu0 0.0
      %2468 = vmatprep.subr.mxu0 0.0
      %2469 = vmatpush1.msra.mxu0 0.0
      %2470 = vmatprep.subr.mxu0 0.0
      %2471 = vmatpush1.msra.mxu0 0.0
      %2472 = vmatprep.subr.mxu0 0.0
      %2473 = vmatpush1.msra.mxu0 0.0
      %2474 = vmatprep.subr.mxu0 0.0
      %2475 = vmatpush1.msra.mxu0 0.0
      %2476 = vmatprep.subr.mxu0 0.0
      %2477 = vmatpush1.msra.mxu0 0.0
      %2478 = vmatprep.subr.mxu0 0.0
      %2479 = vmatpush1.msra.mxu0 0.0
      %2480 = vmatprep.subr.mxu0 0.0
      %2481 = vmatpush1.msra.mxu0 0.0
      %2482 = vmatprep.subr.mxu0 0.0
      %2483 = vmatpush1.msra.mxu0 0.0
      %2484 = vmatprep.mubr.f32.mxu0 0.0
      %2485 = vmatmul.mubr.f32.gmra.mrb[0].mxu0 %v2412
      %v2486 = vpop.f32.mrb[0].mxu0
      %v2487 = vadd.f32 0.0, %v2486
      %v2488 = vpop.f32.mrb[0].mxu0
      %v2489 = vadd.f32 0.0, %v2488
      %2490 = vdwg.mxu0
      %2491 = vmatprep.subr.mxu0 0.0
      %2492 = vmatpush1.msra.mxu0 %v2418
      %2493 = vmatprep.subr.mxu0 0.0
      %2494 = vmatpush1.msra.mxu0 0.0
      %2495 = vmatprep.subr.mxu0 0.0
      %2496 = vmatpush1.msra.mxu0 0.0
      %2497 = vmatprep.subr.mxu0 0.0
      %2498 = vmatpush1.msra.mxu0 0.0
      %2499 = vmatprep.subr.mxu0 0.0
      %2500 = vmatpush1.msra.mxu0 0.0
      %2501 = vmatprep.subr.mxu0 0.0
      %2502 = vmatpush1.msra.mxu0 0.0
      %2503 = vmatprep.subr.mxu0 0.0
      %2504 = vmatpush1.msra.mxu0 0.0
      %2505 = vmatprep.subr.mxu0 0.0
      %2506 = vmatpush1.msra.mxu0 0.0
      %2507 = vmatprep.subr.mxu0 0.0
      %2508 = vmatpush1.msra.mxu0 0.0
      %2509 = vmatprep.subr.mxu0 0.0
      %2510 = vmatpush1.msra.mxu0 0.0
      %2511 = vmatprep.subr.mxu0 0.0
      %2512 = vmatpush1.msra.mxu0 0.0
      %2513 = vmatprep.subr.mxu0 0.0
      %2514 = vmatpush1.msra.mxu0 0.0
      %2515 = vmatprep.subr.mxu0 0.0
      %2516 = vmatpush1.msra.mxu0 0.0
      %2517 = vmatprep.subr.mxu0 0.0
      %2518 = vmatpush1.msra.mxu0 0.0
      %2519 = vmatprep.subr.mxu0 0.0
      %2520 = vmatpush1.msra.mxu0 0.0
      %2521 = vmatprep.subr.mxu0 0.0
      %2522 = vmatpush1.msra.mxu0 0.0
      %2523 = vmatprep.subr.mxu0 0.0
      %2524 = vmatpush1.msra.mxu0 0.0
      %2525 = vmatprep.subr.mxu0 0.0
      %2526 = vmatpush1.msra.mxu0 0.0
      %2527 = vmatprep.subr.mxu0 0.0
      %2528 = vmatpush1.msra.mxu0 0.0
      %2529 = vmatprep.subr.mxu0 0.0
      %2530 = vmatpush1.msra.mxu0 0.0
      %2531 = vmatprep.subr.mxu0 0.0
      %2532 = vmatpush1.msra.mxu0 0.0
      %2533 = vmatprep.subr.mxu0 0.0
      %2534 = vmatpush1.msra.mxu0 0.0
      %2535 = vmatprep.subr.mxu0 0.0
      %2536 = vmatpush1.msra.mxu0 0.0
      %2537 = vmatprep.subr.mxu0 0.0
      %2538 = vmatpush1.msra.mxu0 0.0
      %2539 = vmatprep.subr.mxu0 0.0
      %2540 = vmatpush1.msra.mxu0 0.0
      %2541 = vmatprep.subr.mxu0 0.0
      %2542 = vmatpush1.msra.mxu0 0.0
      %2543 = vmatprep.subr.mxu0 0.0
      %2544 = vmatpush1.msra.mxu0 0.0
      %2545 = vmatprep.subr.mxu0 0.0
      %2546 = vmatpush1.msra.mxu0 0.0
      %2547 = vmatprep.subr.mxu0 0.0
      %2548 = vmatpush1.msra.mxu0 0.0
      %2549 = vmatprep.subr.mxu0 0.0
      %2550 = vmatpush1.msra.mxu0 0.0
      %2551 = vmatprep.subr.mxu0 0.0
      %2552 = vmatpush1.msra.mxu0 0.0
      %2553 = vmatprep.subr.mxu0 0.0
      %2554 = vmatpush1.msra.mxu0 0.0
      %2555 = vmatprep.mubr.f32.mxu0 0.0
      %2556 = vmatmul.mubr.f32.gmra.mrb[0].mxu0 %v2412
      %v2557 = vpop.f32.mrb[0].mxu0
      %v2558 = vadd.f32 0.0, %v2557
      %v2559 = vpop.f32.mrb[0].mxu0
      %2560 = vdwg.mxu0
      %v2561 = vadd.f32 %v2393, %v2487
      %v2562 = vadd.f32 %v2394, %v2489
      %v2563 = vadd.f32 %v2395, %v2558
      %v2564 = vld [vmem:[#allocation3] sm:$0xff]
      %v2565 = vld [vmem:[#allocation3 + $0x8] sm:$0xf]
      %s2566 = scalar_lea.vmem %s2, 16
      %v2567 = vld [vmem:[%s2566] sm:$0xf]
      %v2570 = vcombine.high %v2564, %v2564
      %2571 = vrot.lane.b32.xlu0 %v2564, 109
      %v2572 = vpop.permute.xlu0 %2571
      %2573 = vrot.lane.b32.xlu0 %v2570, 109
      %v2574 = vpop.permute.xlu0 %2573
      %2575 = vrot.lane.b32.xlu0 %v2565, 109
      %v2576 = vpop.permute.xlu0 %2575
      %v2577 = vsel %vm904, %v2572, %v2574
      %v2578 = vsel %vm904, %v2574, %v2576
      %v2580 = vsel %vm251, %v2567, 0
      %v2582 = vsel %vm255, %v2577, 0
      %v2584 = vsel %vm255, %v2578, 0
      %v2586 = vsel %vm255, %v2576, 0
      %2588 = vmatprep.subr.mxu0 %v2584
      %2589 = vmatpush1.msra.mxu0 %v2582
      %2590 = vmatprep.subr.mxu0 0.0
      %2591 = vmatpush1.msra.mxu0 0.0
      %2592 = vmatprep.subr.mxu0 0.0
      %2593 = vmatpush1.msra.mxu0 0.0
      %2594 = vmatprep.subr.mxu0 0.0
      %2595 = vmatpush1.msra.mxu0 0.0
      %2596 = vmatprep.subr.mxu0 0.0
      %2597 = vmatpush1.msra.mxu0 0.0
      %2598 = vmatprep.subr.mxu0 0.0
      %2599 = vmatpush1.msra.mxu0 0.0
      %2600 = vmatprep.subr.mxu0 0.0
      %2601 = vmatpush1.msra.mxu0 0.0
      %2602 = vmatprep.subr.mxu0 0.0
      %2603 = vmatpush1.msra.mxu0 0.0
      %2604 = vmatprep.subr.mxu0 0.0
      %2605 = vmatpush1.msra.mxu0 0.0
      %2606 = vmatprep.subr.mxu0 0.0
      %2607 = vmatpush1.msra.mxu0 0.0
      %2608 = vmatprep.subr.mxu0 0.0
      %2609 = vmatpush1.msra.mxu0 0.0
      %2610 = vmatprep.subr.mxu0 0.0
      %2611 = vmatpush1.msra.mxu0 0.0
      %2612 = vmatprep.subr.mxu0 0.0
      %2613 = vmatpush1.msra.mxu0 0.0
      %2614 = vmatprep.subr.mxu0 0.0
      %2615 = vmatpush1.msra.mxu0 0.0
      %2616 = vmatprep.subr.mxu0 0.0
      %2617 = vmatpush1.msra.mxu0 0.0
      %2618 = vmatprep.subr.mxu0 0.0
      %2619 = vmatpush1.msra.mxu0 0.0
      %2620 = vmatprep.subr.mxu0 0.0
      %2621 = vmatpush1.msra.mxu0 0.0
      %2622 = vmatprep.subr.mxu0 0.0
      %2623 = vmatpush1.msra.mxu0 0.0
      %2624 = vmatprep.subr.mxu0 0.0
      %2625 = vmatpush1.msra.mxu0 0.0
      %2626 = vmatprep.subr.mxu0 0.0
      %2627 = vmatpush1.msra.mxu0 0.0
      %2628 = vmatprep.subr.mxu0 0.0
      %2629 = vmatpush1.msra.mxu0 0.0
      %2630 = vmatprep.subr.mxu0 0.0
      %2631 = vmatpush1.msra.mxu0 0.0
      %2632 = vmatprep.subr.mxu0 0.0
      %2633 = vmatpush1.msra.mxu0 0.0
      %2634 = vmatprep.subr.mxu0 0.0
      %2635 = vmatpush1.msra.mxu0 0.0
      %2636 = vmatprep.subr.mxu0 0.0
      %2637 = vmatpush1.msra.mxu0 0.0
      %2638 = vmatprep.subr.mxu0 0.0
      %2639 = vmatpush1.msra.mxu0 0.0
      %2640 = vmatprep.subr.mxu0 0.0
      %2641 = vmatpush1.msra.mxu0 0.0
      %2642 = vmatprep.subr.mxu0 0.0
      %2643 = vmatpush1.msra.mxu0 0.0
      %2644 = vmatprep.subr.mxu0 0.0
      %2645 = vmatpush1.msra.mxu0 0.0
      %2646 = vmatprep.subr.mxu0 0.0
      %2647 = vmatpush1.msra.mxu0 0.0
      %2648 = vmatprep.subr.mxu0 0.0
      %2649 = vmatpush1.msra.mxu0 0.0
      %2650 = vmatprep.subr.mxu0 0.0
      %2651 = vmatpush1.msra.mxu0 0.0
      %2652 = vmatprep.mubr.f32.mxu0 0.0
      %2653 = vmatmul.mubr.f32.gmra.mrb[0].mxu0 %v2580
      %v2654 = vpop.f32.mrb[0].mxu0
      %v2655 = vadd.f32 0.0, %v2654
      %v2656 = vpop.f32.mrb[0].mxu0
      %v2657 = vadd.f32 0.0, %v2656
      %2658 = vdwg.mxu0
      %2659 = vmatprep.subr.mxu0 0.0
      %2660 = vmatpush1.msra.mxu0 %v2586
      %2661 = vmatprep.subr.mxu0 0.0
      %2662 = vmatpush1.msra.mxu0 0.0
      %2663 = vmatprep.subr.mxu0 0.0
      %2664 = vmatpush1.msra.mxu0 0.0
      %2665 = vmatprep.subr.mxu0 0.0
      %2666 = vmatpush1.msra.mxu0 0.0
      %2667 = vmatprep.subr.mxu0 0.0
      %2668 = vmatpush1.msra.mxu0 0.0
      %2669 = vmatprep.subr.mxu0 0.0
      %2670 = vmatpush1.msra.mxu0 0.0
      %2671 = vmatprep.subr.mxu0 0.0
      %2672 = vmatpush1.msra.mxu0 0.0
      %2673 = vmatprep.subr.mxu0 0.0
      %2674 = vmatpush1.msra.mxu0 0.0
      %2675 = vmatprep.subr.mxu0 0.0
      %2676 = vmatpush1.msra.mxu0 0.0
      %2677 = vmatprep.subr.mxu0 0.0
      %2678 = vmatpush1.msra.mxu0 0.0
      %2679 = vmatprep.subr.mxu0 0.0
      %2680 = vmatpush1.msra.mxu0 0.0
      %2681 = vmatprep.subr.mxu0 0.0
      %2682 = vmatpush1.msra.mxu0 0.0
      %2683 = vmatprep.subr.mxu0 0.0
      %2684 = vmatpush1.msra.mxu0 0.0
      %2685 = vmatprep.subr.mxu0 0.0
      %2686 = vmatpush1.msra.mxu0 0.0
      %2687 = vmatprep.subr.mxu0 0.0
      %2688 = vmatpush1.msra.mxu0 0.0
      %2689 = vmatprep.subr.mxu0 0.0
      %2690 = vmatpush1.msra.mxu0 0.0
      %2691 = vmatprep.subr.mxu0 0.0
      %2692 = vmatpush1.msra.mxu0 0.0
      %2693 = vmatprep.subr.mxu0 0.0
      %2694 = vmatpush1.msra.mxu0 0.0
      %2695 = vmatprep.subr.mxu0 0.0
      %2696 = vmatpush1.msra.mxu0 0.0
      %2697 = vmatprep.subr.mxu0 0.0
      %2698 = vmatpush1.msra.mxu0 0.0
      %2699 = vmatprep.subr.mxu0 0.0
      %2700 = vmatpush1.msra.mxu0 0.0
      %2701 = vmatprep.subr.mxu0 0.0
      %2702 = vmatpush1.msra.mxu0 0.0
      %2703 = vmatprep.subr.mxu0 0.0
      %2704 = vmatpush1.msra.mxu0 0.0
      %2705 = vmatprep.subr.mxu0 0.0
      %2706 = vmatpush1.msra.mxu0 0.0
      %2707 = vmatprep.subr.mxu0 0.0
      %2708 = vmatpush1.msra.mxu0 0.0
      %2709 = vmatprep.subr.mxu0 0.0
      %2710 = vmatpush1.msra.mxu0 0.0
      %2711 = vmatprep.subr.mxu0 0.0
      %2712 = vmatpush1.msra.mxu0 0.0
      %2713 = vmatprep.subr.mxu0 0.0
      %2714 = vmatpush1.msra.mxu0 0.0
      %2715 = vmatprep.subr.mxu0 0.0
      %2716 = vmatpush1.msra.mxu0 0.0
      %2717 = vmatprep.subr.mxu0 0.0
      %2718 = vmatpush1.msra.mxu0 0.0
      %2719 = vmatprep.subr.mxu0 0.0
      %2720 = vmatpush1.msra.mxu0 0.0
      %2721 = vmatprep.subr.mxu0 0.0
      %2722 = vmatpush1.msra.mxu0 0.0
      %2723 = vmatprep.mubr.f32.mxu0 0.0
      %2724 = vmatmul.mubr.f32.gmra.mrb[0].mxu0 %v2580
      %v2725 = vpop.f32.mrb[0].mxu0
      %v2726 = vadd.f32 0.0, %v2725
      %v2727 = vpop.f32.mrb[0].mxu0
      %2728 = vdwg.mxu0
      %v2729 = vadd.f32 %v2561, %v2655
      %v2730 = vadd.f32 %v2562, %v2657
      %v2731 = vadd.f32 %v2563, %v2726
      %v2732 = vld [vmem:[#allocation3] sm:$0xff]
      %v2733 = vld [vmem:[#allocation3 + $0x8] sm:$0xf]
      %s2734 = scalar_lea.vmem %s2, 20
      %v2735 = vld [vmem:[%s2734] sm:$0xf]
      %v2738 = vcombine.high %v2732, %v2732
      %2739 = vrot.lane.b32.xlu0 %v2732, 108
      %v2740 = vpop.permute.xlu0 %2739
      %2741 = vrot.lane.b32.xlu0 %v2738, 108
      %v2742 = vpop.permute.xlu0 %2741
      %2743 = vrot.lane.b32.xlu0 %v2733, 108
      %v2744 = vpop.permute.xlu0 %2743
      %v2745 = vsel %vm1073, %v2740, %v2742
      %v2746 = vsel %vm1073, %v2742, %v2744
      %v2748 = vsel %vm251, %v2735, 0
      %v2750 = vsel %vm255, %v2745, 0
      %v2752 = vsel %vm255, %v2746, 0
      %v2754 = vsel %vm255, %v2744, 0
      %2756 = vmatprep.subr.mxu0 %v2752
      %2757 = vmatpush1.msra.mxu0 %v2750
      %2758 = vmatprep.subr.mxu0 0.0
      %2759 = vmatpush1.msra.mxu0 0.0
      %2760 = vmatprep.subr.mxu0 0.0
      %2761 = vmatpush1.msra.mxu0 0.0
      %2762 = vmatprep.subr.mxu0 0.0
      %2763 = vmatpush1.msra.mxu0 0.0
      %2764 = vmatprep.subr.mxu0 0.0
      %2765 = vmatpush1.msra.mxu0 0.0
      %2766 = vmatprep.subr.mxu0 0.0
      %2767 = vmatpush1.msra.mxu0 0.0
      %2768 = vmatprep.subr.mxu0 0.0
      %2769 = vmatpush1.msra.mxu0 0.0
      %2770 = vmatprep.subr.mxu0 0.0
      %2771 = vmatpush1.msra.mxu0 0.0
      %2772 = vmatprep.subr.mxu0 0.0
      %2773 = vmatpush1.msra.mxu0 0.0
      %2774 = vmatprep.subr.mxu0 0.0
      %2775 = vmatpush1.msra.mxu0 0.0
      %2776 = vmatprep.subr.mxu0 0.0
      %2777 = vmatpush1.msra.mxu0 0.0
      %2778 = vmatprep.subr.mxu0 0.0
      %2779 = vmatpush1.msra.mxu0 0.0
      %2780 = vmatprep.subr.mxu0 0.0
      %2781 = vmatpush1.msra.mxu0 0.0
      %2782 = vmatprep.subr.mxu0 0.0
      %2783 = vmatpush1.msra.mxu0 0.0
      %2784 = vmatprep.subr.mxu0 0.0
      %2785 = vmatpush1.msra.mxu0 0.0
      %2786 = vmatprep.subr.mxu0 0.0
      %2787 = vmatpush1.msra.mxu0 0.0
      %2788 = vmatprep.subr.mxu0 0.0
      %2789 = vmatpush1.msra.mxu0 0.0
      %2790 = vmatprep.subr.mxu0 0.0
      %2791 = vmatpush1.msra.mxu0 0.0
      %2792 = vmatprep.subr.mxu0 0.0
      %2793 = vmatpush1.msra.mxu0 0.0
      %2794 = vmatprep.subr.mxu0 0.0
      %2795 = vmatpush1.msra.mxu0 0.0
      %2796 = vmatprep.subr.mxu0 0.0
      %2797 = vmatpush1.msra.mxu0 0.0
      %2798 = vmatprep.subr.mxu0 0.0
      %2799 = vmatpush1.msra.mxu0 0.0
      %2800 = vmatprep.subr.mxu0 0.0
      %2801 = vmatpush1.msra.mxu0 0.0
      %2802 = vmatprep.subr.mxu0 0.0
      %2803 = vmatpush1.msra.mxu0 0.0
      %2804 = vmatprep.subr.mxu0 0.0
      %2805 = vmatpush1.msra.mxu0 0.0
      %2806 = vmatprep.subr.mxu0 0.0
      %2807 = vmatpush1.msra.mxu0 0.0
      %2808 = vmatprep.subr.mxu0 0.0
      %2809 = vmatpush1.msra.mxu0 0.0
      %2810 = vmatprep.subr.mxu0 0.0
      %2811 = vmatpush1.msra.mxu0 0.0
      %2812 = vmatprep.subr.mxu0 0.0
      %2813 = vmatpush1.msra.mxu0 0.0
      %2814 = vmatprep.subr.mxu0 0.0
      %2815 = vmatpush1.msra.mxu0 0.0
      %2816 = vmatprep.subr.mxu0 0.0
      %2817 = vmatpush1.msra.mxu0 0.0
      %2818 = vmatprep.subr.mxu0 0.0
      %2819 = vmatpush1.msra.mxu0 0.0
      %2820 = vmatprep.mubr.f32.mxu0 0.0
      %2821 = vmatmul.mubr.f32.gmra.mrb[0].mxu0 %v2748
      %v2822 = vpop.f32.mrb[0].mxu0
      %v2823 = vadd.f32 0.0, %v2822
      %v2824 = vpop.f32.mrb[0].mxu0
      %v2825 = vadd.f32 0.0, %v2824
      %2826 = vdwg.mxu0
      %2827 = vmatprep.subr.mxu0 0.0
      %2828 = vmatpush1.msra.mxu0 %v2754
      %2829 = vmatprep.subr.mxu0 0.0
      %2830 = vmatpush1.msra.mxu0 0.0
      %2831 = vmatprep.subr.mxu0 0.0
      %2832 = vmatpush1.msra.mxu0 0.0
      %2833 = vmatprep.subr.mxu0 0.0
      %2834 = vmatpush1.msra.mxu0 0.0
      %2835 = vmatprep.subr.mxu0 0.0
      %2836 = vmatpush1.msra.mxu0 0.0
      %2837 = vmatprep.subr.mxu0 0.0
      %2838 = vmatpush1.msra.mxu0 0.0
      %2839 = vmatprep.subr.mxu0 0.0
      %2840 = vmatpush1.msra.mxu0 0.0
      %2841 = vmatprep.subr.mxu0 0.0
      %2842 = vmatpush1.msra.mxu0 0.0
      %2843 = vmatprep.subr.mxu0 0.0
      %2844 = vmatpush1.msra.mxu0 0.0
      %2845 = vmatprep.subr.mxu0 0.0
      %2846 = vmatpush1.msra.mxu0 0.0
      %2847 = vmatprep.subr.mxu0 0.0
      %2848 = vmatpush1.msra.mxu0 0.0
      %2849 = vmatprep.subr.mxu0 0.0
      %2850 = vmatpush1.msra.mxu0 0.0
      %2851 = vmatprep.subr.mxu0 0.0
      %2852 = vmatpush1.msra.mxu0 0.0
      %2853 = vmatprep.subr.mxu0 0.0
      %2854 = vmatpush1.msra.mxu0 0.0
      %2855 = vmatprep.subr.mxu0 0.0
      %2856 = vmatpush1.msra.mxu0 0.0
      %2857 = vmatprep.subr.mxu0 0.0
      %2858 = vmatpush1.msra.mxu0 0.0
      %2859 = vmatprep.subr.mxu0 0.0
      %2860 = vmatpush1.msra.mxu0 0.0
      %2861 = vmatprep.subr.mxu0 0.0
      %2862 = vmatpush1.msra.mxu0 0.0
      %2863 = vmatprep.subr.mxu0 0.0
      %2864 = vmatpush1.msra.mxu0 0.0
      %2865 = vmatprep.subr.mxu0 0.0
      %2866 = vmatpush1.msra.mxu0 0.0
      %2867 = vmatprep.subr.mxu0 0.0
      %2868 = vmatpush1.msra.mxu0 0.0
      %2869 = vmatprep.subr.mxu0 0.0
      %2870 = vmatpush1.msra.mxu0 0.0
      %2871 = vmatprep.subr.mxu0 0.0
      %2872 = vmatpush1.msra.mxu0 0.0
      %2873 = vmatprep.subr.mxu0 0.0
      %2874 = vmatpush1.msra.mxu0 0.0
      %2875 = vmatprep.subr.mxu0 0.0
      %2876 = vmatpush1.msra.mxu0 0.0
      %2877 = vmatprep.subr.mxu0 0.0
      %2878 = vmatpush1.msra.mxu0 0.0
      %2879 = vmatprep.subr.mxu0 0.0
      %2880 = vmatpush1.msra.mxu0 0.0
      %2881 = vmatprep.subr.mxu0 0.0
      %2882 = vmatpush1.msra.mxu0 0.0
      %2883 = vmatprep.subr.mxu0 0.0
      %2884 = vmatpush1.msra.mxu0 0.0
      %2885 = vmatprep.subr.mxu0 0.0
      %2886 = vmatpush1.msra.mxu0 0.0
      %2887 = vmatprep.subr.mxu0 0.0
      %2888 = vmatpush1.msra.mxu0 0.0
      %2889 = vmatprep.subr.mxu0 0.0
      %2890 = vmatpush1.msra.mxu0 0.0
      %2891 = vmatprep.mubr.f32.mxu0 0.0
      %2892 = vmatmul.mubr.f32.gmra.mrb[0].mxu0 %v2748
      %v2893 = vpop.f32.mrb[0].mxu0
      %v2894 = vadd.f32 0.0, %v2893
      %v2895 = vpop.f32.mrb[0].mxu0
      %2896 = vdwg.mxu0
      %v2897 = vadd.f32 %v2729, %v2823
      %v2898 = vadd.f32 %v2730, %v2825
      %v2899 = vadd.f32 %v2731, %v2894
      %v2900 = vld [vmem:[#allocation3] sm:$0xff]
      %v2901 = vld [vmem:[#allocation3 + $0x8] sm:$0xf]
      %s2902 = scalar_lea.vmem %s2, 24
      %v2903 = vld [vmem:[%s2902] sm:$0xf]
      %v2906 = vcombine.high %v2900, %v2900
      %2907 = vrot.lane.b32.xlu0 %v2900, 92
      %v2908 = vpop.permute.xlu0 %2907
      %2909 = vrot.lane.b32.xlu0 %v2906, 92
      %v2910 = vpop.permute.xlu0 %2909
      %2911 = vrot.lane.b32.xlu0 %v2901, 92
      %v2912 = vpop.permute.xlu0 %2911
      %v2913 = vsel %vm1242, %v2908, %v2910
      %v2914 = vsel %vm1242, %v2910, %v2912
      %v2916 = vsel %vm251, %v2903, 0
      %v2918 = vsel %vm255, %v2913, 0
      %v2920 = vsel %vm255, %v2914, 0
      %v2922 = vsel %vm255, %v2912, 0
      %2924 = vmatprep.subr.mxu0 %v2920
      %2925 = vmatpush1.msra.mxu0 %v2918
      %2926 = vmatprep.subr.mxu0 0.0
      %2927 = vmatpush1.msra.mxu0 0.0
      %2928 = vmatprep.subr.mxu0 0.0
      %2929 = vmatpush1.msra.mxu0 0.0
      %2930 = vmatprep.subr.mxu0 0.0
      %2931 = vmatpush1.msra.mxu0 0.0
      %2932 = vmatprep.subr.mxu0 0.0
      %2933 = vmatpush1.msra.mxu0 0.0
      %2934 = vmatprep.subr.mxu0 0.0
      %2935 = vmatpush1.msra.mxu0 0.0
      %2936 = vmatprep.subr.mxu0 0.0
      %2937 = vmatpush1.msra.mxu0 0.0
      %2938 = vmatprep.subr.mxu0 0.0
      %2939 = vmatpush1.msra.mxu0 0.0
      %2940 = vmatprep.subr.mxu0 0.0
      %2941 = vmatpush1.msra.mxu0 0.0
      %2942 = vmatprep.subr.mxu0 0.0
      %2943 = vmatpush1.msra.mxu0 0.0
      %2944 = vmatprep.subr.mxu0 0.0
      %2945 = vmatpush1.msra.mxu0 0.0
      %2946 = vmatprep.subr.mxu0 0.0
      %2947 = vmatpush1.msra.mxu0 0.0
      %2948 = vmatprep.subr.mxu0 0.0
      %2949 = vmatpush1.msra.mxu0 0.0
      %2950 = vmatprep.subr.mxu0 0.0
      %2951 = vmatpush1.msra.mxu0 0.0
      %2952 = vmatprep.subr.mxu0 0.0
      %2953 = vmatpush1.msra.mxu0 0.0
      %2954 = vmatprep.subr.mxu0 0.0
      %2955 = vmatpush1.msra.mxu0 0.0
      %2956 = vmatprep.subr.mxu0 0.0
      %2957 = vmatpush1.msra.mxu0 0.0
      %2958 = vmatprep.subr.mxu0 0.0
      %2959 = vmatpush1.msra.mxu0 0.0
      %2960 = vmatprep.subr.mxu0 0.0
      %2961 = vmatpush1.msra.mxu0 0.0
      %2962 = vmatprep.subr.mxu0 0.0
      %2963 = vmatpush1.msra.mxu0 0.0
      %2964 = vmatprep.subr.mxu0 0.0
      %2965 = vmatpush1.msra.mxu0 0.0
      %2966 = vmatprep.subr.mxu0 0.0
      %2967 = vmatpush1.msra.mxu0 0.0
      %2968 = vmatprep.subr.mxu0 0.0
      %2969 = vmatpush1.msra.mxu0 0.0
      %2970 = vmatprep.subr.mxu0 0.0
      %2971 = vmatpush1.msra.mxu0 0.0
      %2972 = vmatprep.subr.mxu0 0.0
      %2973 = vmatpush1.msra.mxu0 0.0
      %2974 = vmatprep.subr.mxu0 0.0
      %2975 = vmatpush1.msra.mxu0 0.0
      %2976 = vmatprep.subr.mxu0 0.0
      %2977 = vmatpush1.msra.mxu0 0.0
      %2978 = vmatprep.subr.mxu0 0.0
      %2979 = vmatpush1.msra.mxu0 0.0
      %2980 = vmatprep.subr.mxu0 0.0
      %2981 = vmatpush1.msra.mxu0 0.0
      %2982 = vmatprep.subr.mxu0 0.0
      %2983 = vmatpush1.msra.mxu0 0.0
      %2984 = vmatprep.subr.mxu0 0.0
      %2985 = vmatpush1.msra.mxu0 0.0
      %2986 = vmatprep.subr.mxu0 0.0
      %2987 = vmatpush1.msra.mxu0 0.0
      %2988 = vmatprep.mubr.f32.mxu0 0.0
      %2989 = vmatmul.mubr.f32.gmra.mrb[0].mxu0 %v2916
      %v2990 = vpop.f32.mrb[0].mxu0
      %v2991 = vadd.f32 0.0, %v2990
      %v2992 = vpop.f32.mrb[0].mxu0
      %v2993 = vadd.f32 0.0, %v2992
      %2994 = vdwg.mxu0
      %2995 = vmatprep.subr.mxu0 0.0
      %2996 = vmatpush1.msra.mxu0 %v2922
      %2997 = vmatprep.subr.mxu0 0.0
      %2998 = vmatpush1.msra.mxu0 0.0
      %2999 = vmatprep.subr.mxu0 0.0
      %3000 = vmatpush1.msra.mxu0 0.0
      %3001 = vmatprep.subr.mxu0 0.0
      %3002 = vmatpush1.msra.mxu0 0.0
      %3003 = vmatprep.subr.mxu0 0.0
      %3004 = vmatpush1.msra.mxu0 0.0
      %3005 = vmatprep.subr.mxu0 0.0
      %3006 = vmatpush1.msra.mxu0 0.0
      %3007 = vmatprep.subr.mxu0 0.0
      %3008 = vmatpush1.msra.mxu0 0.0
      %3009 = vmatprep.subr.mxu0 0.0
      %3010 = vmatpush1.msra.mxu0 0.0
      %3011 = vmatprep.subr.mxu0 0.0
      %3012 = vmatpush1.msra.mxu0 0.0
      %3013 = vmatprep.subr.mxu0 0.0
      %3014 = vmatpush1.msra.mxu0 0.0
      %3015 = vmatprep.subr.mxu0 0.0
      %3016 = vmatpush1.msra.mxu0 0.0
      %3017 = vmatprep.subr.mxu0 0.0
      %3018 = vmatpush1.msra.mxu0 0.0
      %3019 = vmatprep.subr.mxu0 0.0
      %3020 = vmatpush1.msra.mxu0 0.0
      %3021 = vmatprep.subr.mxu0 0.0
      %3022 = vmatpush1.msra.mxu0 0.0
      %3023 = vmatprep.subr.mxu0 0.0
      %3024 = vmatpush1.msra.mxu0 0.0
      %3025 = vmatprep.subr.mxu0 0.0
      %3026 = vmatpush1.msra.mxu0 0.0
      %3027 = vmatprep.subr.mxu0 0.0
      %3028 = vmatpush1.msra.mxu0 0.0
      %3029 = vmatprep.subr.mxu0 0.0
      %3030 = vmatpush1.msra.mxu0 0.0
      %3031 = vmatprep.subr.mxu0 0.0
      %3032 = vmatpush1.msra.mxu0 0.0
      %3033 = vmatprep.subr.mxu0 0.0
      %3034 = vmatpush1.msra.mxu0 0.0
      %3035 = vmatprep.subr.mxu0 0.0
      %3036 = vmatpush1.msra.mxu0 0.0
      %3037 = vmatprep.subr.mxu0 0.0
      %3038 = vmatpush1.msra.mxu0 0.0
      %3039 = vmatprep.subr.mxu0 0.0
      %3040 = vmatpush1.msra.mxu0 0.0
      %3041 = vmatprep.subr.mxu0 0.0
      %3042 = vmatpush1.msra.mxu0 0.0
      %3043 = vmatprep.subr.mxu0 0.0
      %3044 = vmatpush1.msra.mxu0 0.0
      %3045 = vmatprep.subr.mxu0 0.0
      %3046 = vmatpush1.msra.mxu0 0.0
      %3047 = vmatprep.subr.mxu0 0.0
      %3048 = vmatpush1.msra.mxu0 0.0
      %3049 = vmatprep.subr.mxu0 0.0
      %3050 = vmatpush1.msra.mxu0 0.0
      %3051 = vmatprep.subr.mxu0 0.0
      %3052 = vmatpush1.msra.mxu0 0.0
      %3053 = vmatprep.subr.mxu0 0.0
      %3054 = vmatpush1.msra.mxu0 0.0
      %3055 = vmatprep.subr.mxu0 0.0
      %3056 = vmatpush1.msra.mxu0 0.0
      %3057 = vmatprep.subr.mxu0 0.0
      %3058 = vmatpush1.msra.mxu0 0.0
      %3059 = vmatprep.mubr.f32.mxu0 0.0
      %3060 = vmatmul.mubr.f32.gmra.mrb[0].mxu0 %v2916
      %v3061 = vpop.f32.mrb[0].mxu0
      %v3062 = vadd.f32 0.0, %v3061
      %v3063 = vpop.f32.mrb[0].mxu0
      %3064 = vdwg.mxu0
      %v3065 = vadd.f32 %v2897, %v2991
      %v3066 = vadd.f32 %v2898, %v2993
      %v3067 = vadd.f32 %v2899, %v3062
      %v3068 = vld [vmem:[#allocation3] sm:$0xff]
      %v3069 = vld [vmem:[#allocation3 + $0x8] sm:$0xf]
      %s3070 = scalar_lea.vmem %s2, 28
      %v3071 = vld [vmem:[%s3070] sm:$0xf]
      %v3074 = vcombine.high %v3068, %v3068
      %3075 = vrot.lane.b32.xlu0 %v3068, 91
      %v3076 = vpop.permute.xlu0 %3075
      %3077 = vrot.lane.b32.xlu0 %v3074, 91
      %v3078 = vpop.permute.xlu0 %3077
      %3079 = vrot.lane.b32.xlu0 %v3069, 91
      %v3080 = vpop.permute.xlu0 %3079
      %v3081 = vsel %vm1411, %v3076, %v3078
      %v3082 = vsel %vm1411, %v3078, %v3080
      %v3084 = vsel %vm251, %v3071, 0
      %v3086 = vsel %vm255, %v3081, 0
      %v3088 = vsel %vm255, %v3082, 0
      %v3090 = vsel %vm255, %v3080, 0
      %3092 = vmatprep.subr.mxu0 %v3088
      %3093 = vmatpush1.msra.mxu0 %v3086
      %3094 = vmatprep.subr.mxu0 0.0
      %3095 = vmatpush1.msra.mxu0 0.0
      %3096 = vmatprep.subr.mxu0 0.0
      %3097 = vmatpush1.msra.mxu0 0.0
      %3098 = vmatprep.subr.mxu0 0.0
      %3099 = vmatpush1.msra.mxu0 0.0
      %3100 = vmatprep.subr.mxu0 0.0
      %3101 = vmatpush1.msra.mxu0 0.0
      %3102 = vmatprep.subr.mxu0 0.0
      %3103 = vmatpush1.msra.mxu0 0.0
      %3104 = vmatprep.subr.mxu0 0.0
      %3105 = vmatpush1.msra.mxu0 0.0
      %3106 = vmatprep.subr.mxu0 0.0
      %3107 = vmatpush1.msra.mxu0 0.0
      %3108 = vmatprep.subr.mxu0 0.0
      %3109 = vmatpush1.msra.mxu0 0.0
      %3110 = vmatprep.subr.mxu0 0.0
      %3111 = vmatpush1.msra.mxu0 0.0
      %3112 = vmatprep.subr.mxu0 0.0
      %3113 = vmatpush1.msra.mxu0 0.0
      %3114 = vmatprep.subr.mxu0 0.0
      %3115 = vmatpush1.msra.mxu0 0.0
      %3116 = vmatprep.subr.mxu0 0.0
      %3117 = vmatpush1.msra.mxu0 0.0
      %3118 = vmatprep.subr.mxu0 0.0
      %3119 = vmatpush1.msra.mxu0 0.0
      %3120 = vmatprep.subr.mxu0 0.0
      %3121 = vmatpush1.msra.mxu0 0.0
      %3122 = vmatprep.subr.mxu0 0.0
      %3123 = vmatpush1.msra.mxu0 0.0
      %3124 = vmatprep.subr.mxu0 0.0
      %3125 = vmatpush1.msra.mxu0 0.0
      %3126 = vmatprep.subr.mxu0 0.0
      %3127 = vmatpush1.msra.mxu0 0.0
      %3128 = vmatprep.subr.mxu0 0.0
      %3129 = vmatpush1.msra.mxu0 0.0
      %3130 = vmatprep.subr.mxu0 0.0
      %3131 = vmatpush1.msra.mxu0 0.0
      %3132 = vmatprep.subr.mxu0 0.0
      %3133 = vmatpush1.msra.mxu0 0.0
      %3134 = vmatprep.subr.mxu0 0.0
      %3135 = vmatpush1.msra.mxu0 0.0
      %3136 = vmatprep.subr.mxu0 0.0
      %3137 = vmatpush1.msra.mxu0 0.0
      %3138 = vmatprep.subr.mxu0 0.0
      %3139 = vmatpush1.msra.mxu0 0.0
      %3140 = vmatprep.subr.mxu0 0.0
      %3141 = vmatpush1.msra.mxu0 0.0
      %3142 = vmatprep.subr.mxu0 0.0
      %3143 = vmatpush1.msra.mxu0 0.0
      %3144 = vmatprep.subr.mxu0 0.0
      %3145 = vmatpush1.msra.mxu0 0.0
      %3146 = vmatprep.subr.mxu0 0.0
      %3147 = vmatpush1.msra.mxu0 0.0
      %3148 = vmatprep.subr.mxu0 0.0
      %3149 = vmatpush1.msra.mxu0 0.0
      %3150 = vmatprep.subr.mxu0 0.0
      %3151 = vmatpush1.msra.mxu0 0.0
      %3152 = vmatprep.subr.mxu0 0.0
      %3153 = vmatpush1.msra.mxu0 0.0
      %3154 = vmatprep.subr.mxu0 0.0
      %3155 = vmatpush1.msra.mxu0 0.0
      %3156 = vmatprep.mubr.f32.mxu0 0.0
      %3157 = vmatmul.mubr.f32.gmra.mrb[0].mxu0 %v3084
      %v3158 = vpop.f32.mrb[0].mxu0
      %v3159 = vadd.f32 0.0, %v3158
      %v3160 = vpop.f32.mrb[0].mxu0
      %v3161 = vadd.f32 0.0, %v3160
      %3162 = vdwg.mxu0
      %3163 = vmatprep.subr.mxu0 0.0
      %3164 = vmatpush1.msra.mxu0 %v3090
      %3165 = vmatprep.subr.mxu0 0.0
      %3166 = vmatpush1.msra.mxu0 0.0
      %3167 = vmatprep.subr.mxu0 0.0
      %3168 = vmatpush1.msra.mxu0 0.0
      %3169 = vmatprep.subr.mxu0 0.0
      %3170 = vmatpush1.msra.mxu0 0.0
      %3171 = vmatprep.subr.mxu0 0.0
      %3172 = vmatpush1.msra.mxu0 0.0
      %3173 = vmatprep.subr.mxu0 0.0
      %3174 = vmatpush1.msra.mxu0 0.0
      %3175 = vmatprep.subr.mxu0 0.0
      %3176 = vmatpush1.msra.mxu0 0.0
      %3177 = vmatprep.subr.mxu0 0.0
      %3178 = vmatpush1.msra.mxu0 0.0
      %3179 = vmatprep.subr.mxu0 0.0
      %3180 = vmatpush1.msra.mxu0 0.0
      %3181 = vmatprep.subr.mxu0 0.0
      %3182 = vmatpush1.msra.mxu0 0.0
      %3183 = vmatprep.subr.mxu0 0.0
      %3184 = vmatpush1.msra.mxu0 0.0
      %3185 = vmatprep.subr.mxu0 0.0
      %3186 = vmatpush1.msra.mxu0 0.0
      %3187 = vmatprep.subr.mxu0 0.0
      %3188 = vmatpush1.msra.mxu0 0.0
      %3189 = vmatprep.subr.mxu0 0.0
      %3190 = vmatpush1.msra.mxu0 0.0
      %3191 = vmatprep.subr.mxu0 0.0
      %3192 = vmatpush1.msra.mxu0 0.0
      %3193 = vmatprep.subr.mxu0 0.0
      %3194 = vmatpush1.msra.mxu0 0.0
      %3195 = vmatprep.subr.mxu0 0.0
      %3196 = vmatpush1.msra.mxu0 0.0
      %3197 = vmatprep.subr.mxu0 0.0
      %3198 = vmatpush1.msra.mxu0 0.0
      %3199 = vmatprep.subr.mxu0 0.0
      %3200 = vmatpush1.msra.mxu0 0.0
      %3201 = vmatprep.subr.mxu0 0.0
      %3202 = vmatpush1.msra.mxu0 0.0
      %3203 = vmatprep.subr.mxu0 0.0
      %3204 = vmatpush1.msra.mxu0 0.0
      %3205 = vmatprep.subr.mxu0 0.0
      %3206 = vmatpush1.msra.mxu0 0.0
      %3207 = vmatprep.subr.mxu0 0.0
      %3208 = vmatpush1.msra.mxu0 0.0
      %3209 = vmatprep.subr.mxu0 0.0
      %3210 = vmatpush1.msra.mxu0 0.0
      %3211 = vmatprep.subr.mxu0 0.0
      %3212 = vmatpush1.msra.mxu0 0.0
      %3213 = vmatprep.subr.mxu0 0.0
      %3214 = vmatpush1.msra.mxu0 0.0
      %3215 = vmatprep.subr.mxu0 0.0
      %3216 = vmatpush1.msra.mxu0 0.0
      %3217 = vmatprep.subr.mxu0 0.0
      %3218 = vmatpush1.msra.mxu0 0.0
      %3219 = vmatprep.subr.mxu0 0.0
      %3220 = vmatpush1.msra.mxu0 0.0
      %3221 = vmatprep.subr.mxu0 0.0
      %3222 = vmatpush1.msra.mxu0 0.0
      %3223 = vmatprep.subr.mxu0 0.0
      %3224 = vmatpush1.msra.mxu0 0.0
      %3225 = vmatprep.subr.mxu0 0.0
      %3226 = vmatpush1.msra.mxu0 0.0
      %3227 = vmatprep.mubr.f32.mxu0 0.0
      %3228 = vmatmul.mubr.f32.gmra.mrb[0].mxu0 %v3084
      %v3229 = vpop.f32.mrb[0].mxu0
      %v3230 = vadd.f32 0.0, %v3229
      %v3231 = vpop.f32.mrb[0].mxu0
      %3232 = vdwg.mxu0
      %v3233 = vadd.f32 %v3065, %v3159
      %v3234 = vadd.f32 %v3066, %v3161
      %v3235 = vadd.f32 %v3067, %v3230
      %v3236 = vld [vmem:[#allocation3] sm:$0xff]
      %v3237 = vld [vmem:[#allocation3 + $0x8] sm:$0xf]
      %s3238 = scalar_lea.vmem %s2, 32
      %v3239 = vld [vmem:[%s3238] sm:$0xf]
      %v3242 = vcombine.high %v3236, %v3236
      %3243 = vrot.lane.b32.xlu0 %v3236, 90
      %v3244 = vpop.permute.xlu0 %3243
      %3245 = vrot.lane.b32.xlu0 %v3242, 90
      %v3246 = vpop.permute.xlu0 %3245
      %3247 = vrot.lane.b32.xlu0 %v3237, 90
      %v3248 = vpop.permute.xlu0 %3247
      %v3249 = vsel %vm1580, %v3244, %v3246
      %v3250 = vsel %vm1580, %v3246, %v3248
      %v3252 = vsel %vm251, %v3239, 0
      %v3254 = vsel %vm255, %v3249, 0
      %v3256 = vsel %vm255, %v3250, 0
      %v3258 = vsel %vm255, %v3248, 0
      %3260 = vmatprep.subr.mxu0 %v3256
      %3261 = vmatpush1.msra.mxu0 %v3254
      %3262 = vmatprep.subr.mxu0 0.0
      %3263 = vmatpush1.msra.mxu0 0.0
      %3264 = vmatprep.subr.mxu0 0.0
      %3265 = vmatpush1.msra.mxu0 0.0
      %3266 = vmatprep.subr.mxu0 0.0
      %3267 = vmatpush1.msra.mxu0 0.0
      %3268 = vmatprep.subr.mxu0 0.0
      %3269 = vmatpush1.msra.mxu0 0.0
      %3270 = vmatprep.subr.mxu0 0.0
      %3271 = vmatpush1.msra.mxu0 0.0
      %3272 = vmatprep.subr.mxu0 0.0
      %3273 = vmatpush1.msra.mxu0 0.0
      %3274 = vmatprep.subr.mxu0 0.0
      %3275 = vmatpush1.msra.mxu0 0.0
      %3276 = vmatprep.subr.mxu0 0.0
      %3277 = vmatpush1.msra.mxu0 0.0
      %3278 = vmatprep.subr.mxu0 0.0
      %3279 = vmatpush1.msra.mxu0 0.0
      %3280 = vmatprep.subr.mxu0 0.0
      %3281 = vmatpush1.msra.mxu0 0.0
      %3282 = vmatprep.subr.mxu0 0.0
      %3283 = vmatpush1.msra.mxu0 0.0
      %3284 = vmatprep.subr.mxu0 0.0
      %3285 = vmatpush1.msra.mxu0 0.0
      %3286 = vmatprep.subr.mxu0 0.0
      %3287 = vmatpush1.msra.mxu0 0.0
      %3288 = vmatprep.subr.mxu0 0.0
      %3289 = vmatpush1.msra.mxu0 0.0
      %3290 = vmatprep.subr.mxu0 0.0
      %3291 = vmatpush1.msra.mxu0 0.0
      %3292 = vmatprep.subr.mxu0 0.0
      %3293 = vmatpush1.msra.mxu0 0.0
      %3294 = vmatprep.subr.mxu0 0.0
      %3295 = vmatpush1.msra.mxu0 0.0
      %3296 = vmatprep.subr.mxu0 0.0
      %3297 = vmatpush1.msra.mxu0 0.0
      %3298 = vmatprep.subr.mxu0 0.0
      %3299 = vmatpush1.msra.mxu0 0.0
      %3300 = vmatprep.subr.mxu0 0.0
      %3301 = vmatpush1.msra.mxu0 0.0
      %3302 = vmatprep.subr.mxu0 0.0
      %3303 = vmatpush1.msra.mxu0 0.0
      %3304 = vmatprep.subr.mxu0 0.0
      %3305 = vmatpush1.msra.mxu0 0.0
      %3306 = vmatprep.subr.mxu0 0.0
      %3307 = vmatpush1.msra.mxu0 0.0
      %3308 = vmatprep.subr.mxu0 0.0
      %3309 = vmatpush1.msra.mxu0 0.0
      %3310 = vmatprep.subr.mxu0 0.0
      %3311 = vmatpush1.msra.mxu0 0.0
      %3312 = vmatprep.subr.mxu0 0.0
      %3313 = vmatpush1.msra.mxu0 0.0
      %3314 = vmatprep.subr.mxu0 0.0
      %3315 = vmatpush1.msra.mxu0 0.0
      %3316 = vmatprep.subr.mxu0 0.0
      %3317 = vmatpush1.msra.mxu0 0.0
      %3318 = vmatprep.subr.mxu0 0.0
      %3319 = vmatpush1.msra.mxu0 0.0
      %3320 = vmatprep.subr.mxu0 0.0
      %3321 = vmatpush1.msra.mxu0 0.0
      %3322 = vmatprep.subr.mxu0 0.0
      %3323 = vmatpush1.msra.mxu0 0.0
      %3324 = vmatprep.mubr.f32.mxu0 0.0
      %3325 = vmatmul.mubr.f32.gmra.mrb[0].mxu0 %v3252
      %v3326 = vpop.f32.mrb[0].mxu0
      %v3327 = vadd.f32 0.0, %v3326
      %v3328 = vpop.f32.mrb[0].mxu0
      %v3329 = vadd.f32 0.0, %v3328
      %3330 = vdwg.mxu0
      %3331 = vmatprep.subr.mxu0 0.0
      %3332 = vmatpush1.msra.mxu0 %v3258
      %3333 = vmatprep.subr.mxu0 0.0
      %3334 = vmatpush1.msra.mxu0 0.0
      %3335 = vmatprep.subr.mxu0 0.0
      %3336 = vmatpush1.msra.mxu0 0.0
      %3337 = vmatprep.subr.mxu0 0.0
      %3338 = vmatpush1.msra.mxu0 0.0
      %3339 = vmatprep.subr.mxu0 0.0
      %3340 = vmatpush1.msra.mxu0 0.0
      %3341 = vmatprep.subr.mxu0 0.0
      %3342 = vmatpush1.msra.mxu0 0.0
      %3343 = vmatprep.subr.mxu0 0.0
      %3344 = vmatpush1.msra.mxu0 0.0
      %3345 = vmatprep.subr.mxu0 0.0
      %3346 = vmatpush1.msra.mxu0 0.0
      %3347 = vmatprep.subr.mxu0 0.0
      %3348 = vmatpush1.msra.mxu0 0.0
      %3349 = vmatprep.subr.mxu0 0.0
      %3350 = vmatpush1.msra.mxu0 0.0
      %3351 = vmatprep.subr.mxu0 0.0
      %3352 = vmatpush1.msra.mxu0 0.0
      %3353 = vmatprep.subr.mxu0 0.0
      %3354 = vmatpush1.msra.mxu0 0.0
      %3355 = vmatprep.subr.mxu0 0.0
      %3356 = vmatpush1.msra.mxu0 0.0
      %3357 = vmatprep.subr.mxu0 0.0
      %3358 = vmatpush1.msra.mxu0 0.0
      %3359 = vmatprep.subr.mxu0 0.0
      %3360 = vmatpush1.msra.mxu0 0.0
      %3361 = vmatprep.subr.mxu0 0.0
      %3362 = vmatpush1.msra.mxu0 0.0
      %3363 = vmatprep.subr.mxu0 0.0
      %3364 = vmatpush1.msra.mxu0 0.0
      %3365 = vmatprep.subr.mxu0 0.0
      %3366 = vmatpush1.msra.mxu0 0.0
      %3367 = vmatprep.subr.mxu0 0.0
      %3368 = vmatpush1.msra.mxu0 0.0
      %3369 = vmatprep.subr.mxu0 0.0
      %3370 = vmatpush1.msra.mxu0 0.0
      %3371 = vmatprep.subr.mxu0 0.0
      %3372 = vmatpush1.msra.mxu0 0.0
      %3373 = vmatprep.subr.mxu0 0.0
      %3374 = vmatpush1.msra.mxu0 0.0
      %3375 = vmatprep.subr.mxu0 0.0
      %3376 = vmatpush1.msra.mxu0 0.0
      %3377 = vmatprep.subr.mxu0 0.0
      %3378 = vmatpush1.msra.mxu0 0.0
      %3379 = vmatprep.subr.mxu0 0.0
      %3380 = vmatpush1.msra.mxu0 0.0
      %3381 = vmatprep.subr.mxu0 0.0
      %3382 = vmatpush1.msra.mxu0 0.0
      %3383 = vmatprep.subr.mxu0 0.0
      %3384 = vmatpush1.msra.mxu0 0.0
      %3385 = vmatprep.subr.mxu0 0.0
      %3386 = vmatpush1.msra.mxu0 0.0
      %3387 = vmatprep.subr.mxu0 0.0
      %3388 = vmatpush1.msra.mxu0 0.0
      %3389 = vmatprep.subr.mxu0 0.0
      %3390 = vmatpush1.msra.mxu0 0.0
      %3391 = vmatprep.subr.mxu0 0.0
      %3392 = vmatpush1.msra.mxu0 0.0
      %3393 = vmatprep.subr.mxu0 0.0
      %3394 = vmatpush1.msra.mxu0 0.0
      %3395 = vmatprep.mubr.f32.mxu0 0.0
      %3396 = vmatmul.mubr.f32.gmra.mrb[0].mxu0 %v3252
      %v3397 = vpop.f32.mrb[0].mxu0
      %v3398 = vadd.f32 0.0, %v3397
      %v3399 = vpop.f32.mrb[0].mxu0
      %3400 = vdwg.mxu0
      %v3401 = vadd.f32 %v3233, %v3327
      %v3402 = vadd.f32 %v3234, %v3329
      %v3403 = vadd.f32 %v3235, %v3398
      %v3404 = vsel %vm1749, %v3401, 0.0
      %v3405 = vsel %vm1750, %v3402, 0.0
      %v3406 = vsel %vm1751, %v3403, 0.0
      %v3407 = vsel %vm255, %v3404, 0.0
      %v3408 = vsel %vm255, %v3405, 0.0
      %v3409 = vadd.f32 %v3407, %v3408
      %v3410 = vsel %vm1758, %v3406, 0.0
      %v3411 = vadd.f32 %v3409, %v3410
      %3412 = vadd.xlane.f32.xlu0 %v3411
      %v3413 = vpop.xlane.xlu0 %3412
      %v3414 = vmul.f32 %v3404, %v3404
      %v3415 = vmul.f32 %v3405, %v3405
      %v3416 = vmul.f32 %v3406, %v3406
      %v3417 = vsel %vm255, %v3414, 0.0
      %v3418 = vsel %vm255, %v3415, 0.0
      %v3419 = vadd.f32 %v3417, %v3418
      %v3420 = vsel %vm1758, %v3416, 0.0
      %v3421 = vadd.f32 %v3419, %v3420
      %3422 = vadd.xlane.f32.xlu0 %v3421
      %v3423 = vpop.xlane.xlu0 %3422
      %v3424 = vmul.f32 %v3413, 0.00390625
      %v3425 = vmul.f32 %v3423, 0.00390625
      %v3426 = vmul.f32 %v3424, %v3424
      %v3427 = vsub.f32 %v3425, %v3426
      %v3428 = vsub.f32 %v3401, %v3424
      %v3429 = vsub.f32 %v3402, %v3424
      %v3430 = vsub.f32 %v3403, %v3424
      %v3431 = vadd.f32 %v3427, 1e-05
      %v3432 = vrsqrt.pop %v3431
      %v3433 = vmul.f32 %v3428, %v3432
      %v3434 = vmul.f32 %v3429, %v3432
      %v3435 = vmul.f32 %v3430, %v3432
      %v3436 = vld [vmem:[%s192] sm:$0xff]
      %v3437 = vld [vmem:[%s192 + $0x8] sm:$0xf]
      %v3438 = vsel %vm1749, %v3433, 0.0
      %v3439 = vsel %vm1750, %v3434, 0.0
      %v3440 = vsel %vm1751, %v3435, 0.0
      %v3443 = vcombine.low %v3438, %v3439
      %v3445 = vadd.f32 %v3436, %v3443
      %v3446 = vadd.f32 %v3437, %v3440
      %3447 = vst [vmem:[%s197] sm:$0xff] %v3445
      %3448 = vst.msk [vmem:[%s197 + $0x8] sm:$0xf] %vm1758, %v3446
      %p3449 = scmp.lt.s32.totalorder %s15, 1
      %s3450 = scalar_select %p3449, %s15, 1
      %s3451 = smul.addr %s3450, 3
      %s3452 = smul.addr %s3451, 4
      %s3453 = scalar_lea.vmem %s4, %s3452
      // Predicated region
      $region37: #{residual_block.1} parent=35 // pred_check
        %p3454 = pneg %p122
      $region38: #{residual_block.1} parent=35 // pred_check_branch
        %3456 = sbr.rel (%p3454) target = $region40
      $region39: #{residual_block.1} parent=35 // pred_region
        _
      $region40: #{residual_block.1} parent=35 // pred_fallthru
        _
    $region36: #{residual_block.1} parent=5 // pred_fallthru
      _
    %p3457 = scmp.le.s32.totalorder 2, %s10
    // Predicated region
    $region41: #{residual_block.1} parent=5 // pred_check
      %p3458 = pneg %p3457
    $region42: #{residual_block.1} parent=5 // pred_check_branch
      %3460 = sbr.rel (%p3458) target = $region44
    $region43: #{residual_block.1} parent=5 // pred_region
      %s3461 = ssub.s32 %s10, 2
      // Predicated region
      $region45: #{residual_block.1} parent=43 // pred_check
        %p3462 = pneg %p128
      $region46: #{residual_block.1} parent=43 // pred_check_branch
        %3464 = sbr.rel (%p3462) target = $region48
      $region47: #{residual_block.1} parent=43 // pred_region
        %p3465 = scmp.lt.s32.totalorder %s16, 1
        %s3466 = scalar_select %p3465, %s16, 1
        %s3467 = smul.addr %s3466, 3
        %s3468 = smul.addr %s3467, 4
        %s3469 = scalar_lea.vmem %s4, %s3468
      $region48: #{residual_block.1} parent=43 // pred_fallthru
        _
    $region44: #{residual_block.1} parent=5 // pred_fallthru
      _
  $region6: #{residual_block.1} parent=0 // loop_footer
    %s14 = sadd.s32 1, %s10
  $region7: #{residual_block.1} parent=0 // loop_footer_branch
    %9 = sbr.rel target = $region3
  $region8: #{residual_block.1} parent=0 // loop_exit
    _

</llo_original>
